<compile_context>
chip_gen: v7x
topology: tpu7x:2x2x1
jax: 0.10.0
libtpu: 0.0.40
codegen_flags: <defaults>
</compile_context>

<pallas_src>
import functools

import jax
import jax.numpy as jnp
from jax.experimental import pallas as pl
from jax.experimental.pallas import tpu as pltpu


def _vq_kernel(x_ref, emb_ref, esq_ref, q_ref, sse_ref):
    """One grid step processes tile_n flattened rows.

    x_ref:   (tile_n // pack, D * pack)  lane-packed tile of x_flat
    emb_ref: (M, D)                      full codebook (resident every step)
    esq_ref: (1, M)                      precomputed ||e||^2 (resident)
    q_ref:   (tile_n // pack, D * pack)  lane-packed quantized output tile
    sse_ref: (1, 1, 128)                 this tile's partial sum of squared error
    """
    xp = x_ref[...].astype(jnp.float32)          # (rows, D*pack)
    e = emb_ref[...].astype(jnp.float32)         # (M, D)
    esq = esq_ref[...].astype(jnp.float32)       # (1, M)

    m, d = e.shape
    rows, lanes = xp.shape
    pack = lanes // d

    # Unpack the lane-packed rows into (tile_n, D). Row order becomes
    # [orig rows == 0 (mod pack); == 1 (mod pack); ...]; the store below undoes
    # this, and the SSE reduction is order-invariant.
    if pack > 1:
        x = jnp.concatenate([xp[:, c * d:(c + 1) * d] for c in range(pack)], axis=0)
    else:
        x = xp                                   # (tile_n, D)

    # Distance up to a per-row constant: ||e||^2 - 2 x.e   (||x||^2 dropped).
    # Contract last axes directly -- no e.T transpose inside the kernel.
    xe = jax.lax.dot_general(
        x, e,
        dimension_numbers=(((1,), (1,)), ((), ())),
        preferred_element_type=jnp.float32)      # MXU, (tile_n, M)
    dist = esq - 2.0 * xe

    # argmin over the codebook (first minimal index, matching torch.argmin)
    col = jax.lax.broadcasted_iota(jnp.int32, dist.shape, 1)
    dmin = jnp.min(dist, axis=-1, keepdims=True)
    idx = jnp.min(jnp.where(dist == dmin, col, m), axis=-1, keepdims=True)

    # quantized = embedding[idx] via one-hot matmul (MXU-friendly gather)
    onehot = (col == idx).astype(jnp.float32)    # (tile_n, M)
    q = jnp.dot(onehot, e, preferred_element_type=jnp.float32)   # (tile_n, D)

    # per-tile partial SSE for the commitment (MSE) loss; lane-padded row
    diff = x - q
    tile_sse = jnp.sum(diff * diff)
    sse_ref[...] = jnp.full(sse_ref.shape, tile_sse, dtype=jnp.float32)

    # repack to the lane-dense (rows, D*pack) layout and store
    if pack > 1:
        qp = jnp.concatenate(
            [q[c * rows:(c + 1) * rows, :] for c in range(pack)], axis=1)
    else:
        qp = q
    q_ref[...] = qp.astype(q_ref.dtype)


@functools.partial(jax.jit, static_argnames=("commitment_cost", "tile_n"))
def vq_embedding_ema_forward(x, embedding, commitment_cost=0.25, tile_n=1024):
    """Eval-mode forward of the module: returns (quantized, loss)."""
    B, T, D = x.shape
    N = B * T
    M, D_e = embedding.shape
    assert D == D_e

    tile_n = min(tile_n, N)
    assert N % tile_n == 0, "N must be divisible by tile_n"

    # Lane packing factor: D < 128 would otherwise give masked (partial-lane)
    # loads/stores; (N, D) and (N/pack, D*pack) share the same row-major bytes.
    pack = 128 // D if (D < 128 and 128 % D == 0) else 1
    assert tile_n % pack == 0

    rows = tile_n // pack
    lanes = D * pack
    grid_n = N // tile_n

    x_in = x.reshape(N // pack, lanes)

    emb_f32 = embedding.astype(jnp.float32)
    emb_sq = jnp.sum(emb_f32 * emb_f32, axis=-1).reshape(1, M)   # hoisted ||e||^2

    q_packed, sse_parts = pl.pallas_call(
        _vq_kernel,
        out_shape=(
            jax.ShapeDtypeStruct((N // pack, lanes), x.dtype),
            jax.ShapeDtypeStruct((grid_n, 1, 128), jnp.float32),
        ),
        grid_spec=pltpu.PrefetchScalarGridSpec(
            num_scalar_prefetch=0,
            grid=(grid_n,),
            in_specs=[
                pl.BlockSpec((rows, lanes), lambda i: (i, 0)),    # x tile (packed)
                pl.BlockSpec((M, D), lambda i: (0, 0)),           # codebook
                pl.BlockSpec((1, M), lambda i: (0, 0)),           # ||e||^2
            ],
            out_specs=[
                pl.BlockSpec((rows, lanes), lambda i: (i, 0)),    # q tile (packed)
                pl.BlockSpec((1, 1, 128), lambda i: (i, 0, 0)),   # per-tile SSE
            ],
        ),
        compiler_params=pltpu.CompilerParams(
            # every grid step is independent (per-tile SSE partials), so the
            # axis can be split across TensorCores (2x on v7x)
            dimension_semantics=("parallel",),
        ),
    )(x_in, embedding, emb_sq)

    sse = jnp.sum(sse_parts[:, 0, 0])
    e_latent_loss = sse / jnp.float32(N * D)      # mse_loss(x, quantized)
    loss = commitment_cost * e_latent_loss

    quantized = q_packed.reshape(B, T, D)
    # straight-through estimator: forward value == quantized
    quantized = x + jax.lax.stop_gradient(quantized - x)
    return quantized, loss


if __name__ == "__main__":
    key = jax.random.PRNGKey(0)
    k_emb, k_x = jax.random.split(key)

    # module config (small, consistent with __init__ shapes)
    n_embeddings = 128
    embedding_dim = 64

    # deterministic stand-in for the module's Dirichlet codebook init:
    # embedding[k] ~ Dirichlet([alpha_k] * D), alpha = 10**linspace(-1.4, 1.4, M)
    alpha = 10.0 ** jnp.linspace(-1.4, 1.4, n_embeddings)
    conc = jnp.broadcast_to(alpha[:, None], (n_embeddings, embedding_dim))
    embedding = jax.random.dirichlet(k_emb, conc).astype(jnp.float32)

    # input x: (B, T, D)
    B, T = 2, 1024
    x = jax.random.normal(k_x, (B, T, embedding_dim), dtype=jnp.float32)

    quantized, loss = vq_embedding_ema_forward(x, embedding)
    jax.block_until_ready((quantized, loss))

    # sanity check against a pure-JAX reference (same argmin-equivalent distance)
    x_flat = x.reshape(-1, embedding_dim)
    e_sq = jnp.sum(embedding ** 2, axis=1)
    dist_ref = e_sq[None, :] - 2.0 * (x_flat @ embedding.T)
    idx_ref = jnp.argmin(dist_ref, axis=-1)
    q_ref = embedding[idx_ref].reshape(x.shape)
    loss_ref = 0.25 * jnp.mean((x - q_ref) ** 2)
    assert jnp.allclose(quantized, q_ref, atol=1e-5), "quantized mismatch"
    assert jnp.allclose(loss, loss_ref, rtol=1e-3, atol=1e-6), "loss mismatch"

    print("KERNEL_OK")
</pallas_src>

<mosaic_0001>
module attributes {stable_mosaic.version = 11 : i64} {
  func.func @_vq_kernel(%arg0: i32, %arg1: memref<512x128xf32, #tpu.memory_space<vmem>>, %arg2: memref<128x64xf32, #tpu.memory_space<vmem>>, %arg3: memref<1x128xf32, #tpu.memory_space<vmem>>, %arg4: memref<512x128xf32, #tpu.memory_space<vmem>>, %arg5: memref<1x1x128xf32, #tpu.memory_space<vmem>>) attributes {dimension_semantics = [#tpu.dimension_semantics<parallel>], iteration_bounds = array<i64: 2>, scalar_prefetch = 0 : i64, scratch_operands = 0 : i64, tpu.core_type = #tpu.core_type<tc>, window_params = [{transform_indices = @transform_0, window_bounds = array<i64: 512, 128>}, {pipeline_mode = #tpu.pipeline_mode<synchronous>, transform_indices = @transform_1, window_bounds = array<i64: 128, 64>}, {pipeline_mode = #tpu.pipeline_mode<synchronous>, transform_indices = @transform_2, window_bounds = array<i64: 1, 128>}, {transform_indices = @transform_3, window_bounds = array<i64: 512, 128>}, {transform_indices = @transform_4, window_bounds = array<i64: 1, 1, 128>}]} {
    %c0 = arith.constant 0 : index
    %c0_0 = arith.constant 0 : index
    %0 = vector.load %arg1[%c0, %c0_0] : memref<512x128xf32, #tpu.memory_space<vmem>>, vector<512x128xf32>
    %c0_1 = arith.constant 0 : index
    %c0_2 = arith.constant 0 : index
    %1 = vector.load %arg2[%c0_1, %c0_2] : memref<128x64xf32, #tpu.memory_space<vmem>>, vector<128x64xf32>
    %c0_3 = arith.constant 0 : index
    %c0_4 = arith.constant 0 : index
    %2 = vector.load %arg3[%c0_3, %c0_4] : memref<1x128xf32, #tpu.memory_space<vmem>>, vector<1x128xf32>
    %3 = vector.extract_strided_slice %0 {offsets = [0, 0], sizes = [512, 64], strides = [1, 1]} : vector<512x128xf32> to vector<512x64xf32>
    %4 = vector.extract_strided_slice %0 {offsets = [0, 64], sizes = [512, 64], strides = [1, 1]} : vector<512x128xf32> to vector<512x64xf32>
    %5 = tpu.concatenate %3, %4 in 0 : vector<512x64xf32>, vector<512x64xf32> -> vector<1024x64xf32>
    %cst = arith.constant dense<0.000000e+00> : vector<1024x128xf32>
    %6 = tpu.matmul %5, %1, %cst {dimension_numbers = #tpu.dot_dimension_numbers<[1], [1], [0], [0], [0, 0, 1, 0], [], []>} : vector<1024x64xf32>, vector<128x64xf32>, vector<1024x128xf32> -> vector<1024x128xf32>
    %cst_5 = arith.constant 2.000000e+00 : f32
    %7 = vector.broadcast %cst_5 : f32 to vector<1024x128xf32>
    %8 = arith.mulf %7, %6 : vector<1024x128xf32>
    %9 = vector.broadcast %2 : vector<1x128xf32> to vector<1024x128xf32>
    %10 = arith.subf %9, %8 : vector<1024x128xf32>
    %11 = tpu.iota {dimensions = array<i32: 1>} : vector<1024x128xi32>
    %cst_6 = arith.constant dense<0x7F800000> : vector<1024xf32>
    %12 = vector.multi_reduction <minimumf>, %10, %cst_6 [1] : vector<1024x128xf32> to vector<1024xf32>
    %13 = vector.shape_cast %12 : vector<1024xf32> to vector<1024x1xf32>
    %14 = vector.broadcast %13 : vector<1024x1xf32> to vector<1024x128xf32>
    %15 = arith.cmpf oeq, %10, %14 : vector<1024x128xf32>
    %c128_i32 = arith.constant 128 : i32
    %16 = vector.broadcast %c128_i32 : i32 to vector<1024x128xi32>
    %17 = arith.select %15, %11, %16 : vector<1024x128xi1>, vector<1024x128xi32>
    %cst_7 = arith.constant dense<2147483647> : vector<1024xi32>
    %18 = vector.multi_reduction <minsi>, %17, %cst_7 [1] : vector<1024x128xi32> to vector<1024xi32>
    %19 = vector.shape_cast %18 : vector<1024xi32> to vector<1024x1xi32>
    %20 = vector.broadcast %19 : vector<1024x1xi32> to vector<1024x128xi32>
    %21 = arith.cmpi eq, %11, %20 : vector<1024x128xi32>
    %22 = arith.extui %21 : vector<1024x128xi1> to vector<1024x128xi32>
    %23 = arith.sitofp %22 : vector<1024x128xi32> to vector<1024x128xf32>
    %cst_8 = arith.constant dense<0.000000e+00> : vector<1024x64xf32>
    %24 = tpu.matmul %23, %1, %cst_8 {dimension_numbers = #tpu.dot_dimension_numbers<[1], [0], [0], [1], [0, 0, 1, 1], [], []>} : vector<1024x128xf32>, vector<128x64xf32>, vector<1024x64xf32> -> vector<1024x64xf32>
    %25 = arith.subf %5, %24 : vector<1024x64xf32>
    %26 = arith.mulf %25, %25 : vector<1024x64xf32>
    %27 = vector.shape_cast %26 : vector<1024x64xf32> to vector<1x1024x64xf32>
    %cst_9 = arith.constant dense<0.000000e+00> : vector<1xf32>
    %28 = vector.multi_reduction <add>, %27, %cst_9 [1, 2] : vector<1x1024x64xf32> to vector<1xf32>
    %29 = vector.shape_cast %28 : vector<1xf32> to vector<1x1x1xf32>
    %30 = vector.extract %29[0, 0, 0] : f32 from vector<1x1x1xf32>
    %31 = vector.broadcast %30 : f32 to vector<1x1x128xf32>
    %c0_10 = arith.constant 0 : index
    %c0_11 = arith.constant 0 : index
    %c0_12 = arith.constant 0 : index
    %32 = vector.load %arg5[%c0_10, %c0_11, %c0_12] : memref<1x1x128xf32, #tpu.memory_space<vmem>>, vector<1x1x128xf32>
    tpu.vector_store %arg5[%c0_10, %c0_11, %c0_12], %31 {strides = array<i32>} : memref<1x1x128xf32, #tpu.memory_space<vmem>>, vector<1x1x128xf32>,
    %33 = vector.extract_strided_slice %24 {offsets = [0, 0], sizes = [512, 64], strides = [1, 1]} : vector<1024x64xf32> to vector<512x64xf32>
    %34 = vector.extract_strided_slice %24 {offsets = [512, 0], sizes = [512, 64], strides = [1, 1]} : vector<1024x64xf32> to vector<512x64xf32>
    %35 = tpu.concatenate %33, %34 in 1 : vector<512x64xf32>, vector<512x64xf32> -> vector<512x128xf32>
    %c0_13 = arith.constant 0 : index
    %c0_14 = arith.constant 0 : index
    %36 = vector.load %arg4[%c0_13, %c0_14] : memref<512x128xf32, #tpu.memory_space<vmem>>, vector<512x128xf32>
    tpu.vector_store %arg4[%c0_13, %c0_14], %35 {strides = array<i32>} : memref<512x128xf32, #tpu.memory_space<vmem>>, vector<512x128xf32>,
    return
  }
  func.func @transform_0(%arg0: i32) -> (i32, i32) {
    %c0_i32 = arith.constant 0 : i32
    %c0_i32_0 = arith.constant 0 : i32
    return %arg0, %c0_i32 : i32, i32
  }
  func.func @transform_1(%arg0: i32) -> (i32, i32) {
    %c0_i32 = arith.constant 0 : i32
    %c0_i32_0 = arith.constant 0 : i32
    %c0_i32_1 = arith.constant 0 : i32
    return %c0_i32, %c0_i32_0 : i32, i32
  }
  func.func @transform_2(%arg0: i32) -> (i32, i32) {
    %c0_i32 = arith.constant 0 : i32
    %c0_i32_0 = arith.constant 0 : i32
    %c0_i32_1 = arith.constant 0 : i32
    return %c0_i32, %c0_i32_0 : i32, i32
  }
  func.func @transform_3(%arg0: i32) -> (i32, i32) {
    %c0_i32 = arith.constant 0 : i32
    %c0_i32_0 = arith.constant 0 : i32
    return %arg0, %c0_i32 : i32, i32
  }
  func.func @transform_4(%arg0: i32) -> (i32, i32, i32) {
    %c0_i32 = arith.constant 0 : i32
    %c0_i32_0 = arith.constant 0 : i32
    %c0_i32_1 = arith.constant 0 : i32
    return %arg0, %c0_i32, %c0_i32_0 : i32, i32, i32
  }
}

</mosaic_0001>

<llo_original>
// kernel: vq_embedding_ema_forward.1
$region0: #{vq_embedding_ema_forward.1}
  #allocation0 [shape = 'u32[]', space=smem, size = 0x4, offset = 0x4, fixed_abs, tag = 'smem constant byte address 0x4 - core index']
  #allocation1 [shape = 'u32[144,128]{1,0:T(1,128)}', space=vmem, size = 0x12000, scoped, tag = 'internal scratch']
  %s0 = inlined_call_operand.vmem [shape: f32[1024,128], index: 0, kind: input, shape index: {}]
  %s1 = inlined_call_operand.vmem [shape: f32[128,64], index: 1, kind: input, shape index: {}]
  %s2 = inlined_call_operand.vmem [shape: f32[1,128], index: 2, kind: input, shape index: {}]
  %s3 = inlined_call_operand.vmem [shape: f32[1024,128], index: 3, kind: output, shape index: {0}]
  %s4 = inlined_call_operand.vmem [shape: f32[2,1,128], index: 4, kind: output, shape index: {1}]
  %5 = xla_tuple %s3, %s4
  %s6 = sld [smem:[#allocation0]]
  $region53: #{vq_embedding_ema_forward.1} parent=0
    _
  %s8 = ssub.s32 1, %s6
  %s9 = scalar_select 0, %s8, %s6
  loop: start=0, step=1, limit=4
  $region2: #{vq_embedding_ema_forward.1} parent=0 // loop_pre_header
    _
  $region3: #{vq_embedding_ema_forward.1} parent=0 // loop_header
    %s11 = sphi 0, %s15
    %p12 = scmp.ge.s32.totalorder %s11, 4
    %s21 = sphi 0, %s23
    %s24 = sphi 0, %s21
    %s25 = sphi 0, %s24
    %s41 = sphi 0, %s25
    %s45 = sphi 0, %s45
    %s47 = sphi 0, %s45
    %s48 = sphi 0, %s47
    %s62 = sphi 0, %s48
    %s66 = sphi 0, %s66
    %s68 = sphi 0, %s66
    %s69 = sphi 0, %s68
    %s83 = sphi 0, %s69
    %s89 = sphi 0, %s91
    %s92 = sphi 0, %s89
    %s93 = sphi 0, %s92
    %s109 = sphi 0, %s93
    %s115 = sphi 0, %s117
    %s118 = sphi 0, %s115
    %s119 = sphi 0, %s118
    %s135 = sphi 0, %s119
  $region4: #{vq_embedding_ema_forward.1} parent=0 // loop_header_branch
    %14 = sbr.rel (%p12) target = $region8
  $region5: #{vq_embedding_ema_forward.1} parent=0 // loop_body
    %s16 = ssub.s32 %s11, 1
    %s17 = ssub.s32 %s11, 2
    %s18 = sadd.s32 %s11, 1
    %s19 = ssub.s32 %s11, %s18
    %p20 = scmp.eq.s32.totalorder %s19, 0
    %s22 = sadd.s32 %s21, 1
    %s23 = scalar_select %p20, %s21, %s22
    %p26 = pneg %p20
    %p27 = scmp.eq.s32.totalorder %s11, 1
    %p28 = por %p26, %p27
    %p29 = scmp.ne.s32.totalorder %s21, %s24
    %p30 = scmp.eq.s32.totalorder %s11, 0
    %p31 = por %p29, %p30
    %p32 = scmp.ne.s32.totalorder %s21, %s24
    %p33 = scmp.eq.s32.totalorder %s16, 1
    %p34 = por %p32, %p33
    %p35 = scmp.ne.s32.totalorder %s24, %s25
    %p36 = scmp.eq.s32.totalorder %s16, 0
    %p37 = por %p35, %p36
    %p38 = scmp.ne.s32.totalorder %s24, %s25
    %p39 = scmp.eq.s32.totalorder %s17, 1
    %p40 = por %p38, %p39
    %p42 = scmp.ne.s32.totalorder %s25, %s41
    %p43 = scmp.eq.s32.totalorder %s17, 0
    %p44 = por %p42, %p43
    %s46 = sadd.s32 %s45, 1
    %p49 = scmp.eq.s32.totalorder %s11, 1
    %p50 = scmp.ne.s32.totalorder %s45, %s47
    %p51 = scmp.eq.s32.totalorder %s11, 0
    %p52 = por %p50, %p51
    %p53 = scmp.ne.s32.totalorder %s45, %s47
    %p54 = scmp.eq.s32.totalorder %s16, 1
    %p55 = por %p53, %p54
    %p56 = scmp.ne.s32.totalorder %s47, %s48
    %p57 = scmp.eq.s32.totalorder %s16, 0
    %p58 = por %p56, %p57
    %p59 = scmp.ne.s32.totalorder %s47, %s48
    %p60 = scmp.eq.s32.totalorder %s17, 1
    %p61 = por %p59, %p60
    %p63 = scmp.ne.s32.totalorder %s48, %s62
    %p64 = scmp.eq.s32.totalorder %s17, 0
    %p65 = por %p63, %p64
    %s67 = sadd.s32 %s66, 1
    %p70 = scmp.eq.s32.totalorder %s11, 1
    %p71 = scmp.ne.s32.totalorder %s66, %s68
    %p72 = scmp.eq.s32.totalorder %s11, 0
    %p73 = por %p71, %p72
    %p74 = scmp.ne.s32.totalorder %s66, %s68
    %p75 = scmp.eq.s32.totalorder %s16, 1
    %p76 = por %p74, %p75
    %p77 = scmp.ne.s32.totalorder %s68, %s69
    %p78 = scmp.eq.s32.totalorder %s16, 0
    %p79 = por %p77, %p78
    %p80 = scmp.ne.s32.totalorder %s68, %s69
    %p81 = scmp.eq.s32.totalorder %s17, 1
    %p82 = por %p80, %p81
    %p84 = scmp.ne.s32.totalorder %s69, %s83
    %p85 = scmp.eq.s32.totalorder %s17, 0
    %p86 = por %p84, %p85
    %s87 = ssub.s32 %s11, %s18
    %p88 = scmp.eq.s32.totalorder %s87, 0
    %s90 = sadd.s32 %s89, 1
    %s91 = scalar_select %p88, %s89, %s90
    %p94 = pneg %p88
    %p95 = scmp.eq.s32.totalorder %s11, 1
    %p96 = por %p94, %p95
    %p97 = scmp.ne.s32.totalorder %s89, %s92
    %p98 = scmp.eq.s32.totalorder %s11, 0
    %p99 = por %p97, %p98
    %p100 = scmp.ne.s32.totalorder %s89, %s92
    %p101 = scmp.eq.s32.totalorder %s16, 1
    %p102 = por %p100, %p101
    %p103 = scmp.ne.s32.totalorder %s92, %s93
    %p104 = scmp.eq.s32.totalorder %s16, 0
    %p105 = por %p103, %p104
    %p106 = scmp.ne.s32.totalorder %s92, %s93
    %p107 = scmp.eq.s32.totalorder %s17, 1
    %p108 = por %p106, %p107
    %p110 = scmp.ne.s32.totalorder %s93, %s109
    %p111 = scmp.eq.s32.totalorder %s17, 0
    %p112 = por %p110, %p111
    %s113 = ssub.s32 %s11, %s18
    %p114 = scmp.eq.s32.totalorder %s113, 0
    %s116 = sadd.s32 %s115, 1
    %s117 = scalar_select %p114, %s115, %s116
    %p120 = pneg %p114
    %p121 = scmp.eq.s32.totalorder %s11, 1
    %p122 = por %p120, %p121
    %p123 = scmp.ne.s32.totalorder %s115, %s118
    %p124 = scmp.eq.s32.totalorder %s11, 0
    %p125 = por %p123, %p124
    %p126 = scmp.ne.s32.totalorder %s115, %s118
    %p127 = scmp.eq.s32.totalorder %s16, 1
    %p128 = por %p126, %p127
    %p129 = scmp.ne.s32.totalorder %s118, %s119
    %p130 = scmp.eq.s32.totalorder %s16, 0
    %p131 = por %p129, %p130
    %p132 = scmp.ne.s32.totalorder %s118, %s119
    %p133 = scmp.eq.s32.totalorder %s17, 1
    %p134 = por %p132, %p133
    %p136 = scmp.ne.s32.totalorder %s119, %s135
    %p137 = scmp.eq.s32.totalorder %s17, 0
    %p138 = por %p136, %p137
    %p139 = scmp.le.s32.totalorder 1, %s11
    %p140 = scmp.lt.s32.totalorder %s11, 3
    %p141 = pnand %p139, %p140
    %p142 = pneg %p141
    // Predicated region
    $region9: #{vq_embedding_ema_forward.1} parent=5 // pred_check
      _
    $region10: #{vq_embedding_ema_forward.1} parent=5 // pred_check_branch
      %144 = sbr.rel (%p141) target = $region12
    $region11: #{vq_embedding_ema_forward.1} parent=5 // pred_region
      %s145 = ssub.s32 %s11, 1
      // Predicated region
      $region13: #{vq_embedding_ema_forward.1} parent=11 // pred_check
        %p146 = pneg %p58
      $region14: #{vq_embedding_ema_forward.1} parent=11 // pred_check_branch
        %148 = sbr.rel (%p146) target = $region16
      $region15: #{vq_embedding_ema_forward.1} parent=11 // pred_region
        _
      $region16: #{vq_embedding_ema_forward.1} parent=11 // pred_fallthru
        _
      // Predicated region
      $region17: #{vq_embedding_ema_forward.1} parent=11 // pred_check
        %p149 = pneg %p79
      $region18: #{vq_embedding_ema_forward.1} parent=11 // pred_check_branch
        %151 = sbr.rel (%p149) target = $region20
      $region19: #{vq_embedding_ema_forward.1} parent=11 // pred_region
        _
      $region20: #{vq_embedding_ema_forward.1} parent=11 // pred_fallthru
        _
    $region12: #{vq_embedding_ema_forward.1} parent=5 // pred_fallthru
      _
    %p152 = scmp.lt.s32.totalorder %s11, 2
    // Predicated region
    $region21: #{vq_embedding_ema_forward.1} parent=5 // pred_check
      %p153 = pneg %p152
    $region22: #{vq_embedding_ema_forward.1} parent=5 // pred_check_branch
      %155 = sbr.rel (%p153) target = $region24
    $region23: #{vq_embedding_ema_forward.1} parent=5 // pred_region
      // Predicated region
      $region25: #{vq_embedding_ema_forward.1} parent=23 // pred_check
        %p156 = pneg %p31
      $region26: #{vq_embedding_ema_forward.1} parent=23 // pred_check_branch
        %158 = sbr.rel (%p156) target = $region28
      $region27: #{vq_embedding_ema_forward.1} parent=23 // pred_region
        %s159 = smul.u32 64, %s11
        %p160 = scmp.lt.s32.totalorder %s159, 127
        %s161 = scalar_select %p160, %s159, 127
        %s162 = smul.addr %s161, 8
        %s163 = scalar_lea.vmem %s0, %s162
        %s164 = smul.u32 64, %s11
      $region28: #{vq_embedding_ema_forward.1} parent=23 // pred_fallthru
        _
    $region24: #{vq_embedding_ema_forward.1} parent=5 // pred_fallthru
      _
    %p165 = scmp.le.s32.totalorder 1, %s11
    %p166 = scmp.lt.s32.totalorder %s11, 3
    %p167 = pnand %p165, %p166
    %p168 = pneg %p167
    // Predicated region
    $region29: #{vq_embedding_ema_forward.1} parent=5 // pred_check
      _
    $region30: #{vq_embedding_ema_forward.1} parent=5 // pred_check_branch
      %170 = sbr.rel (%p167) target = $region32
    $region31: #{vq_embedding_ema_forward.1} parent=5 // pred_region
      %s171 = ssub.s32 %s11, 1
      %s172 = smul.u32 64, %s16
      %p173 = scmp.lt.s32.totalorder %s172, 127
      %s174 = scalar_select %p173, %s172, 127
      %s175 = smul.addr %s174, 8
      %s176 = scalar_lea.vmem %s0, %s175
      %p177 = pneg %p37
      %p178 = pneg %p34
      %p179 = pneg %p58
      %p180 = pneg %p55
      %p181 = pneg %p79
      %p182 = pneg %p76
      %p183 = pneg %p105
      %p184 = pneg %p102
      %s185 = smul.u32 64, %s16
      %p186 = scmp.lt.s32.totalorder %s185, 127
      %s187 = scalar_select %p186, %s185, 127
      %s188 = smul.addr %s187, 8
      %s189 = scalar_lea.vmem %s3, %s188
      %p190 = pneg %p131
      %p191 = pneg %p128
      %p192 = scmp.lt.s32.totalorder %s16, 1
      %s193 = scalar_select %p192, %s16, 1
      %s194 = scalar_lea.vmem %s4, %s193
      %s195 = smul.u32 64, %s16
      %p196 = scmp.lt.s32.totalorder %s195, 127
      %s197 = scalar_select %p196, %s195, 127
      %s198 = smul.addr %s197, 8
      %s199 = scalar_lea.vmem %s0, %s198
      %s200 = smul.u32 64, %s16
      %s201 = smul.u32 64, %s16
      %p202 = scmp.lt.s32.totalorder %s201, 127
      %s203 = scalar_select %p202, %s201, 127
      %s204 = smul.addr %s203, 8
      %s205 = scalar_lea.vmem %s3, %s204
      %s206 = smul.u32 64, %s16
      %p207 = scmp.lt.s32.totalorder %s16, 1
      %s208 = scalar_select %p207, %s16, 1
      %s209 = scalar_lea.vmem %s4, %s208
      %v210 = vld [vmem:[%s199] sm:$0xff]
      %v211 = vld [vmem:[%s199 + $0x8] sm:$0xff]
      %v212 = vld [vmem:[%s199 + $0x10] sm:$0xff]
      %v213 = vld [vmem:[%s199 + $0x18] sm:$0xff]
      %v214 = vld [vmem:[%s199 + $0x20] sm:$0xff]
      %v215 = vld [vmem:[%s199 + $0x28] sm:$0xff]
      %v216 = vld [vmem:[%s199 + $0x30] sm:$0xff]
      %v217 = vld [vmem:[%s199 + $0x38] sm:$0xff]
      %v218 = vld [vmem:[%s199 + $0x40] sm:$0xff]
      %v219 = vld [vmem:[%s199 + $0x48] sm:$0xff]
      %v220 = vld [vmem:[%s199 + $0x50] sm:$0xff]
      %v221 = vld [vmem:[%s199 + $0x58] sm:$0xff]
      %v222 = vld [vmem:[%s199 + $0x60] sm:$0xff]
      %v223 = vld [vmem:[%s199 + $0x68] sm:$0xff]
      %v224 = vld [vmem:[%s199 + $0x70] sm:$0xff]
      %v225 = vld [vmem:[%s199 + $0x78] sm:$0xff]
      %v226 = vld [vmem:[%s199 + $0x80] sm:$0xff]
      %v227 = vld [vmem:[%s199 + $0x88] sm:$0xff]
      %v228 = vld [vmem:[%s199 + $0x90] sm:$0xff]
      %v229 = vld [vmem:[%s199 + $0x98] sm:$0xff]
      %v230 = vld [vmem:[%s199 + $0xa0] sm:$0xff]
      %v231 = vld [vmem:[%s199 + $0xa8] sm:$0xff]
      %v232 = vld [vmem:[%s199 + $0xb0] sm:$0xff]
      %v233 = vld [vmem:[%s199 + $0xb8] sm:$0xff]
      %v234 = vld [vmem:[%s199 + $0xc0] sm:$0xff]
      %v235 = vld [vmem:[%s199 + $0xc8] sm:$0xff]
      %v236 = vld [vmem:[%s199 + $0xd0] sm:$0xff]
      %v237 = vld [vmem:[%s199 + $0xd8] sm:$0xff]
      %v238 = vld [vmem:[%s199 + $0xe0] sm:$0xff]
      %v239 = vld [vmem:[%s199 + $0xe8] sm:$0xff]
      %v240 = vld [vmem:[%s199 + $0xf0] sm:$0xff]
      %v241 = vld [vmem:[%s199 + $0xf8] sm:$0xff]
      %v242 = vld [vmem:[%s199 + $0x100] sm:$0xff]
      %v243 = vld [vmem:[%s199 + $0x108] sm:$0xff]
      %v244 = vld [vmem:[%s199 + $0x110] sm:$0xff]
      %v245 = vld [vmem:[%s199 + $0x118] sm:$0xff]
      %v246 = vld [vmem:[%s199 + $0x120] sm:$0xff]
      %v247 = vld [vmem:[%s199 + $0x128] sm:$0xff]
      %v248 = vld [vmem:[%s199 + $0x130] sm:$0xff]
      %v249 = vld [vmem:[%s199 + $0x138] sm:$0xff]
      %v250 = vld [vmem:[%s199 + $0x140] sm:$0xff]
      %v251 = vld [vmem:[%s199 + $0x148] sm:$0xff]
      %v252 = vld [vmem:[%s199 + $0x150] sm:$0xff]
      %v253 = vld [vmem:[%s199 + $0x158] sm:$0xff]
      %v254 = vld [vmem:[%s199 + $0x160] sm:$0xff]
      %v255 = vld [vmem:[%s199 + $0x168] sm:$0xff]
      %v256 = vld [vmem:[%s199 + $0x170] sm:$0xff]
      %v257 = vld [vmem:[%s199 + $0x178] sm:$0xff]
      %v258 = vld [vmem:[%s199 + $0x180] sm:$0xff]
      %v259 = vld [vmem:[%s199 + $0x188] sm:$0xff]
      %v260 = vld [vmem:[%s199 + $0x190] sm:$0xff]
      %v261 = vld [vmem:[%s199 + $0x198] sm:$0xff]
      %v262 = vld [vmem:[%s199 + $0x1a0] sm:$0xff]
      %v263 = vld [vmem:[%s199 + $0x1a8] sm:$0xff]
      %v264 = vld [vmem:[%s199 + $0x1b0] sm:$0xff]
      %v265 = vld [vmem:[%s199 + $0x1b8] sm:$0xff]
      %v266 = vld [vmem:[%s199 + $0x1c0] sm:$0xff]
      %v267 = vld [vmem:[%s199 + $0x1c8] sm:$0xff]
      %v268 = vld [vmem:[%s199 + $0x1d0] sm:$0xff]
      %v269 = vld [vmem:[%s199 + $0x1d8] sm:$0xff]
      %v270 = vld [vmem:[%s199 + $0x1e0] sm:$0xff]
      %v271 = vld [vmem:[%s199 + $0x1e8] sm:$0xff]
      %v272 = vld [vmem:[%s199 + $0x1f0] sm:$0xff]
      %v273 = vld [vmem:[%s199 + $0x1f8] sm:$0xff]
      %v274 = vld [vmem:[%s1] sm:$0xff]
      %v275 = vld [vmem:[%s1 + $0x8] sm:$0xff]
      %v276 = vld [vmem:[%s1 + $0x10] sm:$0xff]
      %v277 = vld [vmem:[%s1 + $0x18] sm:$0xff]
      %v278 = vld [vmem:[%s1 + $0x20] sm:$0xff]
      %v279 = vld [vmem:[%s1 + $0x28] sm:$0xff]
      %v280 = vld [vmem:[%s1 + $0x30] sm:$0xff]
      %v281 = vld [vmem:[%s1 + $0x38] sm:$0xff]
      %v282 = vld [vmem:[%s1 + $0x40] sm:$0xff]
      %v283 = vld [vmem:[%s1 + $0x48] sm:$0xff]
      %v284 = vld [vmem:[%s1 + $0x50] sm:$0xff]
      %v285 = vld [vmem:[%s1 + $0x58] sm:$0xff]
      %v286 = vld [vmem:[%s1 + $0x60] sm:$0xff]
      %v287 = vld [vmem:[%s1 + $0x68] sm:$0xff]
      %v288 = vld [vmem:[%s1 + $0x70] sm:$0xff]
      %v289 = vld [vmem:[%s1 + $0x78] sm:$0xff]
      %v290 = vld [vmem:[%s2] sm:$0x1]
      %355 = vrot.lane.b32.xlu0 %v210, 64
      %v356 = vpop.permute.xlu0 %355
      %357 = vrot.lane.b32.xlu0 %v211, 64
      %v358 = vpop.permute.xlu0 %357
      %359 = vrot.lane.b32.xlu0 %v212, 64
      %v360 = vpop.permute.xlu0 %359
      %361 = vrot.lane.b32.xlu0 %v213, 64
      %v362 = vpop.permute.xlu0 %361
      %363 = vrot.lane.b32.xlu0 %v214, 64
      %v364 = vpop.permute.xlu0 %363
      %365 = vrot.lane.b32.xlu0 %v215, 64
      %v366 = vpop.permute.xlu0 %365
      %367 = vrot.lane.b32.xlu0 %v216, 64
      %v368 = vpop.permute.xlu0 %367
      %369 = vrot.lane.b32.xlu0 %v217, 64
      %v370 = vpop.permute.xlu0 %369
      %371 = vrot.lane.b32.xlu0 %v218, 64
      %v372 = vpop.permute.xlu0 %371
      %373 = vrot.lane.b32.xlu0 %v219, 64
      %v374 = vpop.permute.xlu0 %373
      %375 = vrot.lane.b32.xlu0 %v220, 64
      %v376 = vpop.permute.xlu0 %375
      %377 = vrot.lane.b32.xlu0 %v221, 64
      %v378 = vpop.permute.xlu0 %377
      %379 = vrot.lane.b32.xlu0 %v222, 64
      %v380 = vpop.permute.xlu0 %379
      %381 = vrot.lane.b32.xlu0 %v223, 64
      %v382 = vpop.permute.xlu0 %381
      %383 = vrot.lane.b32.xlu0 %v224, 64
      %v384 = vpop.permute.xlu0 %383
      %385 = vrot.lane.b32.xlu0 %v225, 64
      %v386 = vpop.permute.xlu0 %385
      %387 = vrot.lane.b32.xlu0 %v226, 64
      %v388 = vpop.permute.xlu0 %387
      %389 = vrot.lane.b32.xlu0 %v227, 64
      %v390 = vpop.permute.xlu0 %389
      %391 = vrot.lane.b32.xlu0 %v228, 64
      %v392 = vpop.permute.xlu0 %391
      %393 = vrot.lane.b32.xlu0 %v229, 64
      %v394 = vpop.permute.xlu0 %393
      %395 = vrot.lane.b32.xlu0 %v230, 64
      %v396 = vpop.permute.xlu0 %395
      %397 = vrot.lane.b32.xlu0 %v231, 64
      %v398 = vpop.permute.xlu0 %397
      %399 = vrot.lane.b32.xlu0 %v232, 64
      %v400 = vpop.permute.xlu0 %399
      %401 = vrot.lane.b32.xlu0 %v233, 64
      %v402 = vpop.permute.xlu0 %401
      %403 = vrot.lane.b32.xlu0 %v234, 64
      %v404 = vpop.permute.xlu0 %403
      %405 = vrot.lane.b32.xlu0 %v235, 64
      %v406 = vpop.permute.xlu0 %405
      %407 = vrot.lane.b32.xlu0 %v236, 64
      %v408 = vpop.permute.xlu0 %407
      %409 = vrot.lane.b32.xlu0 %v237, 64
      %v410 = vpop.permute.xlu0 %409
      %411 = vrot.lane.b32.xlu0 %v238, 64
      %v412 = vpop.permute.xlu0 %411
      %413 = vrot.lane.b32.xlu0 %v239, 64
      %v414 = vpop.permute.xlu0 %413
      %415 = vrot.lane.b32.xlu0 %v240, 64
      %v416 = vpop.permute.xlu0 %415
      %417 = vrot.lane.b32.xlu0 %v241, 64
      %v418 = vpop.permute.xlu0 %417
      %419 = vrot.lane.b32.xlu0 %v242, 64
      %v420 = vpop.permute.xlu0 %419
      %421 = vrot.lane.b32.xlu0 %v243, 64
      %v422 = vpop.permute.xlu0 %421
      %423 = vrot.lane.b32.xlu0 %v244, 64
      %v424 = vpop.permute.xlu0 %423
      %425 = vrot.lane.b32.xlu0 %v245, 64
      %v426 = vpop.permute.xlu0 %425
      %427 = vrot.lane.b32.xlu0 %v246, 64
      %v428 = vpop.permute.xlu0 %427
      %429 = vrot.lane.b32.xlu0 %v247, 64
      %v430 = vpop.permute.xlu0 %429
      %431 = vrot.lane.b32.xlu0 %v248, 64
      %v432 = vpop.permute.xlu0 %431
      %433 = vrot.lane.b32.xlu0 %v249, 64
      %v434 = vpop.permute.xlu0 %433
      %435 = vrot.lane.b32.xlu0 %v250, 64
      %v436 = vpop.permute.xlu0 %435
      %437 = vrot.lane.b32.xlu0 %v251, 64
      %v438 = vpop.permute.xlu0 %437
      %439 = vrot.lane.b32.xlu0 %v252, 64
      %v440 = vpop.permute.xlu0 %439
      %441 = vrot.lane.b32.xlu0 %v253, 64
      %v442 = vpop.permute.xlu0 %441
      %443 = vrot.lane.b32.xlu0 %v254, 64
      %v444 = vpop.permute.xlu0 %443
      %445 = vrot.lane.b32.xlu0 %v255, 64
      %v446 = vpop.permute.xlu0 %445
      %447 = vrot.lane.b32.xlu0 %v256, 64
      %v448 = vpop.permute.xlu0 %447
      %449 = vrot.lane.b32.xlu0 %v257, 64
      %v450 = vpop.permute.xlu0 %449
      %451 = vrot.lane.b32.xlu0 %v258, 64
      %v452 = vpop.permute.xlu0 %451
      %453 = vrot.lane.b32.xlu0 %v259, 64
      %v454 = vpop.permute.xlu0 %453
      %455 = vrot.lane.b32.xlu0 %v260, 64
      %v456 = vpop.permute.xlu0 %455
      %457 = vrot.lane.b32.xlu0 %v261, 64
      %v458 = vpop.permute.xlu0 %457
      %459 = vrot.lane.b32.xlu0 %v262, 64
      %v460 = vpop.permute.xlu0 %459
      %461 = vrot.lane.b32.xlu0 %v263, 64
      %v462 = vpop.permute.xlu0 %461
      %463 = vrot.lane.b32.xlu0 %v264, 64
      %v464 = vpop.permute.xlu0 %463
      %465 = vrot.lane.b32.xlu0 %v265, 64
      %v466 = vpop.permute.xlu0 %465
      %467 = vrot.lane.b32.xlu0 %v266, 64
      %v468 = vpop.permute.xlu0 %467
      %469 = vrot.lane.b32.xlu0 %v267, 64
      %v470 = vpop.permute.xlu0 %469
      %471 = vrot.lane.b32.xlu0 %v268, 64
      %v472 = vpop.permute.xlu0 %471
      %473 = vrot.lane.b32.xlu0 %v269, 64
      %v474 = vpop.permute.xlu0 %473
      %475 = vrot.lane.b32.xlu0 %v270, 64
      %v476 = vpop.permute.xlu0 %475
      %477 = vrot.lane.b32.xlu0 %v271, 64
      %v478 = vpop.permute.xlu0 %477
      %479 = vrot.lane.b32.xlu0 %v272, 64
      %v480 = vpop.permute.xlu0 %479
      %481 = vrot.lane.b32.xlu0 %v273, 64
      %v482 = vpop.permute.xlu0 %481
      %vm547 = vcmask 523264
      %v548 = vsel %vm547, %v210, 0
      %v550 = vsel %vm547, %v211, 0
      %v552 = vsel %vm547, %v212, 0
      %v554 = vsel %vm547, %v213, 0
      %v556 = vsel %vm547, %v214, 0
      %v558 = vsel %vm547, %v215, 0
      %v560 = vsel %vm547, %v216, 0
      %v562 = vsel %vm547, %v217, 0
      %v564 = vsel %vm547, %v218, 0
      %v566 = vsel %vm547, %v219, 0
      %v568 = vsel %vm547, %v220, 0
      %v570 = vsel %vm547, %v221, 0
      %v572 = vsel %vm547, %v222, 0
      %v574 = vsel %vm547, %v223, 0
      %v576 = vsel %vm547, %v224, 0
      %v578 = vsel %vm547, %v225, 0
      %v580 = vsel %vm547, %v226, 0
      %v582 = vsel %vm547, %v227, 0
      %v584 = vsel %vm547, %v228, 0
      %v586 = vsel %vm547, %v229, 0
      %v588 = vsel %vm547, %v230, 0
      %v590 = vsel %vm547, %v231, 0
      %v592 = vsel %vm547, %v232, 0
      %v594 = vsel %vm547, %v233, 0
      %v596 = vsel %vm547, %v234, 0
      %v598 = vsel %vm547, %v235, 0
      %v600 = vsel %vm547, %v236, 0
      %v602 = vsel %vm547, %v237, 0
      %v604 = vsel %vm547, %v238, 0
      %v606 = vsel %vm547, %v239, 0
      %v608 = vsel %vm547, %v240, 0
      %v610 = vsel %vm547, %v241, 0
      %v612 = vsel %vm547, %v242, 0
      %v614 = vsel %vm547, %v243, 0
      %v616 = vsel %vm547, %v244, 0
      %v618 = vsel %vm547, %v245, 0
      %v620 = vsel %vm547, %v246, 0
      %v622 = vsel %vm547, %v247, 0
      %v624 = vsel %vm547, %v248, 0
      %v626 = vsel %vm547, %v249, 0
      %v628 = vsel %vm547, %v250, 0
      %v630 = vsel %vm547, %v251, 0
      %v632 = vsel %vm547, %v252, 0
      %v634 = vsel %vm547, %v253, 0
      %v636 = vsel %vm547, %v254, 0
      %v638 = vsel %vm547, %v255, 0
      %v640 = vsel %vm547, %v256, 0
      %v642 = vsel %vm547, %v257, 0
      %v644 = vsel %vm547, %v258, 0
      %v646 = vsel %vm547, %v259, 0
      %v648 = vsel %vm547, %v260, 0
      %v650 = vsel %vm547, %v261, 0
      %v652 = vsel %vm547, %v262, 0
      %v654 = vsel %vm547, %v263, 0
      %v656 = vsel %vm547, %v264, 0
      %v658 = vsel %vm547, %v265, 0
      %v660 = vsel %vm547, %v266, 0
      %v662 = vsel %vm547, %v267, 0
      %v664 = vsel %vm547, %v268, 0
      %v666 = vsel %vm547, %v269, 0
      %v668 = vsel %vm547, %v270, 0
      %v670 = vsel %vm547, %v271, 0
      %v672 = vsel %vm547, %v272, 0
      %v674 = vsel %vm547, %v273, 0
      %v676 = vsel %vm547, %v356, 0
      %v678 = vsel %vm547, %v358, 0
      %v680 = vsel %vm547, %v360, 0
      %v682 = vsel %vm547, %v362, 0
      %v684 = vsel %vm547, %v364, 0
      %v686 = vsel %vm547, %v366, 0
      %v688 = vsel %vm547, %v368, 0
      %v690 = vsel %vm547, %v370, 0
      %v692 = vsel %vm547, %v372, 0
      %v694 = vsel %vm547, %v374, 0
      %v696 = vsel %vm547, %v376, 0
      %v698 = vsel %vm547, %v378, 0
      %v700 = vsel %vm547, %v380, 0
      %v702 = vsel %vm547, %v382, 0
      %v704 = vsel %vm547, %v384, 0
      %v706 = vsel %vm547, %v386, 0
      %v708 = vsel %vm547, %v388, 0
      %v710 = vsel %vm547, %v390, 0
      %v712 = vsel %vm547, %v392, 0
      %v714 = vsel %vm547, %v394, 0
      %v716 = vsel %vm547, %v396, 0
      %v718 = vsel %vm547, %v398, 0
      %v720 = vsel %vm547, %v400, 0
      %v722 = vsel %vm547, %v402, 0
      %v724 = vsel %vm547, %v404, 0
      %v726 = vsel %vm547, %v406, 0
      %v728 = vsel %vm547, %v408, 0
      %v730 = vsel %vm547, %v410, 0
      %v732 = vsel %vm547, %v412, 0
      %v734 = vsel %vm547, %v414, 0
      %v736 = vsel %vm547, %v416, 0
      %v738 = vsel %vm547, %v418, 0
      %v740 = vsel %vm547, %v420, 0
      %v742 = vsel %vm547, %v422, 0
      %v744 = vsel %vm547, %v424, 0
      %v746 = vsel %vm547, %v426, 0
      %v748 = vsel %vm547, %v428, 0
      %v750 = vsel %vm547, %v430, 0
      %v752 = vsel %vm547, %v432, 0
      %v754 = vsel %vm547, %v434, 0
      %v756 = vsel %vm547, %v436, 0
      %v758 = vsel %vm547, %v438, 0
      %v760 = vsel %vm547, %v440, 0
      %v762 = vsel %vm547, %v442, 0
      %v764 = vsel %vm547, %v444, 0
      %v766 = vsel %vm547, %v446, 0
      %v768 = vsel %vm547, %v448, 0
      %v770 = vsel %vm547, %v450, 0
      %v772 = vsel %vm547, %v452, 0
      %v774 = vsel %vm547, %v454, 0
      %v776 = vsel %vm547, %v456, 0
      %v778 = vsel %vm547, %v458, 0
      %v780 = vsel %vm547, %v460, 0
      %v782 = vsel %vm547, %v462, 0
      %v784 = vsel %vm547, %v464, 0
      %v786 = vsel %vm547, %v466, 0
      %v788 = vsel %vm547, %v468, 0
      %v790 = vsel %vm547, %v470, 0
      %v792 = vsel %vm547, %v472, 0
      %v794 = vsel %vm547, %v474, 0
      %v796 = vsel %vm547, %v476, 0
      %v798 = vsel %vm547, %v478, 0
      %v800 = vsel %vm547, %v480, 0
      %v802 = vsel %vm547, %v482, 0
      %v805 = vsel %vm547, %v274, 0
      %v808 = vsel %vm547, %v275, 0
      %v811 = vsel %vm547, %v276, 0
      %v814 = vsel %vm547, %v277, 0
      %v817 = vsel %vm547, %v278, 0
      %v820 = vsel %vm547, %v279, 0
      %v823 = vsel %vm547, %v280, 0
      %v826 = vsel %vm547, %v281, 0
      %v829 = vsel %vm547, %v282, 0
      %v832 = vsel %vm547, %v283, 0
      %v835 = vsel %vm547, %v284, 0
      %v838 = vsel %vm547, %v285, 0
      %v841 = vsel %vm547, %v286, 0
      %v844 = vsel %vm547, %v287, 0
      %v847 = vsel %vm547, %v288, 0
      %v850 = vsel %vm547, %v289, 0
      %852 = vmatprep.subr.mxu0 0.0
      %853 = vmatpush1.xpose.msra.mxu0 %v805
      %854 = vmatprep.subr.mxu0 0.0
      %855 = vmatpush1.xpose.msra.mxu0 %v808
      %856 = vmatprep.subr.mxu0 0.0
      %857 = vmatpush1.xpose.msra.mxu0 %v811
      %858 = vmatprep.subr.mxu0 0.0
      %859 = vmatpush1.xpose.msra.mxu0 %v814
      %860 = vmatprep.subr.mxu0 0.0
      %861 = vmatpush1.xpose.msra.mxu0 %v817
      %862 = vmatprep.subr.mxu0 0.0
      %863 = vmatpush1.xpose.msra.mxu0 %v820
      %864 = vmatprep.subr.mxu0 0.0
      %865 = vmatpush1.xpose.msra.mxu0 %v823
      %866 = vmatprep.subr.mxu0 0.0
      %867 = vmatpush1.xpose.msra.mxu0 %v826
      %868 = vmatprep.subr.mxu0 0.0
      %869 = vmatpush1.xpose.msra.mxu0 %v829
      %870 = vmatprep.subr.mxu0 0.0
      %871 = vmatpush1.xpose.msra.mxu0 %v832
      %872 = vmatprep.subr.mxu0 0.0
      %873 = vmatpush1.xpose.msra.mxu0 %v835
      %874 = vmatprep.subr.mxu0 0.0
      %875 = vmatpush1.xpose.msra.mxu0 %v838
      %876 = vmatprep.subr.mxu0 0.0
      %877 = vmatpush1.xpose.msra.mxu0 %v841
      %878 = vmatprep.subr.mxu0 0.0
      %879 = vmatpush1.xpose.msra.mxu0 %v844
      %880 = vmatprep.subr.mxu0 0.0
      %881 = vmatpush1.xpose.msra.mxu0 %v847
      %882 = vmatprep.subr.mxu0 0.0
      %883 = vmatpush1.xpose.msra.mxu0 %v850
      %884 = vmatprep.subr.mxu0 0.0
      %885 = vmatpush1.xpose.msra.mxu0 0.0
      %886 = vmatprep.subr.mxu0 0.0
      %887 = vmatpush1.xpose.msra.mxu0 0.0
      %888 = vmatprep.subr.mxu0 0.0
      %889 = vmatpush1.xpose.msra.mxu0 0.0
      %890 = vmatprep.subr.mxu0 0.0
      %891 = vmatpush1.xpose.msra.mxu0 0.0
      %892 = vmatprep.subr.mxu0 0.0
      %893 = vmatpush1.xpose.msra.mxu0 0.0
      %894 = vmatprep.subr.mxu0 0.0
      %895 = vmatpush1.xpose.msra.mxu0 0.0
      %896 = vmatprep.subr.mxu0 0.0
      %897 = vmatpush1.xpose.msra.mxu0 0.0
      %898 = vmatprep.subr.mxu0 0.0
      %899 = vmatpush1.xpose.msra.mxu0 0.0
      %900 = vmatprep.subr.mxu0 0.0
      %901 = vmatpush1.xpose.msra.mxu0 0.0
      %902 = vmatprep.subr.mxu0 0.0
      %903 = vmatpush1.xpose.msra.mxu0 0.0
      %904 = vmatprep.subr.mxu0 0.0
      %905 = vmatpush1.xpose.msra.mxu0 0.0
      %906 = vmatprep.subr.mxu0 0.0
      %907 = vmatpush1.xpose.msra.mxu0 0.0
      %908 = vmatprep.subr.mxu0 0.0
      %909 = vmatpush1.xpose.msra.mxu0 0.0
      %910 = vmatprep.subr.mxu0 0.0
      %911 = vmatpush1.xpose.msra.mxu0 0.0
      %912 = vmatprep.subr.mxu0 0.0
      %913 = vmatpush1.xpose.msra.mxu0 0.0
      %914 = vmatprep.subr.mxu0 0.0
      %915 = vmatpush1.xpose.msra.mxu0 0.0
      %916 = vmatprep.mubr.f32.mxu0 0.0
      %917 = vmatmul.mubr.f32.gmra.mrb[0].mxu0 %v548
      %v918 = vpop.f32.mrb[0].mxu0
      %v919 = vadd.f32 0.0, %v918
      %v920 = vpop.f32.mrb[0].mxu0
      %921 = vmatprep.mubr.f32.mxu0 0.0
      %922 = vmatmul.mubr.f32.gmra.mrb[0].mxu0 %v550
      %v923 = vpop.f32.mrb[0].mxu0
      %v924 = vadd.f32 0.0, %v923
      %v925 = vpop.f32.mrb[0].mxu0
      %926 = vmatprep.mubr.f32.mxu0 0.0
      %927 = vmatmul.mubr.f32.gmra.mrb[0].mxu0 %v552
      %v928 = vpop.f32.mrb[0].mxu0
      %v929 = vadd.f32 0.0, %v928
      %v930 = vpop.f32.mrb[0].mxu0
      %931 = vmatprep.mubr.f32.mxu0 0.0
      %932 = vmatmul.mubr.f32.gmra.mrb[0].mxu0 %v554
      %v933 = vpop.f32.mrb[0].mxu0
      %v934 = vadd.f32 0.0, %v933
      %v935 = vpop.f32.mrb[0].mxu0
      %936 = vmatprep.mubr.f32.mxu0 0.0
      %937 = vmatmul.mubr.f32.gmra.mrb[0].mxu0 %v556
      %v938 = vpop.f32.mrb[0].mxu0
      %v939 = vadd.f32 0.0, %v938
      %v940 = vpop.f32.mrb[0].mxu0
      %941 = vmatprep.mubr.f32.mxu0 0.0
      %942 = vmatmul.mubr.f32.gmra.mrb[0].mxu0 %v558
      %v943 = vpop.f32.mrb[0].mxu0
      %v944 = vadd.f32 0.0, %v943
      %v945 = vpop.f32.mrb[0].mxu0
      %946 = vmatprep.mubr.f32.mxu0 0.0
      %947 = vmatmul.mubr.f32.gmra.mrb[0].mxu0 %v560
      %v948 = vpop.f32.mrb[0].mxu0
      %v949 = vadd.f32 0.0, %v948
      %v950 = vpop.f32.mrb[0].mxu0
      %951 = vmatprep.mubr.f32.mxu0 0.0
      %952 = vmatmul.mubr.f32.gmra.mrb[0].mxu0 %v562
      %v953 = vpop.f32.mrb[0].mxu0
      %v954 = vadd.f32 0.0, %v953
      %v955 = vpop.f32.mrb[0].mxu0
      %956 = vmatprep.mubr.f32.mxu0 0.0
      %957 = vmatmul.mubr.f32.gmra.mrb[0].mxu0 %v564
      %v958 = vpop.f32.mrb[0].mxu0
      %v959 = vadd.f32 0.0, %v958
      %v960 = vpop.f32.mrb[0].mxu0
      %961 = vmatprep.mubr.f32.mxu0 0.0
      %962 = vmatmul.mubr.f32.gmra.mrb[0].mxu0 %v566
      %v963 = vpop.f32.mrb[0].mxu0
      %v964 = vadd.f32 0.0, %v963
      %v965 = vpop.f32.mrb[0].mxu0
      %966 = vmatprep.mubr.f32.mxu0 0.0
      %967 = vmatmul.mubr.f32.gmra.mrb[0].mxu0 %v568
      %v968 = vpop.f32.mrb[0].mxu0
      %v969 = vadd.f32 0.0, %v968
      %v970 = vpop.f32.mrb[0].mxu0
      %971 = vmatprep.mubr.f32.mxu0 0.0
      %972 = vmatmul.mubr.f32.gmra.mrb[0].mxu0 %v570
      %v973 = vpop.f32.mrb[0].mxu0
      %v974 = vadd.f32 0.0, %v973
      %v975 = vpop.f32.mrb[0].mxu0
      %976 = vmatprep.mubr.f32.mxu0 0.0
      %977 = vmatmul.mubr.f32.gmra.mrb[0].mxu0 %v572
      %v978 = vpop.f32.mrb[0].mxu0
      %v979 = vadd.f32 0.0, %v978
      %v980 = vpop.f32.mrb[0].mxu0
      %981 = vmatprep.mubr.f32.mxu0 0.0
      %982 = vmatmul.mubr.f32.gmra.mrb[0].mxu0 %v574
      %v983 = vpop.f32.mrb[0].mxu0
      %v984 = vadd.f32 0.0, %v983
      %v985 = vpop.f32.mrb[0].mxu0
      %986 = vmatprep.mubr.f32.mxu0 0.0
      %987 = vmatmul.mubr.f32.gmra.mrb[0].mxu0 %v576
      %v988 = vpop.f32.mrb[0].mxu0
      %v989 = vadd.f32 0.0, %v988
      %v990 = vpop.f32.mrb[0].mxu0
      %991 = vmatprep.mubr.f32.mxu0 0.0
      %992 = vmatmul.mubr.f32.gmra.mrb[0].mxu0 %v578
      %v993 = vpop.f32.mrb[0].mxu0
      %v994 = vadd.f32 0.0, %v993
      %v995 = vpop.f32.mrb[0].mxu0
      %996 = vmatprep.mubr.f32.mxu0 0.0
      %997 = vmatmul.mubr.f32.gmra.mrb[0].mxu0 %v580
      %v998 = vpop.f32.mrb[0].mxu0
      %v999 = vadd.f32 0.0, %v998
      %v1000 = vpop.f32.mrb[0].mxu0
      %1001 = vmatprep.mubr.f32.mxu0 0.0
      %1002 = vmatmul.mubr.f32.gmra.mrb[0].mxu0 %v582
      %v1003 = vpop.f32.mrb[0].mxu0
      %v1004 = vadd.f32 0.0, %v1003
      %v1005 = vpop.f32.mrb[0].mxu0
      %1006 = vmatprep.mubr.f32.mxu0 0.0
      %1007 = vmatmul.mubr.f32.gmra.mrb[0].mxu0 %v584
      %v1008 = vpop.f32.mrb[0].mxu0
      %v1009 = vadd.f32 0.0, %v1008
      %v1010 = vpop.f32.mrb[0].mxu0
      %1011 = vmatprep.mubr.f32.mxu0 0.0
      %1012 = vmatmul.mubr.f32.gmra.mrb[0].mxu0 %v586
      %v1013 = vpop.f32.mrb[0].mxu0
      %v1014 = vadd.f32 0.0, %v1013
      %v1015 = vpop.f32.mrb[0].mxu0
      %1016 = vmatprep.mubr.f32.mxu0 0.0
      %1017 = vmatmul.mubr.f32.gmra.mrb[0].mxu0 %v588
      %v1018 = vpop.f32.mrb[0].mxu0
      %v1019 = vadd.f32 0.0, %v1018
      %v1020 = vpop.f32.mrb[0].mxu0
      %1021 = vmatprep.mubr.f32.mxu0 0.0
      %1022 = vmatmul.mubr.f32.gmra.mrb[0].mxu0 %v590
      %v1023 = vpop.f32.mrb[0].mxu0
      %v1024 = vadd.f32 0.0, %v1023
      %v1025 = vpop.f32.mrb[0].mxu0
      %1026 = vmatprep.mubr.f32.mxu0 0.0
      %1027 = vmatmul.mubr.f32.gmra.mrb[0].mxu0 %v592
      %v1028 = vpop.f32.mrb[0].mxu0
      %v1029 = vadd.f32 0.0, %v1028
      %v1030 = vpop.f32.mrb[0].mxu0
      %1031 = vmatprep.mubr.f32.mxu0 0.0
      %1032 = vmatmul.mubr.f32.gmra.mrb[0].mxu0 %v594
      %v1033 = vpop.f32.mrb[0].mxu0
      %v1034 = vadd.f32 0.0, %v1033
      %v1035 = vpop.f32.mrb[0].mxu0
      %1036 = vmatprep.mubr.f32.mxu0 0.0
      %1037 = vmatmul.mubr.f32.gmra.mrb[0].mxu0 %v596
      %v1038 = vpop.f32.mrb[0].mxu0
      %v1039 = vadd.f32 0.0, %v1038
      %v1040 = vpop.f32.mrb[0].mxu0
      %1041 = vmatprep.mubr.f32.mxu0 0.0
      %1042 = vmatmul.mubr.f32.gmra.mrb[0].mxu0 %v598
      %v1043 = vpop.f32.mrb[0].mxu0
      %v1044 = vadd.f32 0.0, %v1043
      %v1045 = vpop.f32.mrb[0].mxu0
      %1046 = vmatprep.mubr.f32.mxu0 0.0
      %1047 = vmatmul.mubr.f32.gmra.mrb[0].mxu0 %v600
      %v1048 = vpop.f32.mrb[0].mxu0
      %v1049 = vadd.f32 0.0, %v1048
      %v1050 = vpop.f32.mrb[0].mxu0
      %1051 = vmatprep.mubr.f32.mxu0 0.0
      %1052 = vmatmul.mubr.f32.gmra.mrb[0].mxu0 %v602
      %v1053 = vpop.f32.mrb[0].mxu0
      %v1054 = vadd.f32 0.0, %v1053
      %v1055 = vpop.f32.mrb[0].mxu0
      %1056 = vmatprep.mubr.f32.mxu0 0.0
      %1057 = vmatmul.mubr.f32.gmra.mrb[0].mxu0 %v604
      %v1058 = vpop.f32.mrb[0].mxu0
      %v1059 = vadd.f32 0.0, %v1058
      %v1060 = vpop.f32.mrb[0].mxu0
      %1061 = vmatprep.mubr.f32.mxu0 0.0
      %1062 = vmatmul.mubr.f32.gmra.mrb[0].mxu0 %v606
      %v1063 = vpop.f32.mrb[0].mxu0
      %v1064 = vadd.f32 0.0, %v1063
      %v1065 = vpop.f32.mrb[0].mxu0
      %1066 = vmatprep.mubr.f32.mxu0 0.0
      %1067 = vmatmul.mubr.f32.gmra.mrb[0].mxu0 %v608
      %v1068 = vpop.f32.mrb[0].mxu0
      %v1069 = vadd.f32 0.0, %v1068
      %v1070 = vpop.f32.mrb[0].mxu0
      %1071 = vmatprep.mubr.f32.mxu0 0.0
      %1072 = vmatmul.mubr.f32.gmra.mrb[0].mxu0 %v610
      %v1073 = vpop.f32.mrb[0].mxu0
      %v1074 = vadd.f32 0.0, %v1073
      %v1075 = vpop.f32.mrb[0].mxu0
      %1076 = vmatprep.mubr.f32.mxu0 0.0
      %1077 = vmatmul.mubr.f32.gmra.mrb[0].mxu0 %v612
      %v1078 = vpop.f32.mrb[0].mxu0
      %v1079 = vadd.f32 0.0, %v1078
      %v1080 = vpop.f32.mrb[0].mxu0
      %1081 = vmatprep.mubr.f32.mxu0 0.0
      %1082 = vmatmul.mubr.f32.gmra.mrb[0].mxu0 %v614
      %v1083 = vpop.f32.mrb[0].mxu0
      %v1084 = vadd.f32 0.0, %v1083
      %v1085 = vpop.f32.mrb[0].mxu0
      %1086 = vmatprep.mubr.f32.mxu0 0.0
      %1087 = vmatmul.mubr.f32.gmra.mrb[0].mxu0 %v616
      %v1088 = vpop.f32.mrb[0].mxu0
      %v1089 = vadd.f32 0.0, %v1088
      %v1090 = vpop.f32.mrb[0].mxu0
      %1091 = vmatprep.mubr.f32.mxu0 0.0
      %1092 = vmatmul.mubr.f32.gmra.mrb[0].mxu0 %v618
      %v1093 = vpop.f32.mrb[0].mxu0
      %v1094 = vadd.f32 0.0, %v1093
      %v1095 = vpop.f32.mrb[0].mxu0
      %1096 = vmatprep.mubr.f32.mxu0 0.0
      %1097 = vmatmul.mubr.f32.gmra.mrb[0].mxu0 %v620
      %v1098 = vpop.f32.mrb[0].mxu0
      %v1099 = vadd.f32 0.0, %v1098
      %v1100 = vpop.f32.mrb[0].mxu0
      %1101 = vmatprep.mubr.f32.mxu0 0.0
      %1102 = vmatmul.mubr.f32.gmra.mrb[0].mxu0 %v622
      %v1103 = vpop.f32.mrb[0].mxu0
      %v1104 = vadd.f32 0.0, %v1103
      %v1105 = vpop.f32.mrb[0].mxu0
      %1106 = vmatprep.mubr.f32.mxu0 0.0
      %1107 = vmatmul.mubr.f32.gmra.mrb[0].mxu0 %v624
      %v1108 = vpop.f32.mrb[0].mxu0
      %v1109 = vadd.f32 0.0, %v1108
      %v1110 = vpop.f32.mrb[0].mxu0
      %1111 = vmatprep.mubr.f32.mxu0 0.0
      %1112 = vmatmul.mubr.f32.gmra.mrb[0].mxu0 %v626
      %v1113 = vpop.f32.mrb[0].mxu0
      %v1114 = vadd.f32 0.0, %v1113
      %v1115 = vpop.f32.mrb[0].mxu0
      %1116 = vmatprep.mubr.f32.mxu0 0.0
      %1117 = vmatmul.mubr.f32.gmra.mrb[0].mxu0 %v628
      %v1118 = vpop.f32.mrb[0].mxu0
      %v1119 = vadd.f32 0.0, %v1118
      %v1120 = vpop.f32.mrb[0].mxu0
      %1121 = vmatprep.mubr.f32.mxu0 0.0
      %1122 = vmatmul.mubr.f32.gmra.mrb[0].mxu0 %v630
      %v1123 = vpop.f32.mrb[0].mxu0
      %v1124 = vadd.f32 0.0, %v1123
      %v1125 = vpop.f32.mrb[0].mxu0
      %1126 = vmatprep.mubr.f32.mxu0 0.0
      %1127 = vmatmul.mubr.f32.gmra.mrb[0].mxu0 %v632
      %v1128 = vpop.f32.mrb[0].mxu0
      %v1129 = vadd.f32 0.0, %v1128
      %v1130 = vpop.f32.mrb[0].mxu0
      %1131 = vmatprep.mubr.f32.mxu0 0.0
      %1132 = vmatmul.mubr.f32.gmra.mrb[0].mxu0 %v634
      %v1133 = vpop.f32.mrb[0].mxu0
      %v1134 = vadd.f32 0.0, %v1133
      %v1135 = vpop.f32.mrb[0].mxu0
      %1136 = vmatprep.mubr.f32.mxu0 0.0
      %1137 = vmatmul.mubr.f32.gmra.mrb[0].mxu0 %v636
      %v1138 = vpop.f32.mrb[0].mxu0
      %v1139 = vadd.f32 0.0, %v1138
      %v1140 = vpop.f32.mrb[0].mxu0
      %1141 = vmatprep.mubr.f32.mxu0 0.0
      %1142 = vmatmul.mubr.f32.gmra.mrb[0].mxu0 %v638
      %v1143 = vpop.f32.mrb[0].mxu0
      %v1144 = vadd.f32 0.0, %v1143
      %v1145 = vpop.f32.mrb[0].mxu0
      %1146 = vmatprep.mubr.f32.mxu0 0.0
      %1147 = vmatmul.mubr.f32.gmra.mrb[0].mxu0 %v640
      %v1148 = vpop.f32.mrb[0].mxu0
      %v1149 = vadd.f32 0.0, %v1148
      %v1150 = vpop.f32.mrb[0].mxu0
      %1151 = vmatprep.mubr.f32.mxu0 0.0
      %1152 = vmatmul.mubr.f32.gmra.mrb[0].mxu0 %v642
      %v1153 = vpop.f32.mrb[0].mxu0
      %v1154 = vadd.f32 0.0, %v1153
      %v1155 = vpop.f32.mrb[0].mxu0
      %1156 = vmatprep.mubr.f32.mxu0 0.0
      %1157 = vmatmul.mubr.f32.gmra.mrb[0].mxu0 %v644
      %v1158 = vpop.f32.mrb[0].mxu0
      %v1159 = vadd.f32 0.0, %v1158
      %v1160 = vpop.f32.mrb[0].mxu0
      %1161 = vmatprep.mubr.f32.mxu0 0.0
      %1162 = vmatmul.mubr.f32.gmra.mrb[0].mxu0 %v646
      %v1163 = vpop.f32.mrb[0].mxu0
      %v1164 = vadd.f32 0.0, %v1163
      %v1165 = vpop.f32.mrb[0].mxu0
      %1166 = vmatprep.mubr.f32.mxu0 0.0
      %1167 = vmatmul.mubr.f32.gmra.mrb[0].mxu0 %v648
      %v1168 = vpop.f32.mrb[0].mxu0
      %v1169 = vadd.f32 0.0, %v1168
      %v1170 = vpop.f32.mrb[0].mxu0
      %1171 = vmatprep.mubr.f32.mxu0 0.0
      %1172 = vmatmul.mubr.f32.gmra.mrb[0].mxu0 %v650
      %v1173 = vpop.f32.mrb[0].mxu0
      %v1174 = vadd.f32 0.0, %v1173
      %v1175 = vpop.f32.mrb[0].mxu0
      %1176 = vmatprep.mubr.f32.mxu0 0.0
      %1177 = vmatmul.mubr.f32.gmra.mrb[0].mxu0 %v652
      %v1178 = vpop.f32.mrb[0].mxu0
      %v1179 = vadd.f32 0.0, %v1178
      %v1180 = vpop.f32.mrb[0].mxu0
      %1181 = vmatprep.mubr.f32.mxu0 0.0
      %1182 = vmatmul.mubr.f32.gmra.mrb[0].mxu0 %v654
      %v1183 = vpop.f32.mrb[0].mxu0
      %v1184 = vadd.f32 0.0, %v1183
      %v1185 = vpop.f32.mrb[0].mxu0
      %1186 = vmatprep.mubr.f32.mxu0 0.0
      %1187 = vmatmul.mubr.f32.gmra.mrb[0].mxu0 %v656
      %v1188 = vpop.f32.mrb[0].mxu0
      %v1189 = vadd.f32 0.0, %v1188
      %v1190 = vpop.f32.mrb[0].mxu0
      %1191 = vmatprep.mubr.f32.mxu0 0.0
      %1192 = vmatmul.mubr.f32.gmra.mrb[0].mxu0 %v658
      %v1193 = vpop.f32.mrb[0].mxu0
      %v1194 = vadd.f32 0.0, %v1193
      %v1195 = vpop.f32.mrb[0].mxu0
      %1196 = vmatprep.mubr.f32.mxu0 0.0
      %1197 = vmatmul.mubr.f32.gmra.mrb[0].mxu0 %v660
      %v1198 = vpop.f32.mrb[0].mxu0
      %v1199 = vadd.f32 0.0, %v1198
      %v1200 = vpop.f32.mrb[0].mxu0
      %1201 = vmatprep.mubr.f32.mxu0 0.0
      %1202 = vmatmul.mubr.f32.gmra.mrb[0].mxu0 %v662
      %v1203 = vpop.f32.mrb[0].mxu0
      %v1204 = vadd.f32 0.0, %v1203
      %v1205 = vpop.f32.mrb[0].mxu0
      %1206 = vmatprep.mubr.f32.mxu0 0.0
      %1207 = vmatmul.mubr.f32.gmra.mrb[0].mxu0 %v664
      %v1208 = vpop.f32.mrb[0].mxu0
      %v1209 = vadd.f32 0.0, %v1208
      %v1210 = vpop.f32.mrb[0].mxu0
      %1211 = vmatprep.mubr.f32.mxu0 0.0
      %1212 = vmatmul.mubr.f32.gmra.mrb[0].mxu0 %v666
      %v1213 = vpop.f32.mrb[0].mxu0
      %v1214 = vadd.f32 0.0, %v1213
      %v1215 = vpop.f32.mrb[0].mxu0
      %1216 = vmatprep.mubr.f32.mxu0 0.0
      %1217 = vmatmul.mubr.f32.gmra.mrb[0].mxu0 %v668
      %v1218 = vpop.f32.mrb[0].mxu0
      %v1219 = vadd.f32 0.0, %v1218
      %v1220 = vpop.f32.mrb[0].mxu0
      %1221 = vmatprep.mubr.f32.mxu0 0.0
      %1222 = vmatmul.mubr.f32.gmra.mrb[0].mxu0 %v670
      %v1223 = vpop.f32.mrb[0].mxu0
      %v1224 = vadd.f32 0.0, %v1223
      %v1225 = vpop.f32.mrb[0].mxu0
      %1226 = vmatprep.mubr.f32.mxu0 0.0
      %1227 = vmatmul.mubr.f32.gmra.mrb[0].mxu0 %v672
      %v1228 = vpop.f32.mrb[0].mxu0
      %v1229 = vadd.f32 0.0, %v1228
      %v1230 = vpop.f32.mrb[0].mxu0
      %1231 = vmatprep.mubr.f32.mxu0 0.0
      %1232 = vmatmul.mubr.f32.gmra.mrb[0].mxu0 %v674
      %v1233 = vpop.f32.mrb[0].mxu0
      %v1234 = vadd.f32 0.0, %v1233
      %v1235 = vpop.f32.mrb[0].mxu0
      %1236 = vmatprep.mubr.f32.mxu0 0.0
      %1237 = vmatmul.mubr.f32.gmra.mrb[0].mxu0 %v676
      %v1238 = vpop.f32.mrb[0].mxu0
      %v1239 = vadd.f32 0.0, %v1238
      %v1240 = vpop.f32.mrb[0].mxu0
      %1241 = vmatprep.mubr.f32.mxu0 0.0
      %1242 = vmatmul.mubr.f32.gmra.mrb[0].mxu0 %v678
      %v1243 = vpop.f32.mrb[0].mxu0
      %v1244 = vadd.f32 0.0, %v1243
      %v1245 = vpop.f32.mrb[0].mxu0
      %1246 = vmatprep.mubr.f32.mxu0 0.0
      %1247 = vmatmul.mubr.f32.gmra.mrb[0].mxu0 %v680
      %v1248 = vpop.f32.mrb[0].mxu0
      %v1249 = vadd.f32 0.0, %v1248
      %v1250 = vpop.f32.mrb[0].mxu0
      %1251 = vmatprep.mubr.f32.mxu0 0.0
      %1252 = vmatmul.mubr.f32.gmra.mrb[0].mxu0 %v682
      %v1253 = vpop.f32.mrb[0].mxu0
      %v1254 = vadd.f32 0.0, %v1253
      %v1255 = vpop.f32.mrb[0].mxu0
      %1256 = vmatprep.mubr.f32.mxu0 0.0
      %1257 = vmatmul.mubr.f32.gmra.mrb[0].mxu0 %v684
      %v1258 = vpop.f32.mrb[0].mxu0
      %v1259 = vadd.f32 0.0, %v1258
      %v1260 = vpop.f32.mrb[0].mxu0
      %1261 = vmatprep.mubr.f32.mxu0 0.0
      %1262 = vmatmul.mubr.f32.gmra.mrb[0].mxu0 %v686
      %v1263 = vpop.f32.mrb[0].mxu0
      %v1264 = vadd.f32 0.0, %v1263
      %v1265 = vpop.f32.mrb[0].mxu0
      %1266 = vmatprep.mubr.f32.mxu0 0.0
      %1267 = vmatmul.mubr.f32.gmra.mrb[0].mxu0 %v688
      %v1268 = vpop.f32.mrb[0].mxu0
      %v1269 = vadd.f32 0.0, %v1268
      %v1270 = vpop.f32.mrb[0].mxu0
      %1271 = vmatprep.mubr.f32.mxu0 0.0
      %1272 = vmatmul.mubr.f32.gmra.mrb[0].mxu0 %v690
      %v1273 = vpop.f32.mrb[0].mxu0
      %v1274 = vadd.f32 0.0, %v1273
      %v1275 = vpop.f32.mrb[0].mxu0
      %1276 = vmatprep.mubr.f32.mxu0 0.0
      %1277 = vmatmul.mubr.f32.gmra.mrb[0].mxu0 %v692
      %v1278 = vpop.f32.mrb[0].mxu0
      %v1279 = vadd.f32 0.0, %v1278
      %v1280 = vpop.f32.mrb[0].mxu0
      %1281 = vmatprep.mubr.f32.mxu0 0.0
      %1282 = vmatmul.mubr.f32.gmra.mrb[0].mxu0 %v694
      %v1283 = vpop.f32.mrb[0].mxu0
      %v1284 = vadd.f32 0.0, %v1283
      %v1285 = vpop.f32.mrb[0].mxu0
      %1286 = vmatprep.mubr.f32.mxu0 0.0
      %1287 = vmatmul.mubr.f32.gmra.mrb[0].mxu0 %v696
      %v1288 = vpop.f32.mrb[0].mxu0
      %v1289 = vadd.f32 0.0, %v1288
      %v1290 = vpop.f32.mrb[0].mxu0
      %1291 = vmatprep.mubr.f32.mxu0 0.0
      %1292 = vmatmul.mubr.f32.gmra.mrb[0].mxu0 %v698
      %v1293 = vpop.f32.mrb[0].mxu0
      %v1294 = vadd.f32 0.0, %v1293
      %v1295 = vpop.f32.mrb[0].mxu0
      %1296 = vmatprep.mubr.f32.mxu0 0.0
      %1297 = vmatmul.mubr.f32.gmra.mrb[0].mxu0 %v700
      %v1298 = vpop.f32.mrb[0].mxu0
      %v1299 = vadd.f32 0.0, %v1298
      %v1300 = vpop.f32.mrb[0].mxu0
      %1301 = vmatprep.mubr.f32.mxu0 0.0
      %1302 = vmatmul.mubr.f32.gmra.mrb[0].mxu0 %v702
      %v1303 = vpop.f32.mrb[0].mxu0
      %v1304 = vadd.f32 0.0, %v1303
      %v1305 = vpop.f32.mrb[0].mxu0
      %1306 = vmatprep.mubr.f32.mxu0 0.0
      %1307 = vmatmul.mubr.f32.gmra.mrb[0].mxu0 %v704
      %v1308 = vpop.f32.mrb[0].mxu0
      %v1309 = vadd.f32 0.0, %v1308
      %v1310 = vpop.f32.mrb[0].mxu0
      %1311 = vmatprep.mubr.f32.mxu0 0.0
      %1312 = vmatmul.mubr.f32.gmra.mrb[0].mxu0 %v706
      %v1313 = vpop.f32.mrb[0].mxu0
      %v1314 = vadd.f32 0.0, %v1313
      %v1315 = vpop.f32.mrb[0].mxu0
      %1316 = vmatprep.mubr.f32.mxu0 0.0
      %1317 = vmatmul.mubr.f32.gmra.mrb[0].mxu0 %v708
      %v1318 = vpop.f32.mrb[0].mxu0
      %v1319 = vadd.f32 0.0, %v1318
      %v1320 = vpop.f32.mrb[0].mxu0
      %1321 = vmatprep.mubr.f32.mxu0 0.0
      %1322 = vmatmul.mubr.f32.gmra.mrb[0].mxu0 %v710
      %v1323 = vpop.f32.mrb[0].mxu0
      %v1324 = vadd.f32 0.0, %v1323
      %v1325 = vpop.f32.mrb[0].mxu0
      %1326 = vmatprep.mubr.f32.mxu0 0.0
      %1327 = vmatmul.mubr.f32.gmra.mrb[0].mxu0 %v712
      %v1328 = vpop.f32.mrb[0].mxu0
      %v1329 = vadd.f32 0.0, %v1328
      %v1330 = vpop.f32.mrb[0].mxu0
      %1331 = vmatprep.mubr.f32.mxu0 0.0
      %1332 = vmatmul.mubr.f32.gmra.mrb[0].mxu0 %v714
      %v1333 = vpop.f32.mrb[0].mxu0
      %v1334 = vadd.f32 0.0, %v1333
      %v1335 = vpop.f32.mrb[0].mxu0
      %1336 = vmatprep.mubr.f32.mxu0 0.0
      %1337 = vmatmul.mubr.f32.gmra.mrb[0].mxu0 %v716
      %v1338 = vpop.f32.mrb[0].mxu0
      %v1339 = vadd.f32 0.0, %v1338
      %v1340 = vpop.f32.mrb[0].mxu0
      %1341 = vmatprep.mubr.f32.mxu0 0.0
      %1342 = vmatmul.mubr.f32.gmra.mrb[0].mxu0 %v718
      %v1343 = vpop.f32.mrb[0].mxu0
      %v1344 = vadd.f32 0.0, %v1343
      %v1345 = vpop.f32.mrb[0].mxu0
      %1346 = vmatprep.mubr.f32.mxu0 0.0
      %1347 = vmatmul.mubr.f32.gmra.mrb[0].mxu0 %v720
      %v1348 = vpop.f32.mrb[0].mxu0
      %v1349 = vadd.f32 0.0, %v1348
      %v1350 = vpop.f32.mrb[0].mxu0
      %1351 = vmatprep.mubr.f32.mxu0 0.0
      %1352 = vmatmul.mubr.f32.gmra.mrb[0].mxu0 %v722
      %v1353 = vpop.f32.mrb[0].mxu0
      %v1354 = vadd.f32 0.0, %v1353
      %v1355 = vpop.f32.mrb[0].mxu0
      %1356 = vmatprep.mubr.f32.mxu0 0.0
      %1357 = vmatmul.mubr.f32.gmra.mrb[0].mxu0 %v724
      %v1358 = vpop.f32.mrb[0].mxu0
      %v1359 = vadd.f32 0.0, %v1358
      %v1360 = vpop.f32.mrb[0].mxu0
      %1361 = vmatprep.mubr.f32.mxu0 0.0
      %1362 = vmatmul.mubr.f32.gmra.mrb[0].mxu0 %v726
      %v1363 = vpop.f32.mrb[0].mxu0
      %v1364 = vadd.f32 0.0, %v1363
      %v1365 = vpop.f32.mrb[0].mxu0
      %1366 = vmatprep.mubr.f32.mxu0 0.0
      %1367 = vmatmul.mubr.f32.gmra.mrb[0].mxu0 %v728
      %v1368 = vpop.f32.mrb[0].mxu0
      %v1369 = vadd.f32 0.0, %v1368
      %v1370 = vpop.f32.mrb[0].mxu0
      %1371 = vmatprep.mubr.f32.mxu0 0.0
      %1372 = vmatmul.mubr.f32.gmra.mrb[0].mxu0 %v730
      %v1373 = vpop.f32.mrb[0].mxu0
      %v1374 = vadd.f32 0.0, %v1373
      %v1375 = vpop.f32.mrb[0].mxu0
      %1376 = vmatprep.mubr.f32.mxu0 0.0
      %1377 = vmatmul.mubr.f32.gmra.mrb[0].mxu0 %v732
      %v1378 = vpop.f32.mrb[0].mxu0
      %v1379 = vadd.f32 0.0, %v1378
      %v1380 = vpop.f32.mrb[0].mxu0
      %1381 = vmatprep.mubr.f32.mxu0 0.0
      %1382 = vmatmul.mubr.f32.gmra.mrb[0].mxu0 %v734
      %v1383 = vpop.f32.mrb[0].mxu0
      %v1384 = vadd.f32 0.0, %v1383
      %v1385 = vpop.f32.mrb[0].mxu0
      %1386 = vmatprep.mubr.f32.mxu0 0.0
      %1387 = vmatmul.mubr.f32.gmra.mrb[0].mxu0 %v736
      %v1388 = vpop.f32.mrb[0].mxu0
      %v1389 = vadd.f32 0.0, %v1388
      %v1390 = vpop.f32.mrb[0].mxu0
      %1391 = vmatprep.mubr.f32.mxu0 0.0
      %1392 = vmatmul.mubr.f32.gmra.mrb[0].mxu0 %v738
      %v1393 = vpop.f32.mrb[0].mxu0
      %v1394 = vadd.f32 0.0, %v1393
      %v1395 = vpop.f32.mrb[0].mxu0
      %1396 = vmatprep.mubr.f32.mxu0 0.0
      %1397 = vmatmul.mubr.f32.gmra.mrb[0].mxu0 %v740
      %v1398 = vpop.f32.mrb[0].mxu0
      %v1399 = vadd.f32 0.0, %v1398
      %v1400 = vpop.f32.mrb[0].mxu0
      %1401 = vmatprep.mubr.f32.mxu0 0.0
      %1402 = vmatmul.mubr.f32.gmra.mrb[0].mxu0 %v742
      %v1403 = vpop.f32.mrb[0].mxu0
      %v1404 = vadd.f32 0.0, %v1403
      %v1405 = vpop.f32.mrb[0].mxu0
      %1406 = vmatprep.mubr.f32.mxu0 0.0
      %1407 = vmatmul.mubr.f32.gmra.mrb[0].mxu0 %v744
      %v1408 = vpop.f32.mrb[0].mxu0
      %v1409 = vadd.f32 0.0, %v1408
      %v1410 = vpop.f32.mrb[0].mxu0
      %1411 = vmatprep.mubr.f32.mxu0 0.0
      %1412 = vmatmul.mubr.f32.gmra.mrb[0].mxu0 %v746
      %v1413 = vpop.f32.mrb[0].mxu0
      %v1414 = vadd.f32 0.0, %v1413
      %v1415 = vpop.f32.mrb[0].mxu0
      %1416 = vmatprep.mubr.f32.mxu0 0.0
      %1417 = vmatmul.mubr.f32.gmra.mrb[0].mxu0 %v748
      %v1418 = vpop.f32.mrb[0].mxu0
      %v1419 = vadd.f32 0.0, %v1418
      %v1420 = vpop.f32.mrb[0].mxu0
      %1421 = vmatprep.mubr.f32.mxu0 0.0
      %1422 = vmatmul.mubr.f32.gmra.mrb[0].mxu0 %v750
      %v1423 = vpop.f32.mrb[0].mxu0
      %v1424 = vadd.f32 0.0, %v1423
      %v1425 = vpop.f32.mrb[0].mxu0
      %1426 = vmatprep.mubr.f32.mxu0 0.0
      %1427 = vmatmul.mubr.f32.gmra.mrb[0].mxu0 %v752
      %v1428 = vpop.f32.mrb[0].mxu0
      %v1429 = vadd.f32 0.0, %v1428
      %v1430 = vpop.f32.mrb[0].mxu0
      %1431 = vmatprep.mubr.f32.mxu0 0.0
      %1432 = vmatmul.mubr.f32.gmra.mrb[0].mxu0 %v754
      %v1433 = vpop.f32.mrb[0].mxu0
      %v1434 = vadd.f32 0.0, %v1433
      %v1435 = vpop.f32.mrb[0].mxu0
      %1436 = vmatprep.mubr.f32.mxu0 0.0
      %1437 = vmatmul.mubr.f32.gmra.mrb[0].mxu0 %v756
      %v1438 = vpop.f32.mrb[0].mxu0
      %v1439 = vadd.f32 0.0, %v1438
      %v1440 = vpop.f32.mrb[0].mxu0
      %1441 = vmatprep.mubr.f32.mxu0 0.0
      %1442 = vmatmul.mubr.f32.gmra.mrb[0].mxu0 %v758
      %v1443 = vpop.f32.mrb[0].mxu0
      %v1444 = vadd.f32 0.0, %v1443
      %v1445 = vpop.f32.mrb[0].mxu0
      %1446 = vmatprep.mubr.f32.mxu0 0.0
      %1447 = vmatmul.mubr.f32.gmra.mrb[0].mxu0 %v760
      %v1448 = vpop.f32.mrb[0].mxu0
      %v1449 = vadd.f32 0.0, %v1448
      %v1450 = vpop.f32.mrb[0].mxu0
      %1451 = vmatprep.mubr.f32.mxu0 0.0
      %1452 = vmatmul.mubr.f32.gmra.mrb[0].mxu0 %v762
      %v1453 = vpop.f32.mrb[0].mxu0
      %v1454 = vadd.f32 0.0, %v1453
      %v1455 = vpop.f32.mrb[0].mxu0
      %1456 = vmatprep.mubr.f32.mxu0 0.0
      %1457 = vmatmul.mubr.f32.gmra.mrb[0].mxu0 %v764
      %v1458 = vpop.f32.mrb[0].mxu0
      %v1459 = vadd.f32 0.0, %v1458
      %v1460 = vpop.f32.mrb[0].mxu0
      %1461 = vmatprep.mubr.f32.mxu0 0.0
      %1462 = vmatmul.mubr.f32.gmra.mrb[0].mxu0 %v766
      %v1463 = vpop.f32.mrb[0].mxu0
      %v1464 = vadd.f32 0.0, %v1463
      %v1465 = vpop.f32.mrb[0].mxu0
      %1466 = vmatprep.mubr.f32.mxu0 0.0
      %1467 = vmatmul.mubr.f32.gmra.mrb[0].mxu0 %v768
      %v1468 = vpop.f32.mrb[0].mxu0
      %v1469 = vadd.f32 0.0, %v1468
      %v1470 = vpop.f32.mrb[0].mxu0
      %1471 = vmatprep.mubr.f32.mxu0 0.0
      %1472 = vmatmul.mubr.f32.gmra.mrb[0].mxu0 %v770
      %v1473 = vpop.f32.mrb[0].mxu0
      %v1474 = vadd.f32 0.0, %v1473
      %v1475 = vpop.f32.mrb[0].mxu0
      %1476 = vmatprep.mubr.f32.mxu0 0.0
      %1477 = vmatmul.mubr.f32.gmra.mrb[0].mxu0 %v772
      %v1478 = vpop.f32.mrb[0].mxu0
      %v1479 = vadd.f32 0.0, %v1478
      %v1480 = vpop.f32.mrb[0].mxu0
      %1481 = vmatprep.mubr.f32.mxu0 0.0
      %1482 = vmatmul.mubr.f32.gmra.mrb[0].mxu0 %v774
      %v1483 = vpop.f32.mrb[0].mxu0
      %v1484 = vadd.f32 0.0, %v1483
      %v1485 = vpop.f32.mrb[0].mxu0
      %1486 = vmatprep.mubr.f32.mxu0 0.0
      %1487 = vmatmul.mubr.f32.gmra.mrb[0].mxu0 %v776
      %v1488 = vpop.f32.mrb[0].mxu0
      %v1489 = vadd.f32 0.0, %v1488
      %v1490 = vpop.f32.mrb[0].mxu0
      %1491 = vmatprep.mubr.f32.mxu0 0.0
      %1492 = vmatmul.mubr.f32.gmra.mrb[0].mxu0 %v778
      %v1493 = vpop.f32.mrb[0].mxu0
      %v1494 = vadd.f32 0.0, %v1493
      %v1495 = vpop.f32.mrb[0].mxu0
      %1496 = vmatprep.mubr.f32.mxu0 0.0
      %1497 = vmatmul.mubr.f32.gmra.mrb[0].mxu0 %v780
      %v1498 = vpop.f32.mrb[0].mxu0
      %v1499 = vadd.f32 0.0, %v1498
      %v1500 = vpop.f32.mrb[0].mxu0
      %1501 = vmatprep.mubr.f32.mxu0 0.0
      %1502 = vmatmul.mubr.f32.gmra.mrb[0].mxu0 %v782
      %v1503 = vpop.f32.mrb[0].mxu0
      %v1504 = vadd.f32 0.0, %v1503
      %v1505 = vpop.f32.mrb[0].mxu0
      %1506 = vmatprep.mubr.f32.mxu0 0.0
      %1507 = vmatmul.mubr.f32.gmra.mrb[0].mxu0 %v784
      %v1508 = vpop.f32.mrb[0].mxu0
      %v1509 = vadd.f32 0.0, %v1508
      %v1510 = vpop.f32.mrb[0].mxu0
      %1511 = vmatprep.mubr.f32.mxu0 0.0
      %1512 = vmatmul.mubr.f32.gmra.mrb[0].mxu0 %v786
      %v1513 = vpop.f32.mrb[0].mxu0
      %v1514 = vadd.f32 0.0, %v1513
      %v1515 = vpop.f32.mrb[0].mxu0
      %1516 = vmatprep.mubr.f32.mxu0 0.0
      %1517 = vmatmul.mubr.f32.gmra.mrb[0].mxu0 %v788
      %v1518 = vpop.f32.mrb[0].mxu0
      %v1519 = vadd.f32 0.0, %v1518
      %v1520 = vpop.f32.mrb[0].mxu0
      %1521 = vmatprep.mubr.f32.mxu0 0.0
      %1522 = vmatmul.mubr.f32.gmra.mrb[0].mxu0 %v790
      %v1523 = vpop.f32.mrb[0].mxu0
      %v1524 = vadd.f32 0.0, %v1523
      %v1525 = vpop.f32.mrb[0].mxu0
      %1526 = vmatprep.mubr.f32.mxu0 0.0
      %1527 = vmatmul.mubr.f32.gmra.mrb[0].mxu0 %v792
      %v1528 = vpop.f32.mrb[0].mxu0
      %v1529 = vadd.f32 0.0, %v1528
      %v1530 = vpop.f32.mrb[0].mxu0
      %1531 = vmatprep.mubr.f32.mxu0 0.0
      %1532 = vmatmul.mubr.f32.gmra.mrb[0].mxu0 %v794
      %v1533 = vpop.f32.mrb[0].mxu0
      %v1534 = vadd.f32 0.0, %v1533
      %v1535 = vpop.f32.mrb[0].mxu0
      %1536 = vmatprep.mubr.f32.mxu0 0.0
      %1537 = vmatmul.mubr.f32.gmra.mrb[0].mxu0 %v796
      %v1538 = vpop.f32.mrb[0].mxu0
      %v1539 = vadd.f32 0.0, %v1538
      %v1540 = vpop.f32.mrb[0].mxu0
      %1541 = vmatprep.mubr.f32.mxu0 0.0
      %1542 = vmatmul.mubr.f32.gmra.mrb[0].mxu0 %v798
      %v1543 = vpop.f32.mrb[0].mxu0
      %v1544 = vadd.f32 0.0, %v1543
      %v1545 = vpop.f32.mrb[0].mxu0
      %1546 = vmatprep.mubr.f32.mxu0 0.0
      %1547 = vmatmul.mubr.f32.gmra.mrb[0].mxu0 %v800
      %v1548 = vpop.f32.mrb[0].mxu0
      %v1549 = vadd.f32 0.0, %v1548
      %v1550 = vpop.f32.mrb[0].mxu0
      %1551 = vmatprep.mubr.f32.mxu0 0.0
      %1552 = vmatmul.mubr.f32.gmra.mrb[0].mxu0 %v802
      %v1553 = vpop.f32.mrb[0].mxu0
      %v1554 = vadd.f32 0.0, %v1553
      %v1555 = vpop.f32.mrb[0].mxu0
      %1556 = vdwg.mxu0
      %v1557 = vmul.f32 %v919, 2.0
      %v1558 = vmul.f32 %v924, 2.0
      %v1559 = vmul.f32 %v929, 2.0
      %v1560 = vmul.f32 %v934, 2.0
      %v1561 = vmul.f32 %v939, 2.0
      %v1562 = vmul.f32 %v944, 2.0
      %v1563 = vmul.f32 %v949, 2.0
      %v1564 = vmul.f32 %v954, 2.0
      %v1565 = vmul.f32 %v959, 2.0
      %v1566 = vmul.f32 %v964, 2.0
      %v1567 = vmul.f32 %v969, 2.0
      %v1568 = vmul.f32 %v974, 2.0
      %v1569 = vmul.f32 %v979, 2.0
      %v1570 = vmul.f32 %v984, 2.0
      %v1571 = vmul.f32 %v989, 2.0
      %v1572 = vmul.f32 %v994, 2.0
      %v1573 = vmul.f32 %v999, 2.0
      %v1574 = vmul.f32 %v1004, 2.0
      %v1575 = vmul.f32 %v1009, 2.0
      %v1576 = vmul.f32 %v1014, 2.0
      %v1577 = vmul.f32 %v1019, 2.0
      %v1578 = vmul.f32 %v1024, 2.0
      %v1579 = vmul.f32 %v1029, 2.0
      %v1580 = vmul.f32 %v1034, 2.0
      %v1581 = vmul.f32 %v1039, 2.0
      %v1582 = vmul.f32 %v1044, 2.0
      %v1583 = vmul.f32 %v1049, 2.0
      %v1584 = vmul.f32 %v1054, 2.0
      %v1585 = vmul.f32 %v1059, 2.0
      %v1586 = vmul.f32 %v1064, 2.0
      %v1587 = vmul.f32 %v1069, 2.0
      %v1588 = vmul.f32 %v1074, 2.0
      %v1589 = vmul.f32 %v1079, 2.0
      %v1590 = vmul.f32 %v1084, 2.0
      %v1591 = vmul.f32 %v1089, 2.0
      %v1592 = vmul.f32 %v1094, 2.0
      %v1593 = vmul.f32 %v1099, 2.0
      %v1594 = vmul.f32 %v1104, 2.0
      %v1595 = vmul.f32 %v1109, 2.0
      %v1596 = vmul.f32 %v1114, 2.0
      %v1597 = vmul.f32 %v1119, 2.0
      %v1598 = vmul.f32 %v1124, 2.0
      %v1599 = vmul.f32 %v1129, 2.0
      %v1600 = vmul.f32 %v1134, 2.0
      %v1601 = vmul.f32 %v1139, 2.0
      %v1602 = vmul.f32 %v1144, 2.0
      %v1603 = vmul.f32 %v1149, 2.0
      %v1604 = vmul.f32 %v1154, 2.0
      %v1605 = vmul.f32 %v1159, 2.0
      %v1606 = vmul.f32 %v1164, 2.0
      %v1607 = vmul.f32 %v1169, 2.0
      %v1608 = vmul.f32 %v1174, 2.0
      %v1609 = vmul.f32 %v1179, 2.0
      %v1610 = vmul.f32 %v1184, 2.0
      %v1611 = vmul.f32 %v1189, 2.0
      %v1612 = vmul.f32 %v1194, 2.0
      %v1613 = vmul.f32 %v1199, 2.0
      %v1614 = vmul.f32 %v1204, 2.0
      %v1615 = vmul.f32 %v1209, 2.0
      %v1616 = vmul.f32 %v1214, 2.0
      %v1617 = vmul.f32 %v1219, 2.0
      %v1618 = vmul.f32 %v1224, 2.0
      %v1619 = vmul.f32 %v1229, 2.0
      %v1620 = vmul.f32 %v1234, 2.0
      %v1621 = vmul.f32 %v1239, 2.0
      %v1622 = vmul.f32 %v1244, 2.0
      %v1623 = vmul.f32 %v1249, 2.0
      %v1624 = vmul.f32 %v1254, 2.0
      %v1625 = vmul.f32 %v1259, 2.0
      %v1626 = vmul.f32 %v1264, 2.0
      %v1627 = vmul.f32 %v1269, 2.0
      %v1628 = vmul.f32 %v1274, 2.0
      %v1629 = vmul.f32 %v1279, 2.0
      %v1630 = vmul.f32 %v1284, 2.0
      %v1631 = vmul.f32 %v1289, 2.0
      %v1632 = vmul.f32 %v1294, 2.0
      %v1633 = vmul.f32 %v1299, 2.0
      %v1634 = vmul.f32 %v1304, 2.0
      %v1635 = vmul.f32 %v1309, 2.0
      %v1636 = vmul.f32 %v1314, 2.0
      %v1637 = vmul.f32 %v1319, 2.0
      %v1638 = vmul.f32 %v1324, 2.0
      %v1639 = vmul.f32 %v1329, 2.0
      %v1640 = vmul.f32 %v1334, 2.0
      %v1641 = vmul.f32 %v1339, 2.0
      %v1642 = vmul.f32 %v1344, 2.0
      %v1643 = vmul.f32 %v1349, 2.0
      %v1644 = vmul.f32 %v1354, 2.0
      %v1645 = vmul.f32 %v1359, 2.0
      %v1646 = vmul.f32 %v1364, 2.0
      %v1647 = vmul.f32 %v1369, 2.0
      %v1648 = vmul.f32 %v1374, 2.0
      %v1649 = vmul.f32 %v1379, 2.0
      %v1650 = vmul.f32 %v1384, 2.0
      %v1651 = vmul.f32 %v1389, 2.0
      %v1652 = vmul.f32 %v1394, 2.0
      %v1653 = vmul.f32 %v1399, 2.0
      %v1654 = vmul.f32 %v1404, 2.0
      %v1655 = vmul.f32 %v1409, 2.0
      %v1656 = vmul.f32 %v1414, 2.0
      %v1657 = vmul.f32 %v1419, 2.0
      %v1658 = vmul.f32 %v1424, 2.0
      %v1659 = vmul.f32 %v1429, 2.0
      %v1660 = vmul.f32 %v1434, 2.0
      %v1661 = vmul.f32 %v1439, 2.0
      %v1662 = vmul.f32 %v1444, 2.0
      %v1663 = vmul.f32 %v1449, 2.0
      %v1664 = vmul.f32 %v1454, 2.0
      %v1665 = vmul.f32 %v1459, 2.0
      %v1666 = vmul.f32 %v1464, 2.0
      %v1667 = vmul.f32 %v1469, 2.0
      %v1668 = vmul.f32 %v1474, 2.0
      %v1669 = vmul.f32 %v1479, 2.0
      %v1670 = vmul.f32 %v1484, 2.0
      %v1671 = vmul.f32 %v1489, 2.0
      %v1672 = vmul.f32 %v1494, 2.0
      %v1673 = vmul.f32 %v1499, 2.0
      %v1674 = vmul.f32 %v1504, 2.0
      %v1675 = vmul.f32 %v1509, 2.0
      %v1676 = vmul.f32 %v1514, 2.0
      %v1677 = vmul.f32 %v1519, 2.0
      %v1678 = vmul.f32 %v1524, 2.0
      %v1679 = vmul.f32 %v1529, 2.0
      %v1680 = vmul.f32 %v1534, 2.0
      %v1681 = vmul.f32 %v1539, 2.0
      %v1682 = vmul.f32 %v1544, 2.0
      %v1683 = vmul.f32 %v1549, 2.0
      %v1684 = vmul.f32 %v1554, 2.0
      %v1686 = vlaneseq
      %v1687 = vshrl.u32 %v1686, 7
      %v1688 = vsub.s32 0, %v1687
      %v1689 = vrot.slane %v290, %v1688
      %v1691 = vsub.f32 %v1689, %v1557
      %v1692 = vsub.f32 %v1689, %v1558
      %v1693 = vsub.f32 %v1689, %v1559
      %v1694 = vsub.f32 %v1689, %v1560
      %v1695 = vsub.f32 %v1689, %v1561
      %v1696 = vsub.f32 %v1689, %v1562
      %v1697 = vsub.f32 %v1689, %v1563
      %v1698 = vsub.f32 %v1689, %v1564
      %v1699 = vsub.f32 %v1689, %v1565
      %v1700 = vsub.f32 %v1689, %v1566
      %v1701 = vsub.f32 %v1689, %v1567
      %v1702 = vsub.f32 %v1689, %v1568
      %v1703 = vsub.f32 %v1689, %v1569
      %v1704 = vsub.f32 %v1689, %v1570
      %v1705 = vsub.f32 %v1689, %v1571
      %v1706 = vsub.f32 %v1689, %v1572
      %v1707 = vsub.f32 %v1689, %v1573
      %v1708 = vsub.f32 %v1689, %v1574
      %v1709 = vsub.f32 %v1689, %v1575
      %v1710 = vsub.f32 %v1689, %v1576
      %v1711 = vsub.f32 %v1689, %v1577
      %v1712 = vsub.f32 %v1689, %v1578
      %v1713 = vsub.f32 %v1689, %v1579
      %v1714 = vsub.f32 %v1689, %v1580
      %v1715 = vsub.f32 %v1689, %v1581
      %v1716 = vsub.f32 %v1689, %v1582
      %v1717 = vsub.f32 %v1689, %v1583
      %v1718 = vsub.f32 %v1689, %v1584
      %v1719 = vsub.f32 %v1689, %v1585
      %v1720 = vsub.f32 %v1689, %v1586
      %v1721 = vsub.f32 %v1689, %v1587
      %v1722 = vsub.f32 %v1689, %v1588
      %v1723 = vsub.f32 %v1689, %v1589
      %v1724 = vsub.f32 %v1689, %v1590
      %v1725 = vsub.f32 %v1689, %v1591
      %v1726 = vsub.f32 %v1689, %v1592
      %v1727 = vsub.f32 %v1689, %v1593
      %v1728 = vsub.f32 %v1689, %v1594
      %v1729 = vsub.f32 %v1689, %v1595
      %v1730 = vsub.f32 %v1689, %v1596
      %v1731 = vsub.f32 %v1689, %v1597
      %v1732 = vsub.f32 %v1689, %v1598
      %v1733 = vsub.f32 %v1689, %v1599
      %v1734 = vsub.f32 %v1689, %v1600
      %v1735 = vsub.f32 %v1689, %v1601
      %v1736 = vsub.f32 %v1689, %v1602
      %v1737 = vsub.f32 %v1689, %v1603
      %v1738 = vsub.f32 %v1689, %v1604
      %v1739 = vsub.f32 %v1689, %v1605
      %v1740 = vsub.f32 %v1689, %v1606
      %v1741 = vsub.f32 %v1689, %v1607
      %v1742 = vsub.f32 %v1689, %v1608
      %v1743 = vsub.f32 %v1689, %v1609
      %v1744 = vsub.f32 %v1689, %v1610
      %v1745 = vsub.f32 %v1689, %v1611
      %v1746 = vsub.f32 %v1689, %v1612
      %v1747 = vsub.f32 %v1689, %v1613
      %v1748 = vsub.f32 %v1689, %v1614
      %v1749 = vsub.f32 %v1689, %v1615
      %v1750 = vsub.f32 %v1689, %v1616
      %v1751 = vsub.f32 %v1689, %v1617
      %v1752 = vsub.f32 %v1689, %v1618
      %v1753 = vsub.f32 %v1689, %v1619
      %v1754 = vsub.f32 %v1689, %v1620
      %v1755 = vsub.f32 %v1689, %v1621
      %v1756 = vsub.f32 %v1689, %v1622
      %v1757 = vsub.f32 %v1689, %v1623
      %v1758 = vsub.f32 %v1689, %v1624
      %v1759 = vsub.f32 %v1689, %v1625
      %v1760 = vsub.f32 %v1689, %v1626
      %v1761 = vsub.f32 %v1689, %v1627
      %v1762 = vsub.f32 %v1689, %v1628
      %v1763 = vsub.f32 %v1689, %v1629
      %v1764 = vsub.f32 %v1689, %v1630
      %v1765 = vsub.f32 %v1689, %v1631
      %v1766 = vsub.f32 %v1689, %v1632
      %v1767 = vsub.f32 %v1689, %v1633
      %v1768 = vsub.f32 %v1689, %v1634
      %v1769 = vsub.f32 %v1689, %v1635
      %v1770 = vsub.f32 %v1689, %v1636
      %v1771 = vsub.f32 %v1689, %v1637
      %v1772 = vsub.f32 %v1689, %v1638
      %v1773 = vsub.f32 %v1689, %v1639
      %v1774 = vsub.f32 %v1689, %v1640
      %v1775 = vsub.f32 %v1689, %v1641
      %v1776 = vsub.f32 %v1689, %v1642
      %v1777 = vsub.f32 %v1689, %v1643
      %v1778 = vsub.f32 %v1689, %v1644
      %v1779 = vsub.f32 %v1689, %v1645
      %v1780 = vsub.f32 %v1689, %v1646
      %v1781 = vsub.f32 %v1689, %v1647
      %v1782 = vsub.f32 %v1689, %v1648
      %v1783 = vsub.f32 %v1689, %v1649
      %v1784 = vsub.f32 %v1689, %v1650
      %v1785 = vsub.f32 %v1689, %v1651
      %v1786 = vsub.f32 %v1689, %v1652
      %v1787 = vsub.f32 %v1689, %v1653
      %v1788 = vsub.f32 %v1689, %v1654
      %v1789 = vsub.f32 %v1689, %v1655
      %v1790 = vsub.f32 %v1689, %v1656
      %v1791 = vsub.f32 %v1689, %v1657
      %v1792 = vsub.f32 %v1689, %v1658
      %v1793 = vsub.f32 %v1689, %v1659
      %v1794 = vsub.f32 %v1689, %v1660
      %v1795 = vsub.f32 %v1689, %v1661
      %v1796 = vsub.f32 %v1689, %v1662
      %v1797 = vsub.f32 %v1689, %v1663
      %v1798 = vsub.f32 %v1689, %v1664
      %v1799 = vsub.f32 %v1689, %v1665
      %v1800 = vsub.f32 %v1689, %v1666
      %v1801 = vsub.f32 %v1689, %v1667
      %v1802 = vsub.f32 %v1689, %v1668
      %v1803 = vsub.f32 %v1689, %v1669
      %v1804 = vsub.f32 %v1689, %v1670
      %v1805 = vsub.f32 %v1689, %v1671
      %v1806 = vsub.f32 %v1689, %v1672
      %v1807 = vsub.f32 %v1689, %v1673
      %v1808 = vsub.f32 %v1689, %v1674
      %v1809 = vsub.f32 %v1689, %v1675
      %v1810 = vsub.f32 %v1689, %v1676
      %v1811 = vsub.f32 %v1689, %v1677
      %v1812 = vsub.f32 %v1689, %v1678
      %v1813 = vsub.f32 %v1689, %v1679
      %v1814 = vsub.f32 %v1689, %v1680
      %v1815 = vsub.f32 %v1689, %v1681
      %v1816 = vsub.f32 %v1689, %v1682
      %v1817 = vsub.f32 %v1689, %v1683
      %v1818 = vsub.f32 %v1689, %v1684
      %v1819 = vlaneseq
      %v1820 = vand.u32 %v1819, 127
      %1821 = vmin.xlane.f32.xlu0 %v1691
      %v1822 = vpop.xlane.xlu0 %1821
      %1823 = vmin.xlane.f32.xlu0 %v1692
      %v1824 = vpop.xlane.xlu0 %1823
      %1825 = vmin.xlane.f32.xlu0 %v1693
      %v1826 = vpop.xlane.xlu0 %1825
      %1827 = vmin.xlane.f32.xlu0 %v1694
      %v1828 = vpop.xlane.xlu0 %1827
      %1829 = vmin.xlane.f32.xlu0 %v1695
      %v1830 = vpop.xlane.xlu0 %1829
      %1831 = vmin.xlane.f32.xlu0 %v1696
      %v1832 = vpop.xlane.xlu0 %1831
      %1833 = vmin.xlane.f32.xlu0 %v1697
      %v1834 = vpop.xlane.xlu0 %1833
      %1835 = vmin.xlane.f32.xlu0 %v1698
      %v1836 = vpop.xlane.xlu0 %1835
      %1837 = vmin.xlane.f32.xlu0 %v1699
      %v1838 = vpop.xlane.xlu0 %1837
      %1839 = vmin.xlane.f32.xlu0 %v1700
      %v1840 = vpop.xlane.xlu0 %1839
      %1841 = vmin.xlane.f32.xlu0 %v1701
      %v1842 = vpop.xlane.xlu0 %1841
      %1843 = vmin.xlane.f32.xlu0 %v1702
      %v1844 = vpop.xlane.xlu0 %1843
      %1845 = vmin.xlane.f32.xlu0 %v1703
      %v1846 = vpop.xlane.xlu0 %1845
      %1847 = vmin.xlane.f32.xlu0 %v1704
      %v1848 = vpop.xlane.xlu0 %1847
      %1849 = vmin.xlane.f32.xlu0 %v1705
      %v1850 = vpop.xlane.xlu0 %1849
      %1851 = vmin.xlane.f32.xlu0 %v1706
      %v1852 = vpop.xlane.xlu0 %1851
      %1853 = vmin.xlane.f32.xlu0 %v1707
      %v1854 = vpop.xlane.xlu0 %1853
      %1855 = vmin.xlane.f32.xlu0 %v1708
      %v1856 = vpop.xlane.xlu0 %1855
      %1857 = vmin.xlane.f32.xlu0 %v1709
      %v1858 = vpop.xlane.xlu0 %1857
      %1859 = vmin.xlane.f32.xlu0 %v1710
      %v1860 = vpop.xlane.xlu0 %1859
      %1861 = vmin.xlane.f32.xlu0 %v1711
      %v1862 = vpop.xlane.xlu0 %1861
      %1863 = vmin.xlane.f32.xlu0 %v1712
      %v1864 = vpop.xlane.xlu0 %1863
      %1865 = vmin.xlane.f32.xlu0 %v1713
      %v1866 = vpop.xlane.xlu0 %1865
      %1867 = vmin.xlane.f32.xlu0 %v1714
      %v1868 = vpop.xlane.xlu0 %1867
      %1869 = vmin.xlane.f32.xlu0 %v1715
      %v1870 = vpop.xlane.xlu0 %1869
      %1871 = vmin.xlane.f32.xlu0 %v1716
      %v1872 = vpop.xlane.xlu0 %1871
      %1873 = vmin.xlane.f32.xlu0 %v1717
      %v1874 = vpop.xlane.xlu0 %1873
      %1875 = vmin.xlane.f32.xlu0 %v1718
      %v1876 = vpop.xlane.xlu0 %1875
      %1877 = vmin.xlane.f32.xlu0 %v1719
      %v1878 = vpop.xlane.xlu0 %1877
      %1879 = vmin.xlane.f32.xlu0 %v1720
      %v1880 = vpop.xlane.xlu0 %1879
      %1881 = vmin.xlane.f32.xlu0 %v1721
      %v1882 = vpop.xlane.xlu0 %1881
      %1883 = vmin.xlane.f32.xlu0 %v1722
      %v1884 = vpop.xlane.xlu0 %1883
      %1885 = vmin.xlane.f32.xlu0 %v1723
      %v1886 = vpop.xlane.xlu0 %1885
      %1887 = vmin.xlane.f32.xlu0 %v1724
      %v1888 = vpop.xlane.xlu0 %1887
      %1889 = vmin.xlane.f32.xlu0 %v1725
      %v1890 = vpop.xlane.xlu0 %1889
      %1891 = vmin.xlane.f32.xlu0 %v1726
      %v1892 = vpop.xlane.xlu0 %1891
      %1893 = vmin.xlane.f32.xlu0 %v1727
      %v1894 = vpop.xlane.xlu0 %1893
      %1895 = vmin.xlane.f32.xlu0 %v1728
      %v1896 = vpop.xlane.xlu0 %1895
      %1897 = vmin.xlane.f32.xlu0 %v1729
      %v1898 = vpop.xlane.xlu0 %1897
      %1899 = vmin.xlane.f32.xlu0 %v1730
      %v1900 = vpop.xlane.xlu0 %1899
      %1901 = vmin.xlane.f32.xlu0 %v1731
      %v1902 = vpop.xlane.xlu0 %1901
      %1903 = vmin.xlane.f32.xlu0 %v1732
      %v1904 = vpop.xlane.xlu0 %1903
      %1905 = vmin.xlane.f32.xlu0 %v1733
      %v1906 = vpop.xlane.xlu0 %1905
      %1907 = vmin.xlane.f32.xlu0 %v1734
      %v1908 = vpop.xlane.xlu0 %1907
      %1909 = vmin.xlane.f32.xlu0 %v1735
      %v1910 = vpop.xlane.xlu0 %1909
      %1911 = vmin.xlane.f32.xlu0 %v1736
      %v1912 = vpop.xlane.xlu0 %1911
      %1913 = vmin.xlane.f32.xlu0 %v1737
      %v1914 = vpop.xlane.xlu0 %1913
      %1915 = vmin.xlane.f32.xlu0 %v1738
      %v1916 = vpop.xlane.xlu0 %1915
      %1917 = vmin.xlane.f32.xlu0 %v1739
      %v1918 = vpop.xlane.xlu0 %1917
      %1919 = vmin.xlane.f32.xlu0 %v1740
      %v1920 = vpop.xlane.xlu0 %1919
      %1921 = vmin.xlane.f32.xlu0 %v1741
      %v1922 = vpop.xlane.xlu0 %1921
      %1923 = vmin.xlane.f32.xlu0 %v1742
      %v1924 = vpop.xlane.xlu0 %1923
      %1925 = vmin.xlane.f32.xlu0 %v1743
      %v1926 = vpop.xlane.xlu0 %1925
      %1927 = vmin.xlane.f32.xlu0 %v1744
      %v1928 = vpop.xlane.xlu0 %1927
      %1929 = vmin.xlane.f32.xlu0 %v1745
      %v1930 = vpop.xlane.xlu0 %1929
      %1931 = vmin.xlane.f32.xlu0 %v1746
      %v1932 = vpop.xlane.xlu0 %1931
      %1933 = vmin.xlane.f32.xlu0 %v1747
      %v1934 = vpop.xlane.xlu0 %1933
      %1935 = vmin.xlane.f32.xlu0 %v1748
      %v1936 = vpop.xlane.xlu0 %1935
      %1937 = vmin.xlane.f32.xlu0 %v1749
      %v1938 = vpop.xlane.xlu0 %1937
      %1939 = vmin.xlane.f32.xlu0 %v1750
      %v1940 = vpop.xlane.xlu0 %1939
      %1941 = vmin.xlane.f32.xlu0 %v1751
      %v1942 = vpop.xlane.xlu0 %1941
      %1943 = vmin.xlane.f32.xlu0 %v1752
      %v1944 = vpop.xlane.xlu0 %1943
      %1945 = vmin.xlane.f32.xlu0 %v1753
      %v1946 = vpop.xlane.xlu0 %1945
      %1947 = vmin.xlane.f32.xlu0 %v1754
      %v1948 = vpop.xlane.xlu0 %1947
      %1949 = vmin.xlane.f32.xlu0 %v1755
      %v1950 = vpop.xlane.xlu0 %1949
      %1951 = vmin.xlane.f32.xlu0 %v1756
      %v1952 = vpop.xlane.xlu0 %1951
      %1953 = vmin.xlane.f32.xlu0 %v1757
      %v1954 = vpop.xlane.xlu0 %1953
      %1955 = vmin.xlane.f32.xlu0 %v1758
      %v1956 = vpop.xlane.xlu0 %1955
      %1957 = vmin.xlane.f32.xlu0 %v1759
      %v1958 = vpop.xlane.xlu0 %1957
      %1959 = vmin.xlane.f32.xlu0 %v1760
      %v1960 = vpop.xlane.xlu0 %1959
      %1961 = vmin.xlane.f32.xlu0 %v1761
      %v1962 = vpop.xlane.xlu0 %1961
      %1963 = vmin.xlane.f32.xlu0 %v1762
      %v1964 = vpop.xlane.xlu0 %1963
      %1965 = vmin.xlane.f32.xlu0 %v1763
      %v1966 = vpop.xlane.xlu0 %1965
      %1967 = vmin.xlane.f32.xlu0 %v1764
      %v1968 = vpop.xlane.xlu0 %1967
      %1969 = vmin.xlane.f32.xlu0 %v1765
      %v1970 = vpop.xlane.xlu0 %1969
      %1971 = vmin.xlane.f32.xlu0 %v1766
      %v1972 = vpop.xlane.xlu0 %1971
      %1973 = vmin.xlane.f32.xlu0 %v1767
      %v1974 = vpop.xlane.xlu0 %1973
      %1975 = vmin.xlane.f32.xlu0 %v1768
      %v1976 = vpop.xlane.xlu0 %1975
      %1977 = vmin.xlane.f32.xlu0 %v1769
      %v1978 = vpop.xlane.xlu0 %1977
      %1979 = vmin.xlane.f32.xlu0 %v1770
      %v1980 = vpop.xlane.xlu0 %1979
      %1981 = vmin.xlane.f32.xlu0 %v1771
      %v1982 = vpop.xlane.xlu0 %1981
      %1983 = vmin.xlane.f32.xlu0 %v1772
      %v1984 = vpop.xlane.xlu0 %1983
      %1985 = vmin.xlane.f32.xlu0 %v1773
      %v1986 = vpop.xlane.xlu0 %1985
      %1987 = vmin.xlane.f32.xlu0 %v1774
      %v1988 = vpop.xlane.xlu0 %1987
      %1989 = vmin.xlane.f32.xlu0 %v1775
      %v1990 = vpop.xlane.xlu0 %1989
      %1991 = vmin.xlane.f32.xlu0 %v1776
      %v1992 = vpop.xlane.xlu0 %1991
      %1993 = vmin.xlane.f32.xlu0 %v1777
      %v1994 = vpop.xlane.xlu0 %1993
      %1995 = vmin.xlane.f32.xlu0 %v1778
      %v1996 = vpop.xlane.xlu0 %1995
      %1997 = vmin.xlane.f32.xlu0 %v1779
      %v1998 = vpop.xlane.xlu0 %1997
      %1999 = vmin.xlane.f32.xlu0 %v1780
      %v2000 = vpop.xlane.xlu0 %1999
      %2001 = vmin.xlane.f32.xlu0 %v1781
      %v2002 = vpop.xlane.xlu0 %2001
      %2003 = vmin.xlane.f32.xlu0 %v1782
      %v2004 = vpop.xlane.xlu0 %2003
      %2005 = vmin.xlane.f32.xlu0 %v1783
      %v2006 = vpop.xlane.xlu0 %2005
      %2007 = vmin.xlane.f32.xlu0 %v1784
      %v2008 = vpop.xlane.xlu0 %2007
      %2009 = vmin.xlane.f32.xlu0 %v1785
      %v2010 = vpop.xlane.xlu0 %2009
      %2011 = vmin.xlane.f32.xlu0 %v1786
      %v2012 = vpop.xlane.xlu0 %2011
      %2013 = vmin.xlane.f32.xlu0 %v1787
      %v2014 = vpop.xlane.xlu0 %2013
      %2015 = vmin.xlane.f32.xlu0 %v1788
      %v2016 = vpop.xlane.xlu0 %2015
      %2017 = vmin.xlane.f32.xlu0 %v1789
      %v2018 = vpop.xlane.xlu0 %2017
      %2019 = vmin.xlane.f32.xlu0 %v1790
      %v2020 = vpop.xlane.xlu0 %2019
      %2021 = vmin.xlane.f32.xlu0 %v1791
      %v2022 = vpop.xlane.xlu0 %2021
      %2023 = vmin.xlane.f32.xlu0 %v1792
      %v2024 = vpop.xlane.xlu0 %2023
      %2025 = vmin.xlane.f32.xlu0 %v1793
      %v2026 = vpop.xlane.xlu0 %2025
      %2027 = vmin.xlane.f32.xlu0 %v1794
      %v2028 = vpop.xlane.xlu0 %2027
      %2029 = vmin.xlane.f32.xlu0 %v1795
      %v2030 = vpop.xlane.xlu0 %2029
      %2031 = vmin.xlane.f32.xlu0 %v1796
      %v2032 = vpop.xlane.xlu0 %2031
      %2033 = vmin.xlane.f32.xlu0 %v1797
      %v2034 = vpop.xlane.xlu0 %2033
      %2035 = vmin.xlane.f32.xlu0 %v1798
      %v2036 = vpop.xlane.xlu0 %2035
      %2037 = vmin.xlane.f32.xlu0 %v1799
      %v2038 = vpop.xlane.xlu0 %2037
      %2039 = vmin.xlane.f32.xlu0 %v1800
      %v2040 = vpop.xlane.xlu0 %2039
      %2041 = vmin.xlane.f32.xlu0 %v1801
      %v2042 = vpop.xlane.xlu0 %2041
      %2043 = vmin.xlane.f32.xlu0 %v1802
      %v2044 = vpop.xlane.xlu0 %2043
      %2045 = vmin.xlane.f32.xlu0 %v1803
      %v2046 = vpop.xlane.xlu0 %2045
      %2047 = vmin.xlane.f32.xlu0 %v1804
      %v2048 = vpop.xlane.xlu0 %2047
      %2049 = vmin.xlane.f32.xlu0 %v1805
      %v2050 = vpop.xlane.xlu0 %2049
      %2051 = vmin.xlane.f32.xlu0 %v1806
      %v2052 = vpop.xlane.xlu0 %2051
      %2053 = vmin.xlane.f32.xlu0 %v1807
      %v2054 = vpop.xlane.xlu0 %2053
      %2055 = vmin.xlane.f32.xlu0 %v1808
      %v2056 = vpop.xlane.xlu0 %2055
      %2057 = vmin.xlane.f32.xlu0 %v1809
      %v2058 = vpop.xlane.xlu0 %2057
      %2059 = vmin.xlane.f32.xlu0 %v1810
      %v2060 = vpop.xlane.xlu0 %2059
      %2061 = vmin.xlane.f32.xlu0 %v1811
      %v2062 = vpop.xlane.xlu0 %2061
      %2063 = vmin.xlane.f32.xlu0 %v1812
      %v2064 = vpop.xlane.xlu0 %2063
      %2065 = vmin.xlane.f32.xlu0 %v1813
      %v2066 = vpop.xlane.xlu0 %2065
      %2067 = vmin.xlane.f32.xlu0 %v1814
      %v2068 = vpop.xlane.xlu0 %2067
      %2069 = vmin.xlane.f32.xlu0 %v1815
      %v2070 = vpop.xlane.xlu0 %2069
      %2071 = vmin.xlane.f32.xlu0 %v1816
      %v2072 = vpop.xlane.xlu0 %2071
      %2073 = vmin.xlane.f32.xlu0 %v1817
      %v2074 = vpop.xlane.xlu0 %2073
      %2075 = vmin.xlane.f32.xlu0 %v1818
      %v2076 = vpop.xlane.xlu0 %2075
      %vm2077 = vcmp.eq.f32.partialorder %v1691, %v1822
      %vm2078 = vcmp.eq.f32.partialorder %v1692, %v1824
      %vm2079 = vcmp.eq.f32.partialorder %v1693, %v1826
      %vm2080 = vcmp.eq.f32.partialorder %v1694, %v1828
      %vm2081 = vcmp.eq.f32.partialorder %v1695, %v1830
      %vm2082 = vcmp.eq.f32.partialorder %v1696, %v1832
      %vm2083 = vcmp.eq.f32.partialorder %v1697, %v1834
      %vm2084 = vcmp.eq.f32.partialorder %v1698, %v1836
      %vm2085 = vcmp.eq.f32.partialorder %v1699, %v1838
      %vm2086 = vcmp.eq.f32.partialorder %v1700, %v1840
      %vm2087 = vcmp.eq.f32.partialorder %v1701, %v1842
      %vm2088 = vcmp.eq.f32.partialorder %v1702, %v1844
      %vm2089 = vcmp.eq.f32.partialorder %v1703, %v1846
      %vm2090 = vcmp.eq.f32.partialorder %v1704, %v1848
      %vm2091 = vcmp.eq.f32.partialorder %v1705, %v1850
      %vm2092 = vcmp.eq.f32.partialorder %v1706, %v1852
      %vm2093 = vcmp.eq.f32.partialorder %v1707, %v1854
      %vm2094 = vcmp.eq.f32.partialorder %v1708, %v1856
      %vm2095 = vcmp.eq.f32.partialorder %v1709, %v1858
      %vm2096 = vcmp.eq.f32.partialorder %v1710, %v1860
      %vm2097 = vcmp.eq.f32.partialorder %v1711, %v1862
      %vm2098 = vcmp.eq.f32.partialorder %v1712, %v1864
      %vm2099 = vcmp.eq.f32.partialorder %v1713, %v1866
      %vm2100 = vcmp.eq.f32.partialorder %v1714, %v1868
      %vm2101 = vcmp.eq.f32.partialorder %v1715, %v1870
      %vm2102 = vcmp.eq.f32.partialorder %v1716, %v1872
      %vm2103 = vcmp.eq.f32.partialorder %v1717, %v1874
      %vm2104 = vcmp.eq.f32.partialorder %v1718, %v1876
      %vm2105 = vcmp.eq.f32.partialorder %v1719, %v1878
      %vm2106 = vcmp.eq.f32.partialorder %v1720, %v1880
      %vm2107 = vcmp.eq.f32.partialorder %v1721, %v1882
      %vm2108 = vcmp.eq.f32.partialorder %v1722, %v1884
      %vm2109 = vcmp.eq.f32.partialorder %v1723, %v1886
      %vm2110 = vcmp.eq.f32.partialorder %v1724, %v1888
      %vm2111 = vcmp.eq.f32.partialorder %v1725, %v1890
      %vm2112 = vcmp.eq.f32.partialorder %v1726, %v1892
      %vm2113 = vcmp.eq.f32.partialorder %v1727, %v1894
      %vm2114 = vcmp.eq.f32.partialorder %v1728, %v1896
      %vm2115 = vcmp.eq.f32.partialorder %v1729, %v1898
      %vm2116 = vcmp.eq.f32.partialorder %v1730, %v1900
      %vm2117 = vcmp.eq.f32.partialorder %v1731, %v1902
      %vm2118 = vcmp.eq.f32.partialorder %v1732, %v1904
      %vm2119 = vcmp.eq.f32.partialorder %v1733, %v1906
      %vm2120 = vcmp.eq.f32.partialorder %v1734, %v1908
      %vm2121 = vcmp.eq.f32.partialorder %v1735, %v1910
      %vm2122 = vcmp.eq.f32.partialorder %v1736, %v1912
      %vm2123 = vcmp.eq.f32.partialorder %v1737, %v1914
      %vm2124 = vcmp.eq.f32.partialorder %v1738, %v1916
      %vm2125 = vcmp.eq.f32.partialorder %v1739, %v1918
      %vm2126 = vcmp.eq.f32.partialorder %v1740, %v1920
      %vm2127 = vcmp.eq.f32.partialorder %v1741, %v1922
      %vm2128 = vcmp.eq.f32.partialorder %v1742, %v1924
      %vm2129 = vcmp.eq.f32.partialorder %v1743, %v1926
      %vm2130 = vcmp.eq.f32.partialorder %v1744, %v1928
      %vm2131 = vcmp.eq.f32.partialorder %v1745, %v1930
      %vm2132 = vcmp.eq.f32.partialorder %v1746, %v1932
      %vm2133 = vcmp.eq.f32.partialorder %v1747, %v1934
      %vm2134 = vcmp.eq.f32.partialorder %v1748, %v1936
      %vm2135 = vcmp.eq.f32.partialorder %v1749, %v1938
      %vm2136 = vcmp.eq.f32.partialorder %v1750, %v1940
      %vm2137 = vcmp.eq.f32.partialorder %v1751, %v1942
      %vm2138 = vcmp.eq.f32.partialorder %v1752, %v1944
      %vm2139 = vcmp.eq.f32.partialorder %v1753, %v1946
      %vm2140 = vcmp.eq.f32.partialorder %v1754, %v1948
      %vm2141 = vcmp.eq.f32.partialorder %v1755, %v1950
      %vm2142 = vcmp.eq.f32.partialorder %v1756, %v1952
      %vm2143 = vcmp.eq.f32.partialorder %v1757, %v1954
      %vm2144 = vcmp.eq.f32.partialorder %v1758, %v1956
      %vm2145 = vcmp.eq.f32.partialorder %v1759, %v1958
      %vm2146 = vcmp.eq.f32.partialorder %v1760, %v1960
      %vm2147 = vcmp.eq.f32.partialorder %v1761, %v1962
      %vm2148 = vcmp.eq.f32.partialorder %v1762, %v1964
      %vm2149 = vcmp.eq.f32.partialorder %v1763, %v1966
      %vm2150 = vcmp.eq.f32.partialorder %v1764, %v1968
      %vm2151 = vcmp.eq.f32.partialorder %v1765, %v1970
      %vm2152 = vcmp.eq.f32.partialorder %v1766, %v1972
      %vm2153 = vcmp.eq.f32.partialorder %v1767, %v1974
      %vm2154 = vcmp.eq.f32.partialorder %v1768, %v1976
      %vm2155 = vcmp.eq.f32.partialorder %v1769, %v1978
      %vm2156 = vcmp.eq.f32.partialorder %v1770, %v1980
      %vm2157 = vcmp.eq.f32.partialorder %v1771, %v1982
      %vm2158 = vcmp.eq.f32.partialorder %v1772, %v1984
      %vm2159 = vcmp.eq.f32.partialorder %v1773, %v1986
      %vm2160 = vcmp.eq.f32.partialorder %v1774, %v1988
      %vm2161 = vcmp.eq.f32.partialorder %v1775, %v1990
      %vm2162 = vcmp.eq.f32.partialorder %v1776, %v1992
      %vm2163 = vcmp.eq.f32.partialorder %v1777, %v1994
      %vm2164 = vcmp.eq.f32.partialorder %v1778, %v1996
      %vm2165 = vcmp.eq.f32.partialorder %v1779, %v1998
      %vm2166 = vcmp.eq.f32.partialorder %v1780, %v2000
      %vm2167 = vcmp.eq.f32.partialorder %v1781, %v2002
      %vm2168 = vcmp.eq.f32.partialorder %v1782, %v2004
      %vm2169 = vcmp.eq.f32.partialorder %v1783, %v2006
      %vm2170 = vcmp.eq.f32.partialorder %v1784, %v2008
      %vm2171 = vcmp.eq.f32.partialorder %v1785, %v2010
      %vm2172 = vcmp.eq.f32.partialorder %v1786, %v2012
      %vm2173 = vcmp.eq.f32.partialorder %v1787, %v2014
      %vm2174 = vcmp.eq.f32.partialorder %v1788, %v2016
      %vm2175 = vcmp.eq.f32.partialorder %v1789, %v2018
      %vm2176 = vcmp.eq.f32.partialorder %v1790, %v2020
      %vm2177 = vcmp.eq.f32.partialorder %v1791, %v2022
      %vm2178 = vcmp.eq.f32.partialorder %v1792, %v2024
      %vm2179 = vcmp.eq.f32.partialorder %v1793, %v2026
      %vm2180 = vcmp.eq.f32.partialorder %v1794, %v2028
      %vm2181 = vcmp.eq.f32.partialorder %v1795, %v2030
      %vm2182 = vcmp.eq.f32.partialorder %v1796, %v2032
      %vm2183 = vcmp.eq.f32.partialorder %v1797, %v2034
      %vm2184 = vcmp.eq.f32.partialorder %v1798, %v2036
      %vm2185 = vcmp.eq.f32.partialorder %v1799, %v2038
      %vm2186 = vcmp.eq.f32.partialorder %v1800, %v2040
      %vm2187 = vcmp.eq.f32.partialorder %v1801, %v2042
      %vm2188 = vcmp.eq.f32.partialorder %v1802, %v2044
      %vm2189 = vcmp.eq.f32.partialorder %v1803, %v2046
      %vm2190 = vcmp.eq.f32.partialorder %v1804, %v2048
      %vm2191 = vcmp.eq.f32.partialorder %v1805, %v2050
      %vm2192 = vcmp.eq.f32.partialorder %v1806, %v2052
      %vm2193 = vcmp.eq.f32.partialorder %v1807, %v2054
      %vm2194 = vcmp.eq.f32.partialorder %v1808, %v2056
      %vm2195 = vcmp.eq.f32.partialorder %v1809, %v2058
      %vm2196 = vcmp.eq.f32.partialorder %v1810, %v2060
      %vm2197 = vcmp.eq.f32.partialorder %v1811, %v2062
      %vm2198 = vcmp.eq.f32.partialorder %v1812, %v2064
      %vm2199 = vcmp.eq.f32.partialorder %v1813, %v2066
      %vm2200 = vcmp.eq.f32.partialorder %v1814, %v2068
      %vm2201 = vcmp.eq.f32.partialorder %v1815, %v2070
      %vm2202 = vcmp.eq.f32.partialorder %v1816, %v2072
      %vm2203 = vcmp.eq.f32.partialorder %v1817, %v2074
      %vm2204 = vcmp.eq.f32.partialorder %v1818, %v2076
      %v2205 = vsel %vm2077, %v1820, 128
      %v2206 = vsel %vm2078, %v1820, 128
      %v2207 = vsel %vm2079, %v1820, 128
      %v2208 = vsel %vm2080, %v1820, 128
      %v2209 = vsel %vm2081, %v1820, 128
      %v2210 = vsel %vm2082, %v1820, 128
      %v2211 = vsel %vm2083, %v1820, 128
      %v2212 = vsel %vm2084, %v1820, 128
      %v2213 = vsel %vm2085, %v1820, 128
      %v2214 = vsel %vm2086, %v1820, 128
      %v2215 = vsel %vm2087, %v1820, 128
      %v2216 = vsel %vm2088, %v1820, 128
      %v2217 = vsel %vm2089, %v1820, 128
      %v2218 = vsel %vm2090, %v1820, 128
      %v2219 = vsel %vm2091, %v1820, 128
      %v2220 = vsel %vm2092, %v1820, 128
      %v2221 = vsel %vm2093, %v1820, 128
      %v2222 = vsel %vm2094, %v1820, 128
      %v2223 = vsel %vm2095, %v1820, 128
      %v2224 = vsel %vm2096, %v1820, 128
      %v2225 = vsel %vm2097, %v1820, 128
      %v2226 = vsel %vm2098, %v1820, 128
      %v2227 = vsel %vm2099, %v1820, 128
      %v2228 = vsel %vm2100, %v1820, 128
      %v2229 = vsel %vm2101, %v1820, 128
      %v2230 = vsel %vm2102, %v1820, 128
      %v2231 = vsel %vm2103, %v1820, 128
      %v2232 = vsel %vm2104, %v1820, 128
      %v2233 = vsel %vm2105, %v1820, 128
      %v2234 = vsel %vm2106, %v1820, 128
      %v2235 = vsel %vm2107, %v1820, 128
      %v2236 = vsel %vm2108, %v1820, 128
      %v2237 = vsel %vm2109, %v1820, 128
      %v2238 = vsel %vm2110, %v1820, 128
      %v2239 = vsel %vm2111, %v1820, 128
      %v2240 = vsel %vm2112, %v1820, 128
      %v2241 = vsel %vm2113, %v1820, 128
      %v2242 = vsel %vm2114, %v1820, 128
      %v2243 = vsel %vm2115, %v1820, 128
      %v2244 = vsel %vm2116, %v1820, 128
      %v2245 = vsel %vm2117, %v1820, 128
      %v2246 = vsel %vm2118, %v1820, 128
      %v2247 = vsel %vm2119, %v1820, 128
      %v2248 = vsel %vm2120, %v1820, 128
      %v2249 = vsel %vm2121, %v1820, 128
      %v2250 = vsel %vm2122, %v1820, 128
      %v2251 = vsel %vm2123, %v1820, 128
      %v2252 = vsel %vm2124, %v1820, 128
      %v2253 = vsel %vm2125, %v1820, 128
      %v2254 = vsel %vm2126, %v1820, 128
      %v2255 = vsel %vm2127, %v1820, 128
      %v2256 = vsel %vm2128, %v1820, 128
      %v2257 = vsel %vm2129, %v1820, 128
      %v2258 = vsel %vm2130, %v1820, 128
      %v2259 = vsel %vm2131, %v1820, 128
      %v2260 = vsel %vm2132, %v1820, 128
      %v2261 = vsel %vm2133, %v1820, 128
      %v2262 = vsel %vm2134, %v1820, 128
      %v2263 = vsel %vm2135, %v1820, 128
      %v2264 = vsel %vm2136, %v1820, 128
      %v2265 = vsel %vm2137, %v1820, 128
      %v2266 = vsel %vm2138, %v1820, 128
      %v2267 = vsel %vm2139, %v1820, 128
      %v2268 = vsel %vm2140, %v1820, 128
      %v2269 = vsel %vm2141, %v1820, 128
      %v2270 = vsel %vm2142, %v1820, 128
      %v2271 = vsel %vm2143, %v1820, 128
      %v2272 = vsel %vm2144, %v1820, 128
      %v2273 = vsel %vm2145, %v1820, 128
      %v2274 = vsel %vm2146, %v1820, 128
      %v2275 = vsel %vm2147, %v1820, 128
      %v2276 = vsel %vm2148, %v1820, 128
      %v2277 = vsel %vm2149, %v1820, 128
      %v2278 = vsel %vm2150, %v1820, 128
      %v2279 = vsel %vm2151, %v1820, 128
      %v2280 = vsel %vm2152, %v1820, 128
      %v2281 = vsel %vm2153, %v1820, 128
      %v2282 = vsel %vm2154, %v1820, 128
      %v2283 = vsel %vm2155, %v1820, 128
      %v2284 = vsel %vm2156, %v1820, 128
      %v2285 = vsel %vm2157, %v1820, 128
      %v2286 = vsel %vm2158, %v1820, 128
      %v2287 = vsel %vm2159, %v1820, 128
      %v2288 = vsel %vm2160, %v1820, 128
      %v2289 = vsel %vm2161, %v1820, 128
      %v2290 = vsel %vm2162, %v1820, 128
      %v2291 = vsel %vm2163, %v1820, 128
      %v2292 = vsel %vm2164, %v1820, 128
      %v2293 = vsel %vm2165, %v1820, 128
      %v2294 = vsel %vm2166, %v1820, 128
      %v2295 = vsel %vm2167, %v1820, 128
      %v2296 = vsel %vm2168, %v1820, 128
      %v2297 = vsel %vm2169, %v1820, 128
      %v2298 = vsel %vm2170, %v1820, 128
      %v2299 = vsel %vm2171, %v1820, 128
      %v2300 = vsel %vm2172, %v1820, 128
      %v2301 = vsel %vm2173, %v1820, 128
      %v2302 = vsel %vm2174, %v1820, 128
      %v2303 = vsel %vm2175, %v1820, 128
      %v2304 = vsel %vm2176, %v1820, 128
      %v2305 = vsel %vm2177, %v1820, 128
      %v2306 = vsel %vm2178, %v1820, 128
      %v2307 = vsel %vm2179, %v1820, 128
      %v2308 = vsel %vm2180, %v1820, 128
      %v2309 = vsel %vm2181, %v1820, 128
      %v2310 = vsel %vm2182, %v1820, 128
      %v2311 = vsel %vm2183, %v1820, 128
      %v2312 = vsel %vm2184, %v1820, 128
      %v2313 = vsel %vm2185, %v1820, 128
      %v2314 = vsel %vm2186, %v1820, 128
      %v2315 = vsel %vm2187, %v1820, 128
      %v2316 = vsel %vm2188, %v1820, 128
      %v2317 = vsel %vm2189, %v1820, 128
      %v2318 = vsel %vm2190, %v1820, 128
      %v2319 = vsel %vm2191, %v1820, 128
      %v2320 = vsel %vm2192, %v1820, 128
      %v2321 = vsel %vm2193, %v1820, 128
      %v2322 = vsel %vm2194, %v1820, 128
      %v2323 = vsel %vm2195, %v1820, 128
      %v2324 = vsel %vm2196, %v1820, 128
      %v2325 = vsel %vm2197, %v1820, 128
      %v2326 = vsel %vm2198, %v1820, 128
      %v2327 = vsel %vm2199, %v1820, 128
      %v2328 = vsel %vm2200, %v1820, 128
      %v2329 = vsel %vm2201, %v1820, 128
      %v2330 = vsel %vm2202, %v1820, 128
      %v2331 = vsel %vm2203, %v1820, 128
      %v2332 = vsel %vm2204, %v1820, 128
      %v2333 = vand.u32 %v2205, 65535
      %v2334 = vshra.s32 %v2205, 16
      %v2335 = vcvt.s32.f32 %v2333
      %v2336 = vcvt.s32.f32 %v2334
      %2337 = vmin.xlane.f32.xlu0 %v2336
      %v2338 = vpop.xlane.xlu0 %2337
      %vm2339 = vcmp.eq.f32.partialorder %v2336, %v2338
      %v2340 = vsel %vm2339, %v2335, inf
      %2341 = vmin.xlane.f32.xlu0 %v2340
      %v2342 = vpop.xlane.xlu0 %2341
      %v2343 = vcvt.f32.s32 %v2342
      %v2344 = vcvt.f32.s32 %v2338
      %v2345 = vshll.u32 %v2344, 16
      %v2346 = vadd.s32 %v2345, %v2343
      %v2347 = vand.u32 %v2206, 65535
      %v2348 = vshra.s32 %v2206, 16
      %v2349 = vcvt.s32.f32 %v2347
      %v2350 = vcvt.s32.f32 %v2348
      %2351 = vmin.xlane.f32.xlu0 %v2350
      %v2352 = vpop.xlane.xlu0 %2351
      %vm2353 = vcmp.eq.f32.partialorder %v2350, %v2352
      %v2354 = vsel %vm2353, %v2349, inf
      %2355 = vmin.xlane.f32.xlu0 %v2354
      %v2356 = vpop.xlane.xlu0 %2355
      %v2357 = vcvt.f32.s32 %v2356
      %v2358 = vcvt.f32.s32 %v2352
      %v2359 = vshll.u32 %v2358, 16
      %v2360 = vadd.s32 %v2359, %v2357
      %v2361 = vand.u32 %v2207, 65535
      %v2362 = vshra.s32 %v2207, 16
      %v2363 = vcvt.s32.f32 %v2361
      %v2364 = vcvt.s32.f32 %v2362
      %2365 = vmin.xlane.f32.xlu0 %v2364
      %v2366 = vpop.xlane.xlu0 %2365
      %vm2367 = vcmp.eq.f32.partialorder %v2364, %v2366
      %v2368 = vsel %vm2367, %v2363, inf
      %2369 = vmin.xlane.f32.xlu0 %v2368
      %v2370 = vpop.xlane.xlu0 %2369
      %v2371 = vcvt.f32.s32 %v2370
      %v2372 = vcvt.f32.s32 %v2366
      %v2373 = vshll.u32 %v2372, 16
      %v2374 = vadd.s32 %v2373, %v2371
      %v2375 = vand.u32 %v2208, 65535
      %v2376 = vshra.s32 %v2208, 16
      %v2377 = vcvt.s32.f32 %v2375
      %v2378 = vcvt.s32.f32 %v2376
      %2379 = vmin.xlane.f32.xlu0 %v2378
      %v2380 = vpop.xlane.xlu0 %2379
      %vm2381 = vcmp.eq.f32.partialorder %v2378, %v2380
      %v2382 = vsel %vm2381, %v2377, inf
      %2383 = vmin.xlane.f32.xlu0 %v2382
      %v2384 = vpop.xlane.xlu0 %2383
      %v2385 = vcvt.f32.s32 %v2384
      %v2386 = vcvt.f32.s32 %v2380
      %v2387 = vshll.u32 %v2386, 16
      %v2388 = vadd.s32 %v2387, %v2385
      %v2389 = vand.u32 %v2209, 65535
      %v2390 = vshra.s32 %v2209, 16
      %v2391 = vcvt.s32.f32 %v2389
      %v2392 = vcvt.s32.f32 %v2390
      %2393 = vmin.xlane.f32.xlu0 %v2392
      %v2394 = vpop.xlane.xlu0 %2393
      %vm2395 = vcmp.eq.f32.partialorder %v2392, %v2394
      %v2396 = vsel %vm2395, %v2391, inf
      %2397 = vmin.xlane.f32.xlu0 %v2396
      %v2398 = vpop.xlane.xlu0 %2397
      %v2399 = vcvt.f32.s32 %v2398
      %v2400 = vcvt.f32.s32 %v2394
      %v2401 = vshll.u32 %v2400, 16
      %v2402 = vadd.s32 %v2401, %v2399
      %v2403 = vand.u32 %v2210, 65535
      %v2404 = vshra.s32 %v2210, 16
      %v2405 = vcvt.s32.f32 %v2403
      %v2406 = vcvt.s32.f32 %v2404
      %2407 = vmin.xlane.f32.xlu0 %v2406
      %v2408 = vpop.xlane.xlu0 %2407
      %vm2409 = vcmp.eq.f32.partialorder %v2406, %v2408
      %v2410 = vsel %vm2409, %v2405, inf
      %2411 = vmin.xlane.f32.xlu0 %v2410
      %v2412 = vpop.xlane.xlu0 %2411
      %v2413 = vcvt.f32.s32 %v2412
      %v2414 = vcvt.f32.s32 %v2408
      %v2415 = vshll.u32 %v2414, 16
      %v2416 = vadd.s32 %v2415, %v2413
      %v2417 = vand.u32 %v2211, 65535
      %v2418 = vshra.s32 %v2211, 16
      %v2419 = vcvt.s32.f32 %v2417
      %v2420 = vcvt.s32.f32 %v2418
      %2421 = vmin.xlane.f32.xlu0 %v2420
      %v2422 = vpop.xlane.xlu0 %2421
      %vm2423 = vcmp.eq.f32.partialorder %v2420, %v2422
      %v2424 = vsel %vm2423, %v2419, inf
      %2425 = vmin.xlane.f32.xlu0 %v2424
      %v2426 = vpop.xlane.xlu0 %2425
      %v2427 = vcvt.f32.s32 %v2426
      %v2428 = vcvt.f32.s32 %v2422
      %v2429 = vshll.u32 %v2428, 16
      %v2430 = vadd.s32 %v2429, %v2427
      %v2431 = vand.u32 %v2212, 65535
      %v2432 = vshra.s32 %v2212, 16
      %v2433 = vcvt.s32.f32 %v2431
      %v2434 = vcvt.s32.f32 %v2432
      %2435 = vmin.xlane.f32.xlu0 %v2434
      %v2436 = vpop.xlane.xlu0 %2435
      %vm2437 = vcmp.eq.f32.partialorder %v2434, %v2436
      %v2438 = vsel %vm2437, %v2433, inf
      %2439 = vmin.xlane.f32.xlu0 %v2438
      %v2440 = vpop.xlane.xlu0 %2439
      %v2441 = vcvt.f32.s32 %v2440
      %v2442 = vcvt.f32.s32 %v2436
      %v2443 = vshll.u32 %v2442, 16
      %v2444 = vadd.s32 %v2443, %v2441
      %v2445 = vand.u32 %v2213, 65535
      %v2446 = vshra.s32 %v2213, 16
      %v2447 = vcvt.s32.f32 %v2445
      %v2448 = vcvt.s32.f32 %v2446
      %2449 = vmin.xlane.f32.xlu0 %v2448
      %v2450 = vpop.xlane.xlu0 %2449
      %vm2451 = vcmp.eq.f32.partialorder %v2448, %v2450
      %v2452 = vsel %vm2451, %v2447, inf
      %2453 = vmin.xlane.f32.xlu0 %v2452
      %v2454 = vpop.xlane.xlu0 %2453
      %v2455 = vcvt.f32.s32 %v2454
      %v2456 = vcvt.f32.s32 %v2450
      %v2457 = vshll.u32 %v2456, 16
      %v2458 = vadd.s32 %v2457, %v2455
      %v2459 = vand.u32 %v2214, 65535
      %v2460 = vshra.s32 %v2214, 16
      %v2461 = vcvt.s32.f32 %v2459
      %v2462 = vcvt.s32.f32 %v2460
      %2463 = vmin.xlane.f32.xlu0 %v2462
      %v2464 = vpop.xlane.xlu0 %2463
      %vm2465 = vcmp.eq.f32.partialorder %v2462, %v2464
      %v2466 = vsel %vm2465, %v2461, inf
      %2467 = vmin.xlane.f32.xlu0 %v2466
      %v2468 = vpop.xlane.xlu0 %2467
      %v2469 = vcvt.f32.s32 %v2468
      %v2470 = vcvt.f32.s32 %v2464
      %v2471 = vshll.u32 %v2470, 16
      %v2472 = vadd.s32 %v2471, %v2469
      %v2473 = vand.u32 %v2215, 65535
      %v2474 = vshra.s32 %v2215, 16
      %v2475 = vcvt.s32.f32 %v2473
      %v2476 = vcvt.s32.f32 %v2474
      %2477 = vmin.xlane.f32.xlu0 %v2476
      %v2478 = vpop.xlane.xlu0 %2477
      %vm2479 = vcmp.eq.f32.partialorder %v2476, %v2478
      %v2480 = vsel %vm2479, %v2475, inf
      %2481 = vmin.xlane.f32.xlu0 %v2480
      %v2482 = vpop.xlane.xlu0 %2481
      %v2483 = vcvt.f32.s32 %v2482
      %v2484 = vcvt.f32.s32 %v2478
      %v2485 = vshll.u32 %v2484, 16
      %v2486 = vadd.s32 %v2485, %v2483
      %v2487 = vand.u32 %v2216, 65535
      %v2488 = vshra.s32 %v2216, 16
      %v2489 = vcvt.s32.f32 %v2487
      %v2490 = vcvt.s32.f32 %v2488
      %2491 = vmin.xlane.f32.xlu0 %v2490
      %v2492 = vpop.xlane.xlu0 %2491
      %vm2493 = vcmp.eq.f32.partialorder %v2490, %v2492
      %v2494 = vsel %vm2493, %v2489, inf
      %2495 = vmin.xlane.f32.xlu0 %v2494
      %v2496 = vpop.xlane.xlu0 %2495
      %v2497 = vcvt.f32.s32 %v2496
      %v2498 = vcvt.f32.s32 %v2492
      %v2499 = vshll.u32 %v2498, 16
      %v2500 = vadd.s32 %v2499, %v2497
      %v2501 = vand.u32 %v2217, 65535
      %v2502 = vshra.s32 %v2217, 16
      %v2503 = vcvt.s32.f32 %v2501
      %v2504 = vcvt.s32.f32 %v2502
      %2505 = vmin.xlane.f32.xlu0 %v2504
      %v2506 = vpop.xlane.xlu0 %2505
      %vm2507 = vcmp.eq.f32.partialorder %v2504, %v2506
      %v2508 = vsel %vm2507, %v2503, inf
      %2509 = vmin.xlane.f32.xlu0 %v2508
      %v2510 = vpop.xlane.xlu0 %2509
      %v2511 = vcvt.f32.s32 %v2510
      %v2512 = vcvt.f32.s32 %v2506
      %v2513 = vshll.u32 %v2512, 16
      %v2514 = vadd.s32 %v2513, %v2511
      %v2515 = vand.u32 %v2218, 65535
      %v2516 = vshra.s32 %v2218, 16
      %v2517 = vcvt.s32.f32 %v2515
      %v2518 = vcvt.s32.f32 %v2516
      %2519 = vmin.xlane.f32.xlu0 %v2518
      %v2520 = vpop.xlane.xlu0 %2519
      %vm2521 = vcmp.eq.f32.partialorder %v2518, %v2520
      %v2522 = vsel %vm2521, %v2517, inf
      %2523 = vmin.xlane.f32.xlu0 %v2522
      %v2524 = vpop.xlane.xlu0 %2523
      %v2525 = vcvt.f32.s32 %v2524
      %v2526 = vcvt.f32.s32 %v2520
      %v2527 = vshll.u32 %v2526, 16
      %v2528 = vadd.s32 %v2527, %v2525
      %v2529 = vand.u32 %v2219, 65535
      %v2530 = vshra.s32 %v2219, 16
      %v2531 = vcvt.s32.f32 %v2529
      %v2532 = vcvt.s32.f32 %v2530
      %2533 = vmin.xlane.f32.xlu0 %v2532
      %v2534 = vpop.xlane.xlu0 %2533
      %vm2535 = vcmp.eq.f32.partialorder %v2532, %v2534
      %v2536 = vsel %vm2535, %v2531, inf
      %2537 = vmin.xlane.f32.xlu0 %v2536
      %v2538 = vpop.xlane.xlu0 %2537
      %v2539 = vcvt.f32.s32 %v2538
      %v2540 = vcvt.f32.s32 %v2534
      %v2541 = vshll.u32 %v2540, 16
      %v2542 = vadd.s32 %v2541, %v2539
      %v2543 = vand.u32 %v2220, 65535
      %v2544 = vshra.s32 %v2220, 16
      %v2545 = vcvt.s32.f32 %v2543
      %v2546 = vcvt.s32.f32 %v2544
      %2547 = vmin.xlane.f32.xlu0 %v2546
      %v2548 = vpop.xlane.xlu0 %2547
      %vm2549 = vcmp.eq.f32.partialorder %v2546, %v2548
      %v2550 = vsel %vm2549, %v2545, inf
      %2551 = vmin.xlane.f32.xlu0 %v2550
      %v2552 = vpop.xlane.xlu0 %2551
      %v2553 = vcvt.f32.s32 %v2552
      %v2554 = vcvt.f32.s32 %v2548
      %v2555 = vshll.u32 %v2554, 16
      %v2556 = vadd.s32 %v2555, %v2553
      %v2557 = vand.u32 %v2221, 65535
      %v2558 = vshra.s32 %v2221, 16
      %v2559 = vcvt.s32.f32 %v2557
      %v2560 = vcvt.s32.f32 %v2558
      %2561 = vmin.xlane.f32.xlu0 %v2560
      %v2562 = vpop.xlane.xlu0 %2561
      %vm2563 = vcmp.eq.f32.partialorder %v2560, %v2562
      %v2564 = vsel %vm2563, %v2559, inf
      %2565 = vmin.xlane.f32.xlu0 %v2564
      %v2566 = vpop.xlane.xlu0 %2565
      %v2567 = vcvt.f32.s32 %v2566
      %v2568 = vcvt.f32.s32 %v2562
      %v2569 = vshll.u32 %v2568, 16
      %v2570 = vadd.s32 %v2569, %v2567
      %v2571 = vand.u32 %v2222, 65535
      %v2572 = vshra.s32 %v2222, 16
      %v2573 = vcvt.s32.f32 %v2571
      %v2574 = vcvt.s32.f32 %v2572
      %2575 = vmin.xlane.f32.xlu0 %v2574
      %v2576 = vpop.xlane.xlu0 %2575
      %vm2577 = vcmp.eq.f32.partialorder %v2574, %v2576
      %v2578 = vsel %vm2577, %v2573, inf
      %2579 = vmin.xlane.f32.xlu0 %v2578
      %v2580 = vpop.xlane.xlu0 %2579
      %v2581 = vcvt.f32.s32 %v2580
      %v2582 = vcvt.f32.s32 %v2576
      %v2583 = vshll.u32 %v2582, 16
      %v2584 = vadd.s32 %v2583, %v2581
      %v2585 = vand.u32 %v2223, 65535
      %v2586 = vshra.s32 %v2223, 16
      %v2587 = vcvt.s32.f32 %v2585
      %v2588 = vcvt.s32.f32 %v2586
      %2589 = vmin.xlane.f32.xlu0 %v2588
      %v2590 = vpop.xlane.xlu0 %2589
      %vm2591 = vcmp.eq.f32.partialorder %v2588, %v2590
      %v2592 = vsel %vm2591, %v2587, inf
      %2593 = vmin.xlane.f32.xlu0 %v2592
      %v2594 = vpop.xlane.xlu0 %2593
      %v2595 = vcvt.f32.s32 %v2594
      %v2596 = vcvt.f32.s32 %v2590
      %v2597 = vshll.u32 %v2596, 16
      %v2598 = vadd.s32 %v2597, %v2595
      %v2599 = vand.u32 %v2224, 65535
      %v2600 = vshra.s32 %v2224, 16
      %v2601 = vcvt.s32.f32 %v2599
      %v2602 = vcvt.s32.f32 %v2600
      %2603 = vmin.xlane.f32.xlu0 %v2602
      %v2604 = vpop.xlane.xlu0 %2603
      %vm2605 = vcmp.eq.f32.partialorder %v2602, %v2604
      %v2606 = vsel %vm2605, %v2601, inf
      %2607 = vmin.xlane.f32.xlu0 %v2606
      %v2608 = vpop.xlane.xlu0 %2607
      %v2609 = vcvt.f32.s32 %v2608
      %v2610 = vcvt.f32.s32 %v2604
      %v2611 = vshll.u32 %v2610, 16
      %v2612 = vadd.s32 %v2611, %v2609
      %v2613 = vand.u32 %v2225, 65535
      %v2614 = vshra.s32 %v2225, 16
      %v2615 = vcvt.s32.f32 %v2613
      %v2616 = vcvt.s32.f32 %v2614
      %2617 = vmin.xlane.f32.xlu0 %v2616
      %v2618 = vpop.xlane.xlu0 %2617
      %vm2619 = vcmp.eq.f32.partialorder %v2616, %v2618
      %v2620 = vsel %vm2619, %v2615, inf
      %2621 = vmin.xlane.f32.xlu0 %v2620
      %v2622 = vpop.xlane.xlu0 %2621
      %v2623 = vcvt.f32.s32 %v2622
      %v2624 = vcvt.f32.s32 %v2618
      %v2625 = vshll.u32 %v2624, 16
      %v2626 = vadd.s32 %v2625, %v2623
      %v2627 = vand.u32 %v2226, 65535
      %v2628 = vshra.s32 %v2226, 16
      %v2629 = vcvt.s32.f32 %v2627
      %v2630 = vcvt.s32.f32 %v2628
      %2631 = vmin.xlane.f32.xlu0 %v2630
      %v2632 = vpop.xlane.xlu0 %2631
      %vm2633 = vcmp.eq.f32.partialorder %v2630, %v2632
      %v2634 = vsel %vm2633, %v2629, inf
      %2635 = vmin.xlane.f32.xlu0 %v2634
      %v2636 = vpop.xlane.xlu0 %2635
      %v2637 = vcvt.f32.s32 %v2636
      %v2638 = vcvt.f32.s32 %v2632
      %v2639 = vshll.u32 %v2638, 16
      %v2640 = vadd.s32 %v2639, %v2637
      %v2641 = vand.u32 %v2227, 65535
      %v2642 = vshra.s32 %v2227, 16
      %v2643 = vcvt.s32.f32 %v2641
      %v2644 = vcvt.s32.f32 %v2642
      %2645 = vmin.xlane.f32.xlu0 %v2644
      %v2646 = vpop.xlane.xlu0 %2645
      %vm2647 = vcmp.eq.f32.partialorder %v2644, %v2646
      %v2648 = vsel %vm2647, %v2643, inf
      %2649 = vmin.xlane.f32.xlu0 %v2648
      %v2650 = vpop.xlane.xlu0 %2649
      %v2651 = vcvt.f32.s32 %v2650
      %v2652 = vcvt.f32.s32 %v2646
      %v2653 = vshll.u32 %v2652, 16
      %v2654 = vadd.s32 %v2653, %v2651
      %v2655 = vand.u32 %v2228, 65535
      %v2656 = vshra.s32 %v2228, 16
      %v2657 = vcvt.s32.f32 %v2655
      %v2658 = vcvt.s32.f32 %v2656
      %2659 = vmin.xlane.f32.xlu0 %v2658
      %v2660 = vpop.xlane.xlu0 %2659
      %vm2661 = vcmp.eq.f32.partialorder %v2658, %v2660
      %v2662 = vsel %vm2661, %v2657, inf
      %2663 = vmin.xlane.f32.xlu0 %v2662
      %v2664 = vpop.xlane.xlu0 %2663
      %v2665 = vcvt.f32.s32 %v2664
      %v2666 = vcvt.f32.s32 %v2660
      %v2667 = vshll.u32 %v2666, 16
      %v2668 = vadd.s32 %v2667, %v2665
      %v2669 = vand.u32 %v2229, 65535
      %v2670 = vshra.s32 %v2229, 16
      %v2671 = vcvt.s32.f32 %v2669
      %v2672 = vcvt.s32.f32 %v2670
      %2673 = vmin.xlane.f32.xlu0 %v2672
      %v2674 = vpop.xlane.xlu0 %2673
      %vm2675 = vcmp.eq.f32.partialorder %v2672, %v2674
      %v2676 = vsel %vm2675, %v2671, inf
      %2677 = vmin.xlane.f32.xlu0 %v2676
      %v2678 = vpop.xlane.xlu0 %2677
      %v2679 = vcvt.f32.s32 %v2678
      %v2680 = vcvt.f32.s32 %v2674
      %v2681 = vshll.u32 %v2680, 16
      %v2682 = vadd.s32 %v2681, %v2679
      %v2683 = vand.u32 %v2230, 65535
      %v2684 = vshra.s32 %v2230, 16
      %v2685 = vcvt.s32.f32 %v2683
      %v2686 = vcvt.s32.f32 %v2684
      %2687 = vmin.xlane.f32.xlu0 %v2686
      %v2688 = vpop.xlane.xlu0 %2687
      %vm2689 = vcmp.eq.f32.partialorder %v2686, %v2688
      %v2690 = vsel %vm2689, %v2685, inf
      %2691 = vmin.xlane.f32.xlu0 %v2690
      %v2692 = vpop.xlane.xlu0 %2691
      %v2693 = vcvt.f32.s32 %v2692
      %v2694 = vcvt.f32.s32 %v2688
      %v2695 = vshll.u32 %v2694, 16
      %v2696 = vadd.s32 %v2695, %v2693
      %v2697 = vand.u32 %v2231, 65535
      %v2698 = vshra.s32 %v2231, 16
      %v2699 = vcvt.s32.f32 %v2697
      %v2700 = vcvt.s32.f32 %v2698
      %2701 = vmin.xlane.f32.xlu0 %v2700
      %v2702 = vpop.xlane.xlu0 %2701
      %vm2703 = vcmp.eq.f32.partialorder %v2700, %v2702
      %v2704 = vsel %vm2703, %v2699, inf
      %2705 = vmin.xlane.f32.xlu0 %v2704
      %v2706 = vpop.xlane.xlu0 %2705
      %v2707 = vcvt.f32.s32 %v2706
      %v2708 = vcvt.f32.s32 %v2702
      %v2709 = vshll.u32 %v2708, 16
      %v2710 = vadd.s32 %v2709, %v2707
      %v2711 = vand.u32 %v2232, 65535
      %v2712 = vshra.s32 %v2232, 16
      %v2713 = vcvt.s32.f32 %v2711
      %v2714 = vcvt.s32.f32 %v2712
      %2715 = vmin.xlane.f32.xlu0 %v2714
      %v2716 = vpop.xlane.xlu0 %2715
      %vm2717 = vcmp.eq.f32.partialorder %v2714, %v2716
      %v2718 = vsel %vm2717, %v2713, inf
      %2719 = vmin.xlane.f32.xlu0 %v2718
      %v2720 = vpop.xlane.xlu0 %2719
      %v2721 = vcvt.f32.s32 %v2720
      %v2722 = vcvt.f32.s32 %v2716
      %v2723 = vshll.u32 %v2722, 16
      %v2724 = vadd.s32 %v2723, %v2721
      %v2725 = vand.u32 %v2233, 65535
      %v2726 = vshra.s32 %v2233, 16
      %v2727 = vcvt.s32.f32 %v2725
      %v2728 = vcvt.s32.f32 %v2726
      %2729 = vmin.xlane.f32.xlu0 %v2728
      %v2730 = vpop.xlane.xlu0 %2729
      %vm2731 = vcmp.eq.f32.partialorder %v2728, %v2730
      %v2732 = vsel %vm2731, %v2727, inf
      %2733 = vmin.xlane.f32.xlu0 %v2732
      %v2734 = vpop.xlane.xlu0 %2733
      %v2735 = vcvt.f32.s32 %v2734
      %v2736 = vcvt.f32.s32 %v2730
      %v2737 = vshll.u32 %v2736, 16
      %v2738 = vadd.s32 %v2737, %v2735
      %v2739 = vand.u32 %v2234, 65535
      %v2740 = vshra.s32 %v2234, 16
      %v2741 = vcvt.s32.f32 %v2739
      %v2742 = vcvt.s32.f32 %v2740
      %2743 = vmin.xlane.f32.xlu0 %v2742
      %v2744 = vpop.xlane.xlu0 %2743
      %vm2745 = vcmp.eq.f32.partialorder %v2742, %v2744
      %v2746 = vsel %vm2745, %v2741, inf
      %2747 = vmin.xlane.f32.xlu0 %v2746
      %v2748 = vpop.xlane.xlu0 %2747
      %v2749 = vcvt.f32.s32 %v2748
      %v2750 = vcvt.f32.s32 %v2744
      %v2751 = vshll.u32 %v2750, 16
      %v2752 = vadd.s32 %v2751, %v2749
      %v2753 = vand.u32 %v2235, 65535
      %v2754 = vshra.s32 %v2235, 16
      %v2755 = vcvt.s32.f32 %v2753
      %v2756 = vcvt.s32.f32 %v2754
      %2757 = vmin.xlane.f32.xlu0 %v2756
      %v2758 = vpop.xlane.xlu0 %2757
      %vm2759 = vcmp.eq.f32.partialorder %v2756, %v2758
      %v2760 = vsel %vm2759, %v2755, inf
      %2761 = vmin.xlane.f32.xlu0 %v2760
      %v2762 = vpop.xlane.xlu0 %2761
      %v2763 = vcvt.f32.s32 %v2762
      %v2764 = vcvt.f32.s32 %v2758
      %v2765 = vshll.u32 %v2764, 16
      %v2766 = vadd.s32 %v2765, %v2763
      %v2767 = vand.u32 %v2236, 65535
      %v2768 = vshra.s32 %v2236, 16
      %v2769 = vcvt.s32.f32 %v2767
      %v2770 = vcvt.s32.f32 %v2768
      %2771 = vmin.xlane.f32.xlu0 %v2770
      %v2772 = vpop.xlane.xlu0 %2771
      %vm2773 = vcmp.eq.f32.partialorder %v2770, %v2772
      %v2774 = vsel %vm2773, %v2769, inf
      %2775 = vmin.xlane.f32.xlu0 %v2774
      %v2776 = vpop.xlane.xlu0 %2775
      %v2777 = vcvt.f32.s32 %v2776
      %v2778 = vcvt.f32.s32 %v2772
      %v2779 = vshll.u32 %v2778, 16
      %v2780 = vadd.s32 %v2779, %v2777
      %v2781 = vand.u32 %v2237, 65535
      %v2782 = vshra.s32 %v2237, 16
      %v2783 = vcvt.s32.f32 %v2781
      %v2784 = vcvt.s32.f32 %v2782
      %2785 = vmin.xlane.f32.xlu0 %v2784
      %v2786 = vpop.xlane.xlu0 %2785
      %vm2787 = vcmp.eq.f32.partialorder %v2784, %v2786
      %v2788 = vsel %vm2787, %v2783, inf
      %2789 = vmin.xlane.f32.xlu0 %v2788
      %v2790 = vpop.xlane.xlu0 %2789
      %v2791 = vcvt.f32.s32 %v2790
      %v2792 = vcvt.f32.s32 %v2786
      %v2793 = vshll.u32 %v2792, 16
      %v2794 = vadd.s32 %v2793, %v2791
      %v2795 = vand.u32 %v2238, 65535
      %v2796 = vshra.s32 %v2238, 16
      %v2797 = vcvt.s32.f32 %v2795
      %v2798 = vcvt.s32.f32 %v2796
      %2799 = vmin.xlane.f32.xlu0 %v2798
      %v2800 = vpop.xlane.xlu0 %2799
      %vm2801 = vcmp.eq.f32.partialorder %v2798, %v2800
      %v2802 = vsel %vm2801, %v2797, inf
      %2803 = vmin.xlane.f32.xlu0 %v2802
      %v2804 = vpop.xlane.xlu0 %2803
      %v2805 = vcvt.f32.s32 %v2804
      %v2806 = vcvt.f32.s32 %v2800
      %v2807 = vshll.u32 %v2806, 16
      %v2808 = vadd.s32 %v2807, %v2805
      %v2809 = vand.u32 %v2239, 65535
      %v2810 = vshra.s32 %v2239, 16
      %v2811 = vcvt.s32.f32 %v2809
      %v2812 = vcvt.s32.f32 %v2810
      %2813 = vmin.xlane.f32.xlu0 %v2812
      %v2814 = vpop.xlane.xlu0 %2813
      %vm2815 = vcmp.eq.f32.partialorder %v2812, %v2814
      %v2816 = vsel %vm2815, %v2811, inf
      %2817 = vmin.xlane.f32.xlu0 %v2816
      %v2818 = vpop.xlane.xlu0 %2817
      %v2819 = vcvt.f32.s32 %v2818
      %v2820 = vcvt.f32.s32 %v2814
      %v2821 = vshll.u32 %v2820, 16
      %v2822 = vadd.s32 %v2821, %v2819
      %v2823 = vand.u32 %v2240, 65535
      %v2824 = vshra.s32 %v2240, 16
      %v2825 = vcvt.s32.f32 %v2823
      %v2826 = vcvt.s32.f32 %v2824
      %2827 = vmin.xlane.f32.xlu0 %v2826
      %v2828 = vpop.xlane.xlu0 %2827
      %vm2829 = vcmp.eq.f32.partialorder %v2826, %v2828
      %v2830 = vsel %vm2829, %v2825, inf
      %2831 = vmin.xlane.f32.xlu0 %v2830
      %v2832 = vpop.xlane.xlu0 %2831
      %v2833 = vcvt.f32.s32 %v2832
      %v2834 = vcvt.f32.s32 %v2828
      %v2835 = vshll.u32 %v2834, 16
      %v2836 = vadd.s32 %v2835, %v2833
      %v2837 = vand.u32 %v2241, 65535
      %v2838 = vshra.s32 %v2241, 16
      %v2839 = vcvt.s32.f32 %v2837
      %v2840 = vcvt.s32.f32 %v2838
      %2841 = vmin.xlane.f32.xlu0 %v2840
      %v2842 = vpop.xlane.xlu0 %2841
      %vm2843 = vcmp.eq.f32.partialorder %v2840, %v2842
      %v2844 = vsel %vm2843, %v2839, inf
      %2845 = vmin.xlane.f32.xlu0 %v2844
      %v2846 = vpop.xlane.xlu0 %2845
      %v2847 = vcvt.f32.s32 %v2846
      %v2848 = vcvt.f32.s32 %v2842
      %v2849 = vshll.u32 %v2848, 16
      %v2850 = vadd.s32 %v2849, %v2847
      %v2851 = vand.u32 %v2242, 65535
      %v2852 = vshra.s32 %v2242, 16
      %v2853 = vcvt.s32.f32 %v2851
      %v2854 = vcvt.s32.f32 %v2852
      %2855 = vmin.xlane.f32.xlu0 %v2854
      %v2856 = vpop.xlane.xlu0 %2855
      %vm2857 = vcmp.eq.f32.partialorder %v2854, %v2856
      %v2858 = vsel %vm2857, %v2853, inf
      %2859 = vmin.xlane.f32.xlu0 %v2858
      %v2860 = vpop.xlane.xlu0 %2859
      %v2861 = vcvt.f32.s32 %v2860
      %v2862 = vcvt.f32.s32 %v2856
      %v2863 = vshll.u32 %v2862, 16
      %v2864 = vadd.s32 %v2863, %v2861
      %v2865 = vand.u32 %v2243, 65535
      %v2866 = vshra.s32 %v2243, 16
      %v2867 = vcvt.s32.f32 %v2865
      %v2868 = vcvt.s32.f32 %v2866
      %2869 = vmin.xlane.f32.xlu0 %v2868
      %v2870 = vpop.xlane.xlu0 %2869
      %vm2871 = vcmp.eq.f32.partialorder %v2868, %v2870
      %v2872 = vsel %vm2871, %v2867, inf
      %2873 = vmin.xlane.f32.xlu0 %v2872
      %v2874 = vpop.xlane.xlu0 %2873
      %v2875 = vcvt.f32.s32 %v2874
      %v2876 = vcvt.f32.s32 %v2870
      %v2877 = vshll.u32 %v2876, 16
      %v2878 = vadd.s32 %v2877, %v2875
      %v2879 = vand.u32 %v2244, 65535
      %v2880 = vshra.s32 %v2244, 16
      %v2881 = vcvt.s32.f32 %v2879
      %v2882 = vcvt.s32.f32 %v2880
      %2883 = vmin.xlane.f32.xlu0 %v2882
      %v2884 = vpop.xlane.xlu0 %2883
      %vm2885 = vcmp.eq.f32.partialorder %v2882, %v2884
      %v2886 = vsel %vm2885, %v2881, inf
      %2887 = vmin.xlane.f32.xlu0 %v2886
      %v2888 = vpop.xlane.xlu0 %2887
      %v2889 = vcvt.f32.s32 %v2888
      %v2890 = vcvt.f32.s32 %v2884
      %v2891 = vshll.u32 %v2890, 16
      %v2892 = vadd.s32 %v2891, %v2889
      %v2893 = vand.u32 %v2245, 65535
      %v2894 = vshra.s32 %v2245, 16
      %v2895 = vcvt.s32.f32 %v2893
      %v2896 = vcvt.s32.f32 %v2894
      %2897 = vmin.xlane.f32.xlu0 %v2896
      %v2898 = vpop.xlane.xlu0 %2897
      %vm2899 = vcmp.eq.f32.partialorder %v2896, %v2898
      %v2900 = vsel %vm2899, %v2895, inf
      %2901 = vmin.xlane.f32.xlu0 %v2900
      %v2902 = vpop.xlane.xlu0 %2901
      %v2903 = vcvt.f32.s32 %v2902
      %v2904 = vcvt.f32.s32 %v2898
      %v2905 = vshll.u32 %v2904, 16
      %v2906 = vadd.s32 %v2905, %v2903
      %v2907 = vand.u32 %v2246, 65535
      %v2908 = vshra.s32 %v2246, 16
      %v2909 = vcvt.s32.f32 %v2907
      %v2910 = vcvt.s32.f32 %v2908
      %2911 = vmin.xlane.f32.xlu0 %v2910
      %v2912 = vpop.xlane.xlu0 %2911
      %vm2913 = vcmp.eq.f32.partialorder %v2910, %v2912
      %v2914 = vsel %vm2913, %v2909, inf
      %2915 = vmin.xlane.f32.xlu0 %v2914
      %v2916 = vpop.xlane.xlu0 %2915
      %v2917 = vcvt.f32.s32 %v2916
      %v2918 = vcvt.f32.s32 %v2912
      %v2919 = vshll.u32 %v2918, 16
      %v2920 = vadd.s32 %v2919, %v2917
      %v2921 = vand.u32 %v2247, 65535
      %v2922 = vshra.s32 %v2247, 16
      %v2923 = vcvt.s32.f32 %v2921
      %v2924 = vcvt.s32.f32 %v2922
      %2925 = vmin.xlane.f32.xlu0 %v2924
      %v2926 = vpop.xlane.xlu0 %2925
      %vm2927 = vcmp.eq.f32.partialorder %v2924, %v2926
      %v2928 = vsel %vm2927, %v2923, inf
      %2929 = vmin.xlane.f32.xlu0 %v2928
      %v2930 = vpop.xlane.xlu0 %2929
      %v2931 = vcvt.f32.s32 %v2930
      %v2932 = vcvt.f32.s32 %v2926
      %v2933 = vshll.u32 %v2932, 16
      %v2934 = vadd.s32 %v2933, %v2931
      %v2935 = vand.u32 %v2248, 65535
      %v2936 = vshra.s32 %v2248, 16
      %v2937 = vcvt.s32.f32 %v2935
      %v2938 = vcvt.s32.f32 %v2936
      %2939 = vmin.xlane.f32.xlu0 %v2938
      %v2940 = vpop.xlane.xlu0 %2939
      %vm2941 = vcmp.eq.f32.partialorder %v2938, %v2940
      %v2942 = vsel %vm2941, %v2937, inf
      %2943 = vmin.xlane.f32.xlu0 %v2942
      %v2944 = vpop.xlane.xlu0 %2943
      %v2945 = vcvt.f32.s32 %v2944
      %v2946 = vcvt.f32.s32 %v2940
      %v2947 = vshll.u32 %v2946, 16
      %v2948 = vadd.s32 %v2947, %v2945
      %v2949 = vand.u32 %v2249, 65535
      %v2950 = vshra.s32 %v2249, 16
      %v2951 = vcvt.s32.f32 %v2949
      %v2952 = vcvt.s32.f32 %v2950
      %2953 = vmin.xlane.f32.xlu0 %v2952
      %v2954 = vpop.xlane.xlu0 %2953
      %vm2955 = vcmp.eq.f32.partialorder %v2952, %v2954
      %v2956 = vsel %vm2955, %v2951, inf
      %2957 = vmin.xlane.f32.xlu0 %v2956
      %v2958 = vpop.xlane.xlu0 %2957
      %v2959 = vcvt.f32.s32 %v2958
      %v2960 = vcvt.f32.s32 %v2954
      %v2961 = vshll.u32 %v2960, 16
      %v2962 = vadd.s32 %v2961, %v2959
      %v2963 = vand.u32 %v2250, 65535
      %v2964 = vshra.s32 %v2250, 16
      %v2965 = vcvt.s32.f32 %v2963
      %v2966 = vcvt.s32.f32 %v2964
      %2967 = vmin.xlane.f32.xlu0 %v2966
      %v2968 = vpop.xlane.xlu0 %2967
      %vm2969 = vcmp.eq.f32.partialorder %v2966, %v2968
      %v2970 = vsel %vm2969, %v2965, inf
      %2971 = vmin.xlane.f32.xlu0 %v2970
      %v2972 = vpop.xlane.xlu0 %2971
      %v2973 = vcvt.f32.s32 %v2972
      %v2974 = vcvt.f32.s32 %v2968
      %v2975 = vshll.u32 %v2974, 16
      %v2976 = vadd.s32 %v2975, %v2973
      %v2977 = vand.u32 %v2251, 65535
      %v2978 = vshra.s32 %v2251, 16
      %v2979 = vcvt.s32.f32 %v2977
      %v2980 = vcvt.s32.f32 %v2978
      %2981 = vmin.xlane.f32.xlu0 %v2980
      %v2982 = vpop.xlane.xlu0 %2981
      %vm2983 = vcmp.eq.f32.partialorder %v2980, %v2982
      %v2984 = vsel %vm2983, %v2979, inf
      %2985 = vmin.xlane.f32.xlu0 %v2984
      %v2986 = vpop.xlane.xlu0 %2985
      %v2987 = vcvt.f32.s32 %v2986
      %v2988 = vcvt.f32.s32 %v2982
      %v2989 = vshll.u32 %v2988, 16
      %v2990 = vadd.s32 %v2989, %v2987
      %v2991 = vand.u32 %v2252, 65535
      %v2992 = vshra.s32 %v2252, 16
      %v2993 = vcvt.s32.f32 %v2991
      %v2994 = vcvt.s32.f32 %v2992
      %2995 = vmin.xlane.f32.xlu0 %v2994
      %v2996 = vpop.xlane.xlu0 %2995
      %vm2997 = vcmp.eq.f32.partialorder %v2994, %v2996
      %v2998 = vsel %vm2997, %v2993, inf
      %2999 = vmin.xlane.f32.xlu0 %v2998
      %v3000 = vpop.xlane.xlu0 %2999
      %v3001 = vcvt.f32.s32 %v3000
      %v3002 = vcvt.f32.s32 %v2996
      %v3003 = vshll.u32 %v3002, 16
      %v3004 = vadd.s32 %v3003, %v3001
      %v3005 = vand.u32 %v2253, 65535
      %v3006 = vshra.s32 %v2253, 16
      %v3007 = vcvt.s32.f32 %v3005
      %v3008 = vcvt.s32.f32 %v3006
      %3009 = vmin.xlane.f32.xlu0 %v3008
      %v3010 = vpop.xlane.xlu0 %3009
      %vm3011 = vcmp.eq.f32.partialorder %v3008, %v3010
      %v3012 = vsel %vm3011, %v3007, inf
      %3013 = vmin.xlane.f32.xlu0 %v3012
      %v3014 = vpop.xlane.xlu0 %3013
      %v3015 = vcvt.f32.s32 %v3014
      %v3016 = vcvt.f32.s32 %v3010
      %v3017 = vshll.u32 %v3016, 16
      %v3018 = vadd.s32 %v3017, %v3015
      %v3019 = vand.u32 %v2254, 65535
      %v3020 = vshra.s32 %v2254, 16
      %v3021 = vcvt.s32.f32 %v3019
      %v3022 = vcvt.s32.f32 %v3020
      %3023 = vmin.xlane.f32.xlu0 %v3022
      %v3024 = vpop.xlane.xlu0 %3023
      %vm3025 = vcmp.eq.f32.partialorder %v3022, %v3024
      %v3026 = vsel %vm3025, %v3021, inf
      %3027 = vmin.xlane.f32.xlu0 %v3026
      %v3028 = vpop.xlane.xlu0 %3027
      %v3029 = vcvt.f32.s32 %v3028
      %v3030 = vcvt.f32.s32 %v3024
      %v3031 = vshll.u32 %v3030, 16
      %v3032 = vadd.s32 %v3031, %v3029
      %v3033 = vand.u32 %v2255, 65535
      %v3034 = vshra.s32 %v2255, 16
      %v3035 = vcvt.s32.f32 %v3033
      %v3036 = vcvt.s32.f32 %v3034
      %3037 = vmin.xlane.f32.xlu0 %v3036
      %v3038 = vpop.xlane.xlu0 %3037
      %vm3039 = vcmp.eq.f32.partialorder %v3036, %v3038
      %v3040 = vsel %vm3039, %v3035, inf
      %3041 = vmin.xlane.f32.xlu0 %v3040
      %v3042 = vpop.xlane.xlu0 %3041
      %v3043 = vcvt.f32.s32 %v3042
      %v3044 = vcvt.f32.s32 %v3038
      %v3045 = vshll.u32 %v3044, 16
      %v3046 = vadd.s32 %v3045, %v3043
      %v3047 = vand.u32 %v2256, 65535
      %v3048 = vshra.s32 %v2256, 16
      %v3049 = vcvt.s32.f32 %v3047
      %v3050 = vcvt.s32.f32 %v3048
      %3051 = vmin.xlane.f32.xlu0 %v3050
      %v3052 = vpop.xlane.xlu0 %3051
      %vm3053 = vcmp.eq.f32.partialorder %v3050, %v3052
      %v3054 = vsel %vm3053, %v3049, inf
      %3055 = vmin.xlane.f32.xlu0 %v3054
      %v3056 = vpop.xlane.xlu0 %3055
      %v3057 = vcvt.f32.s32 %v3056
      %v3058 = vcvt.f32.s32 %v3052
      %v3059 = vshll.u32 %v3058, 16
      %v3060 = vadd.s32 %v3059, %v3057
      %v3061 = vand.u32 %v2257, 65535
      %v3062 = vshra.s32 %v2257, 16
      %v3063 = vcvt.s32.f32 %v3061
      %v3064 = vcvt.s32.f32 %v3062
      %3065 = vmin.xlane.f32.xlu0 %v3064
      %v3066 = vpop.xlane.xlu0 %3065
      %vm3067 = vcmp.eq.f32.partialorder %v3064, %v3066
      %v3068 = vsel %vm3067, %v3063, inf
      %3069 = vmin.xlane.f32.xlu0 %v3068
      %v3070 = vpop.xlane.xlu0 %3069
      %v3071 = vcvt.f32.s32 %v3070
      %v3072 = vcvt.f32.s32 %v3066
      %v3073 = vshll.u32 %v3072, 16
      %v3074 = vadd.s32 %v3073, %v3071
      %v3075 = vand.u32 %v2258, 65535
      %v3076 = vshra.s32 %v2258, 16
      %v3077 = vcvt.s32.f32 %v3075
      %v3078 = vcvt.s32.f32 %v3076
      %3079 = vmin.xlane.f32.xlu0 %v3078
      %v3080 = vpop.xlane.xlu0 %3079
      %vm3081 = vcmp.eq.f32.partialorder %v3078, %v3080
      %v3082 = vsel %vm3081, %v3077, inf
      %3083 = vmin.xlane.f32.xlu0 %v3082
      %v3084 = vpop.xlane.xlu0 %3083
      %v3085 = vcvt.f32.s32 %v3084
      %v3086 = vcvt.f32.s32 %v3080
      %v3087 = vshll.u32 %v3086, 16
      %v3088 = vadd.s32 %v3087, %v3085
      %v3089 = vand.u32 %v2259, 65535
      %v3090 = vshra.s32 %v2259, 16
      %v3091 = vcvt.s32.f32 %v3089
      %v3092 = vcvt.s32.f32 %v3090
      %3093 = vmin.xlane.f32.xlu0 %v3092
      %v3094 = vpop.xlane.xlu0 %3093
      %vm3095 = vcmp.eq.f32.partialorder %v3092, %v3094
      %v3096 = vsel %vm3095, %v3091, inf
      %3097 = vmin.xlane.f32.xlu0 %v3096
      %v3098 = vpop.xlane.xlu0 %3097
      %v3099 = vcvt.f32.s32 %v3098
      %v3100 = vcvt.f32.s32 %v3094
      %v3101 = vshll.u32 %v3100, 16
      %v3102 = vadd.s32 %v3101, %v3099
      %v3103 = vand.u32 %v2260, 65535
      %v3104 = vshra.s32 %v2260, 16
      %v3105 = vcvt.s32.f32 %v3103
      %v3106 = vcvt.s32.f32 %v3104
      %3107 = vmin.xlane.f32.xlu0 %v3106
      %v3108 = vpop.xlane.xlu0 %3107
      %vm3109 = vcmp.eq.f32.partialorder %v3106, %v3108
      %v3110 = vsel %vm3109, %v3105, inf
      %3111 = vmin.xlane.f32.xlu0 %v3110
      %v3112 = vpop.xlane.xlu0 %3111
      %v3113 = vcvt.f32.s32 %v3112
      %v3114 = vcvt.f32.s32 %v3108
      %v3115 = vshll.u32 %v3114, 16
      %v3116 = vadd.s32 %v3115, %v3113
      %v3117 = vand.u32 %v2261, 65535
      %v3118 = vshra.s32 %v2261, 16
      %v3119 = vcvt.s32.f32 %v3117
      %v3120 = vcvt.s32.f32 %v3118
      %3121 = vmin.xlane.f32.xlu0 %v3120
      %v3122 = vpop.xlane.xlu0 %3121
      %vm3123 = vcmp.eq.f32.partialorder %v3120, %v3122
      %v3124 = vsel %vm3123, %v3119, inf
      %3125 = vmin.xlane.f32.xlu0 %v3124
      %v3126 = vpop.xlane.xlu0 %3125
      %v3127 = vcvt.f32.s32 %v3126
      %v3128 = vcvt.f32.s32 %v3122
      %v3129 = vshll.u32 %v3128, 16
      %v3130 = vadd.s32 %v3129, %v3127
      %v3131 = vand.u32 %v2262, 65535
      %v3132 = vshra.s32 %v2262, 16
      %v3133 = vcvt.s32.f32 %v3131
      %v3134 = vcvt.s32.f32 %v3132
      %3135 = vmin.xlane.f32.xlu0 %v3134
      %v3136 = vpop.xlane.xlu0 %3135
      %vm3137 = vcmp.eq.f32.partialorder %v3134, %v3136
      %v3138 = vsel %vm3137, %v3133, inf
      %3139 = vmin.xlane.f32.xlu0 %v3138
      %v3140 = vpop.xlane.xlu0 %3139
      %v3141 = vcvt.f32.s32 %v3140
      %v3142 = vcvt.f32.s32 %v3136
      %v3143 = vshll.u32 %v3142, 16
      %v3144 = vadd.s32 %v3143, %v3141
      %v3145 = vand.u32 %v2263, 65535
      %v3146 = vshra.s32 %v2263, 16
      %v3147 = vcvt.s32.f32 %v3145
      %v3148 = vcvt.s32.f32 %v3146
      %3149 = vmin.xlane.f32.xlu0 %v3148
      %v3150 = vpop.xlane.xlu0 %3149
      %vm3151 = vcmp.eq.f32.partialorder %v3148, %v3150
      %v3152 = vsel %vm3151, %v3147, inf
      %3153 = vmin.xlane.f32.xlu0 %v3152
      %v3154 = vpop.xlane.xlu0 %3153
      %v3155 = vcvt.f32.s32 %v3154
      %v3156 = vcvt.f32.s32 %v3150
      %v3157 = vshll.u32 %v3156, 16
      %v3158 = vadd.s32 %v3157, %v3155
      %v3159 = vand.u32 %v2264, 65535
      %v3160 = vshra.s32 %v2264, 16
      %v3161 = vcvt.s32.f32 %v3159
      %v3162 = vcvt.s32.f32 %v3160
      %3163 = vmin.xlane.f32.xlu0 %v3162
      %v3164 = vpop.xlane.xlu0 %3163
      %vm3165 = vcmp.eq.f32.partialorder %v3162, %v3164
      %v3166 = vsel %vm3165, %v3161, inf
      %3167 = vmin.xlane.f32.xlu0 %v3166
      %v3168 = vpop.xlane.xlu0 %3167
      %v3169 = vcvt.f32.s32 %v3168
      %v3170 = vcvt.f32.s32 %v3164
      %v3171 = vshll.u32 %v3170, 16
      %v3172 = vadd.s32 %v3171, %v3169
      %v3173 = vand.u32 %v2265, 65535
      %v3174 = vshra.s32 %v2265, 16
      %v3175 = vcvt.s32.f32 %v3173
      %v3176 = vcvt.s32.f32 %v3174
      %3177 = vmin.xlane.f32.xlu0 %v3176
      %v3178 = vpop.xlane.xlu0 %3177
      %vm3179 = vcmp.eq.f32.partialorder %v3176, %v3178
      %v3180 = vsel %vm3179, %v3175, inf
      %3181 = vmin.xlane.f32.xlu0 %v3180
      %v3182 = vpop.xlane.xlu0 %3181
      %v3183 = vcvt.f32.s32 %v3182
      %v3184 = vcvt.f32.s32 %v3178
      %v3185 = vshll.u32 %v3184, 16
      %v3186 = vadd.s32 %v3185, %v3183
      %v3187 = vand.u32 %v2266, 65535
      %v3188 = vshra.s32 %v2266, 16
      %v3189 = vcvt.s32.f32 %v3187
      %v3190 = vcvt.s32.f32 %v3188
      %3191 = vmin.xlane.f32.xlu0 %v3190
      %v3192 = vpop.xlane.xlu0 %3191
      %vm3193 = vcmp.eq.f32.partialorder %v3190, %v3192
      %v3194 = vsel %vm3193, %v3189, inf
      %3195 = vmin.xlane.f32.xlu0 %v3194
      %v3196 = vpop.xlane.xlu0 %3195
      %v3197 = vcvt.f32.s32 %v3196
      %v3198 = vcvt.f32.s32 %v3192
      %v3199 = vshll.u32 %v3198, 16
      %v3200 = vadd.s32 %v3199, %v3197
      %v3201 = vand.u32 %v2267, 65535
      %v3202 = vshra.s32 %v2267, 16
      %v3203 = vcvt.s32.f32 %v3201
      %v3204 = vcvt.s32.f32 %v3202
      %3205 = vmin.xlane.f32.xlu0 %v3204
      %v3206 = vpop.xlane.xlu0 %3205
      %vm3207 = vcmp.eq.f32.partialorder %v3204, %v3206
      %v3208 = vsel %vm3207, %v3203, inf
      %3209 = vmin.xlane.f32.xlu0 %v3208
      %v3210 = vpop.xlane.xlu0 %3209
      %v3211 = vcvt.f32.s32 %v3210
      %v3212 = vcvt.f32.s32 %v3206
      %v3213 = vshll.u32 %v3212, 16
      %v3214 = vadd.s32 %v3213, %v3211
      %v3215 = vand.u32 %v2268, 65535
      %v3216 = vshra.s32 %v2268, 16
      %v3217 = vcvt.s32.f32 %v3215
      %v3218 = vcvt.s32.f32 %v3216
      %3219 = vmin.xlane.f32.xlu0 %v3218
      %v3220 = vpop.xlane.xlu0 %3219
      %vm3221 = vcmp.eq.f32.partialorder %v3218, %v3220
      %v3222 = vsel %vm3221, %v3217, inf
      %3223 = vmin.xlane.f32.xlu0 %v3222
      %v3224 = vpop.xlane.xlu0 %3223
      %v3225 = vcvt.f32.s32 %v3224
      %v3226 = vcvt.f32.s32 %v3220
      %v3227 = vshll.u32 %v3226, 16
      %v3228 = vadd.s32 %v3227, %v3225
      %v3229 = vand.u32 %v2269, 65535
      %v3230 = vshra.s32 %v2269, 16
      %v3231 = vcvt.s32.f32 %v3229
      %v3232 = vcvt.s32.f32 %v3230
      %3233 = vmin.xlane.f32.xlu0 %v3232
      %v3234 = vpop.xlane.xlu0 %3233
      %vm3235 = vcmp.eq.f32.partialorder %v3232, %v3234
      %v3236 = vsel %vm3235, %v3231, inf
      %3237 = vmin.xlane.f32.xlu0 %v3236
      %v3238 = vpop.xlane.xlu0 %3237
      %v3239 = vcvt.f32.s32 %v3238
      %v3240 = vcvt.f32.s32 %v3234
      %v3241 = vshll.u32 %v3240, 16
      %v3242 = vadd.s32 %v3241, %v3239
      %v3243 = vand.u32 %v2270, 65535
      %v3244 = vshra.s32 %v2270, 16
      %v3245 = vcvt.s32.f32 %v3243
      %v3246 = vcvt.s32.f32 %v3244
      %3247 = vmin.xlane.f32.xlu0 %v3246
      %v3248 = vpop.xlane.xlu0 %3247
      %vm3249 = vcmp.eq.f32.partialorder %v3246, %v3248
      %v3250 = vsel %vm3249, %v3245, inf
      %3251 = vmin.xlane.f32.xlu0 %v3250
      %v3252 = vpop.xlane.xlu0 %3251
      %v3253 = vcvt.f32.s32 %v3252
      %v3254 = vcvt.f32.s32 %v3248
      %v3255 = vshll.u32 %v3254, 16
      %v3256 = vadd.s32 %v3255, %v3253
      %v3257 = vand.u32 %v2271, 65535
      %v3258 = vshra.s32 %v2271, 16
      %v3259 = vcvt.s32.f32 %v3257
      %v3260 = vcvt.s32.f32 %v3258
      %3261 = vmin.xlane.f32.xlu0 %v3260
      %v3262 = vpop.xlane.xlu0 %3261
      %vm3263 = vcmp.eq.f32.partialorder %v3260, %v3262
      %v3264 = vsel %vm3263, %v3259, inf
      %3265 = vmin.xlane.f32.xlu0 %v3264
      %v3266 = vpop.xlane.xlu0 %3265
      %v3267 = vcvt.f32.s32 %v3266
      %v3268 = vcvt.f32.s32 %v3262
      %v3269 = vshll.u32 %v3268, 16
      %v3270 = vadd.s32 %v3269, %v3267
      %v3271 = vand.u32 %v2272, 65535
      %v3272 = vshra.s32 %v2272, 16
      %v3273 = vcvt.s32.f32 %v3271
      %v3274 = vcvt.s32.f32 %v3272
      %3275 = vmin.xlane.f32.xlu0 %v3274
      %v3276 = vpop.xlane.xlu0 %3275
      %vm3277 = vcmp.eq.f32.partialorder %v3274, %v3276
      %v3278 = vsel %vm3277, %v3273, inf
      %3279 = vmin.xlane.f32.xlu0 %v3278
      %v3280 = vpop.xlane.xlu0 %3279
      %v3281 = vcvt.f32.s32 %v3280
      %v3282 = vcvt.f32.s32 %v3276
      %v3283 = vshll.u32 %v3282, 16
      %v3284 = vadd.s32 %v3283, %v3281
      %v3285 = vand.u32 %v2273, 65535
      %v3286 = vshra.s32 %v2273, 16
      %v3287 = vcvt.s32.f32 %v3285
      %v3288 = vcvt.s32.f32 %v3286
      %3289 = vmin.xlane.f32.xlu0 %v3288
      %v3290 = vpop.xlane.xlu0 %3289
      %vm3291 = vcmp.eq.f32.partialorder %v3288, %v3290
      %v3292 = vsel %vm3291, %v3287, inf
      %3293 = vmin.xlane.f32.xlu0 %v3292
      %v3294 = vpop.xlane.xlu0 %3293
      %v3295 = vcvt.f32.s32 %v3294
      %v3296 = vcvt.f32.s32 %v3290
      %v3297 = vshll.u32 %v3296, 16
      %v3298 = vadd.s32 %v3297, %v3295
      %v3299 = vand.u32 %v2274, 65535
      %v3300 = vshra.s32 %v2274, 16
      %v3301 = vcvt.s32.f32 %v3299
      %v3302 = vcvt.s32.f32 %v3300
      %3303 = vmin.xlane.f32.xlu0 %v3302
      %v3304 = vpop.xlane.xlu0 %3303
      %vm3305 = vcmp.eq.f32.partialorder %v3302, %v3304
      %v3306 = vsel %vm3305, %v3301, inf
      %3307 = vmin.xlane.f32.xlu0 %v3306
      %v3308 = vpop.xlane.xlu0 %3307
      %v3309 = vcvt.f32.s32 %v3308
      %v3310 = vcvt.f32.s32 %v3304
      %v3311 = vshll.u32 %v3310, 16
      %v3312 = vadd.s32 %v3311, %v3309
      %v3313 = vand.u32 %v2275, 65535
      %v3314 = vshra.s32 %v2275, 16
      %v3315 = vcvt.s32.f32 %v3313
      %v3316 = vcvt.s32.f32 %v3314
      %3317 = vmin.xlane.f32.xlu0 %v3316
      %v3318 = vpop.xlane.xlu0 %3317
      %vm3319 = vcmp.eq.f32.partialorder %v3316, %v3318
      %v3320 = vsel %vm3319, %v3315, inf
      %3321 = vmin.xlane.f32.xlu0 %v3320
      %v3322 = vpop.xlane.xlu0 %3321
      %v3323 = vcvt.f32.s32 %v3322
      %v3324 = vcvt.f32.s32 %v3318
      %v3325 = vshll.u32 %v3324, 16
      %v3326 = vadd.s32 %v3325, %v3323
      %v3327 = vand.u32 %v2276, 65535
      %v3328 = vshra.s32 %v2276, 16
      %v3329 = vcvt.s32.f32 %v3327
      %v3330 = vcvt.s32.f32 %v3328
      %3331 = vmin.xlane.f32.xlu0 %v3330
      %v3332 = vpop.xlane.xlu0 %3331
      %vm3333 = vcmp.eq.f32.partialorder %v3330, %v3332
      %v3334 = vsel %vm3333, %v3329, inf
      %3335 = vmin.xlane.f32.xlu0 %v3334
      %v3336 = vpop.xlane.xlu0 %3335
      %v3337 = vcvt.f32.s32 %v3336
      %v3338 = vcvt.f32.s32 %v3332
      %v3339 = vshll.u32 %v3338, 16
      %v3340 = vadd.s32 %v3339, %v3337
      %v3341 = vand.u32 %v2277, 65535
      %v3342 = vshra.s32 %v2277, 16
      %v3343 = vcvt.s32.f32 %v3341
      %v3344 = vcvt.s32.f32 %v3342
      %3345 = vmin.xlane.f32.xlu0 %v3344
      %v3346 = vpop.xlane.xlu0 %3345
      %vm3347 = vcmp.eq.f32.partialorder %v3344, %v3346
      %v3348 = vsel %vm3347, %v3343, inf
      %3349 = vmin.xlane.f32.xlu0 %v3348
      %v3350 = vpop.xlane.xlu0 %3349
      %v3351 = vcvt.f32.s32 %v3350
      %v3352 = vcvt.f32.s32 %v3346
      %v3353 = vshll.u32 %v3352, 16
      %v3354 = vadd.s32 %v3353, %v3351
      %v3355 = vand.u32 %v2278, 65535
      %v3356 = vshra.s32 %v2278, 16
      %v3357 = vcvt.s32.f32 %v3355
      %v3358 = vcvt.s32.f32 %v3356
      %3359 = vmin.xlane.f32.xlu0 %v3358
      %v3360 = vpop.xlane.xlu0 %3359
      %vm3361 = vcmp.eq.f32.partialorder %v3358, %v3360
      %v3362 = vsel %vm3361, %v3357, inf
      %3363 = vmin.xlane.f32.xlu0 %v3362
      %v3364 = vpop.xlane.xlu0 %3363
      %v3365 = vcvt.f32.s32 %v3364
      %v3366 = vcvt.f32.s32 %v3360
      %v3367 = vshll.u32 %v3366, 16
      %v3368 = vadd.s32 %v3367, %v3365
      %v3369 = vand.u32 %v2279, 65535
      %v3370 = vshra.s32 %v2279, 16
      %v3371 = vcvt.s32.f32 %v3369
      %v3372 = vcvt.s32.f32 %v3370
      %3373 = vmin.xlane.f32.xlu0 %v3372
      %v3374 = vpop.xlane.xlu0 %3373
      %vm3375 = vcmp.eq.f32.partialorder %v3372, %v3374
      %v3376 = vsel %vm3375, %v3371, inf
      %3377 = vmin.xlane.f32.xlu0 %v3376
      %v3378 = vpop.xlane.xlu0 %3377
      %v3379 = vcvt.f32.s32 %v3378
      %v3380 = vcvt.f32.s32 %v3374
      %v3381 = vshll.u32 %v3380, 16
      %v3382 = vadd.s32 %v3381, %v3379
      %v3383 = vand.u32 %v2280, 65535
      %v3384 = vshra.s32 %v2280, 16
      %v3385 = vcvt.s32.f32 %v3383
      %v3386 = vcvt.s32.f32 %v3384
      %3387 = vmin.xlane.f32.xlu0 %v3386
      %v3388 = vpop.xlane.xlu0 %3387
      %vm3389 = vcmp.eq.f32.partialorder %v3386, %v3388
      %v3390 = vsel %vm3389, %v3385, inf
      %3391 = vmin.xlane.f32.xlu0 %v3390
      %v3392 = vpop.xlane.xlu0 %3391
      %v3393 = vcvt.f32.s32 %v3392
      %v3394 = vcvt.f32.s32 %v3388
      %v3395 = vshll.u32 %v3394, 16
      %v3396 = vadd.s32 %v3395, %v3393
      %v3397 = vand.u32 %v2281, 65535
      %v3398 = vshra.s32 %v2281, 16
      %v3399 = vcvt.s32.f32 %v3397
      %v3400 = vcvt.s32.f32 %v3398
      %3401 = vmin.xlane.f32.xlu0 %v3400
      %v3402 = vpop.xlane.xlu0 %3401
      %vm3403 = vcmp.eq.f32.partialorder %v3400, %v3402
      %v3404 = vsel %vm3403, %v3399, inf
      %3405 = vmin.xlane.f32.xlu0 %v3404
      %v3406 = vpop.xlane.xlu0 %3405
      %v3407 = vcvt.f32.s32 %v3406
      %v3408 = vcvt.f32.s32 %v3402
      %v3409 = vshll.u32 %v3408, 16
      %v3410 = vadd.s32 %v3409, %v3407
      %v3411 = vand.u32 %v2282, 65535
      %v3412 = vshra.s32 %v2282, 16
      %v3413 = vcvt.s32.f32 %v3411
      %v3414 = vcvt.s32.f32 %v3412
      %3415 = vmin.xlane.f32.xlu0 %v3414
      %v3416 = vpop.xlane.xlu0 %3415
      %vm3417 = vcmp.eq.f32.partialorder %v3414, %v3416
      %v3418 = vsel %vm3417, %v3413, inf
      %3419 = vmin.xlane.f32.xlu0 %v3418
      %v3420 = vpop.xlane.xlu0 %3419
      %v3421 = vcvt.f32.s32 %v3420
      %v3422 = vcvt.f32.s32 %v3416
      %v3423 = vshll.u32 %v3422, 16
      %v3424 = vadd.s32 %v3423, %v3421
      %v3425 = vand.u32 %v2283, 65535
      %v3426 = vshra.s32 %v2283, 16
      %v3427 = vcvt.s32.f32 %v3425
      %v3428 = vcvt.s32.f32 %v3426
      %3429 = vmin.xlane.f32.xlu0 %v3428
      %v3430 = vpop.xlane.xlu0 %3429
      %vm3431 = vcmp.eq.f32.partialorder %v3428, %v3430
      %v3432 = vsel %vm3431, %v3427, inf
      %3433 = vmin.xlane.f32.xlu0 %v3432
      %v3434 = vpop.xlane.xlu0 %3433
      %v3435 = vcvt.f32.s32 %v3434
      %v3436 = vcvt.f32.s32 %v3430
      %v3437 = vshll.u32 %v3436, 16
      %v3438 = vadd.s32 %v3437, %v3435
      %v3439 = vand.u32 %v2284, 65535
      %v3440 = vshra.s32 %v2284, 16
      %v3441 = vcvt.s32.f32 %v3439
      %v3442 = vcvt.s32.f32 %v3440
      %3443 = vmin.xlane.f32.xlu0 %v3442
      %v3444 = vpop.xlane.xlu0 %3443
      %vm3445 = vcmp.eq.f32.partialorder %v3442, %v3444
      %v3446 = vsel %vm3445, %v3441, inf
      %3447 = vmin.xlane.f32.xlu0 %v3446
      %v3448 = vpop.xlane.xlu0 %3447
      %v3449 = vcvt.f32.s32 %v3448
      %v3450 = vcvt.f32.s32 %v3444
      %v3451 = vshll.u32 %v3450, 16
      %v3452 = vadd.s32 %v3451, %v3449
      %v3453 = vand.u32 %v2285, 65535
      %v3454 = vshra.s32 %v2285, 16
      %v3455 = vcvt.s32.f32 %v3453
      %v3456 = vcvt.s32.f32 %v3454
      %3457 = vmin.xlane.f32.xlu0 %v3456
      %v3458 = vpop.xlane.xlu0 %3457
      %vm3459 = vcmp.eq.f32.partialorder %v3456, %v3458
      %v3460 = vsel %vm3459, %v3455, inf
      %3461 = vmin.xlane.f32.xlu0 %v3460
      %v3462 = vpop.xlane.xlu0 %3461
      %v3463 = vcvt.f32.s32 %v3462
      %v3464 = vcvt.f32.s32 %v3458
      %v3465 = vshll.u32 %v3464, 16
      %v3466 = vadd.s32 %v3465, %v3463
      %v3467 = vand.u32 %v2286, 65535
      %v3468 = vshra.s32 %v2286, 16
      %v3469 = vcvt.s32.f32 %v3467
      %v3470 = vcvt.s32.f32 %v3468
      %3471 = vmin.xlane.f32.xlu0 %v3470
      %v3472 = vpop.xlane.xlu0 %3471
      %vm3473 = vcmp.eq.f32.partialorder %v3470, %v3472
      %v3474 = vsel %vm3473, %v3469, inf
      %3475 = vmin.xlane.f32.xlu0 %v3474
      %v3476 = vpop.xlane.xlu0 %3475
      %v3477 = vcvt.f32.s32 %v3476
      %v3478 = vcvt.f32.s32 %v3472
      %v3479 = vshll.u32 %v3478, 16
      %v3480 = vadd.s32 %v3479, %v3477
      %v3481 = vand.u32 %v2287, 65535
      %v3482 = vshra.s32 %v2287, 16
      %v3483 = vcvt.s32.f32 %v3481
      %v3484 = vcvt.s32.f32 %v3482
      %3485 = vmin.xlane.f32.xlu0 %v3484
      %v3486 = vpop.xlane.xlu0 %3485
      %vm3487 = vcmp.eq.f32.partialorder %v3484, %v3486
      %v3488 = vsel %vm3487, %v3483, inf
      %3489 = vmin.xlane.f32.xlu0 %v3488
      %v3490 = vpop.xlane.xlu0 %3489
      %v3491 = vcvt.f32.s32 %v3490
      %v3492 = vcvt.f32.s32 %v3486
      %v3493 = vshll.u32 %v3492, 16
      %v3494 = vadd.s32 %v3493, %v3491
      %v3495 = vand.u32 %v2288, 65535
      %v3496 = vshra.s32 %v2288, 16
      %v3497 = vcvt.s32.f32 %v3495
      %v3498 = vcvt.s32.f32 %v3496
      %3499 = vmin.xlane.f32.xlu0 %v3498
      %v3500 = vpop.xlane.xlu0 %3499
      %vm3501 = vcmp.eq.f32.partialorder %v3498, %v3500
      %v3502 = vsel %vm3501, %v3497, inf
      %3503 = vmin.xlane.f32.xlu0 %v3502
      %v3504 = vpop.xlane.xlu0 %3503
      %v3505 = vcvt.f32.s32 %v3504
      %v3506 = vcvt.f32.s32 %v3500
      %v3507 = vshll.u32 %v3506, 16
      %v3508 = vadd.s32 %v3507, %v3505
      %v3509 = vand.u32 %v2289, 65535
      %v3510 = vshra.s32 %v2289, 16
      %v3511 = vcvt.s32.f32 %v3509
      %v3512 = vcvt.s32.f32 %v3510
      %3513 = vmin.xlane.f32.xlu0 %v3512
      %v3514 = vpop.xlane.xlu0 %3513
      %vm3515 = vcmp.eq.f32.partialorder %v3512, %v3514
      %v3516 = vsel %vm3515, %v3511, inf
      %3517 = vmin.xlane.f32.xlu0 %v3516
      %v3518 = vpop.xlane.xlu0 %3517
      %v3519 = vcvt.f32.s32 %v3518
      %v3520 = vcvt.f32.s32 %v3514
      %v3521 = vshll.u32 %v3520, 16
      %v3522 = vadd.s32 %v3521, %v3519
      %v3523 = vand.u32 %v2290, 65535
      %v3524 = vshra.s32 %v2290, 16
      %v3525 = vcvt.s32.f32 %v3523
      %v3526 = vcvt.s32.f32 %v3524
      %3527 = vmin.xlane.f32.xlu0 %v3526
      %v3528 = vpop.xlane.xlu0 %3527
      %vm3529 = vcmp.eq.f32.partialorder %v3526, %v3528
      %v3530 = vsel %vm3529, %v3525, inf
      %3531 = vmin.xlane.f32.xlu0 %v3530
      %v3532 = vpop.xlane.xlu0 %3531
      %v3533 = vcvt.f32.s32 %v3532
      %v3534 = vcvt.f32.s32 %v3528
      %v3535 = vshll.u32 %v3534, 16
      %v3536 = vadd.s32 %v3535, %v3533
      %v3537 = vand.u32 %v2291, 65535
      %v3538 = vshra.s32 %v2291, 16
      %v3539 = vcvt.s32.f32 %v3537
      %v3540 = vcvt.s32.f32 %v3538
      %3541 = vmin.xlane.f32.xlu0 %v3540
      %v3542 = vpop.xlane.xlu0 %3541
      %vm3543 = vcmp.eq.f32.partialorder %v3540, %v3542
      %v3544 = vsel %vm3543, %v3539, inf
      %3545 = vmin.xlane.f32.xlu0 %v3544
      %v3546 = vpop.xlane.xlu0 %3545
      %v3547 = vcvt.f32.s32 %v3546
      %v3548 = vcvt.f32.s32 %v3542
      %v3549 = vshll.u32 %v3548, 16
      %v3550 = vadd.s32 %v3549, %v3547
      %v3551 = vand.u32 %v2292, 65535
      %v3552 = vshra.s32 %v2292, 16
      %v3553 = vcvt.s32.f32 %v3551
      %v3554 = vcvt.s32.f32 %v3552
      %3555 = vmin.xlane.f32.xlu0 %v3554
      %v3556 = vpop.xlane.xlu0 %3555
      %vm3557 = vcmp.eq.f32.partialorder %v3554, %v3556
      %v3558 = vsel %vm3557, %v3553, inf
      %3559 = vmin.xlane.f32.xlu0 %v3558
      %v3560 = vpop.xlane.xlu0 %3559
      %v3561 = vcvt.f32.s32 %v3560
      %v3562 = vcvt.f32.s32 %v3556
      %v3563 = vshll.u32 %v3562, 16
      %v3564 = vadd.s32 %v3563, %v3561
      %v3565 = vand.u32 %v2293, 65535
      %v3566 = vshra.s32 %v2293, 16
      %v3567 = vcvt.s32.f32 %v3565
      %v3568 = vcvt.s32.f32 %v3566
      %3569 = vmin.xlane.f32.xlu0 %v3568
      %v3570 = vpop.xlane.xlu0 %3569
      %vm3571 = vcmp.eq.f32.partialorder %v3568, %v3570
      %v3572 = vsel %vm3571, %v3567, inf
      %3573 = vmin.xlane.f32.xlu0 %v3572
      %v3574 = vpop.xlane.xlu0 %3573
      %v3575 = vcvt.f32.s32 %v3574
      %v3576 = vcvt.f32.s32 %v3570
      %v3577 = vshll.u32 %v3576, 16
      %v3578 = vadd.s32 %v3577, %v3575
      %v3579 = vand.u32 %v2294, 65535
      %v3580 = vshra.s32 %v2294, 16
      %v3581 = vcvt.s32.f32 %v3579
      %v3582 = vcvt.s32.f32 %v3580
      %3583 = vmin.xlane.f32.xlu0 %v3582
      %v3584 = vpop.xlane.xlu0 %3583
      %vm3585 = vcmp.eq.f32.partialorder %v3582, %v3584
      %v3586 = vsel %vm3585, %v3581, inf
      %3587 = vmin.xlane.f32.xlu0 %v3586
      %v3588 = vpop.xlane.xlu0 %3587
      %v3589 = vcvt.f32.s32 %v3588
      %v3590 = vcvt.f32.s32 %v3584
      %v3591 = vshll.u32 %v3590, 16
      %v3592 = vadd.s32 %v3591, %v3589
      %v3593 = vand.u32 %v2295, 65535
      %v3594 = vshra.s32 %v2295, 16
      %v3595 = vcvt.s32.f32 %v3593
      %v3596 = vcvt.s32.f32 %v3594
      %3597 = vmin.xlane.f32.xlu0 %v3596
      %v3598 = vpop.xlane.xlu0 %3597
      %vm3599 = vcmp.eq.f32.partialorder %v3596, %v3598
      %v3600 = vsel %vm3599, %v3595, inf
      %3601 = vmin.xlane.f32.xlu0 %v3600
      %v3602 = vpop.xlane.xlu0 %3601
      %v3603 = vcvt.f32.s32 %v3602
      %v3604 = vcvt.f32.s32 %v3598
      %v3605 = vshll.u32 %v3604, 16
      %v3606 = vadd.s32 %v3605, %v3603
      %v3607 = vand.u32 %v2296, 65535
      %v3608 = vshra.s32 %v2296, 16
      %v3609 = vcvt.s32.f32 %v3607
      %v3610 = vcvt.s32.f32 %v3608
      %3611 = vmin.xlane.f32.xlu0 %v3610
      %v3612 = vpop.xlane.xlu0 %3611
      %vm3613 = vcmp.eq.f32.partialorder %v3610, %v3612
      %v3614 = vsel %vm3613, %v3609, inf
      %3615 = vmin.xlane.f32.xlu0 %v3614
      %v3616 = vpop.xlane.xlu0 %3615
      %v3617 = vcvt.f32.s32 %v3616
      %v3618 = vcvt.f32.s32 %v3612
      %v3619 = vshll.u32 %v3618, 16
      %v3620 = vadd.s32 %v3619, %v3617
      %v3621 = vand.u32 %v2297, 65535
      %v3622 = vshra.s32 %v2297, 16
      %v3623 = vcvt.s32.f32 %v3621
      %v3624 = vcvt.s32.f32 %v3622
      %3625 = vmin.xlane.f32.xlu0 %v3624
      %v3626 = vpop.xlane.xlu0 %3625
      %vm3627 = vcmp.eq.f32.partialorder %v3624, %v3626
      %v3628 = vsel %vm3627, %v3623, inf
      %3629 = vmin.xlane.f32.xlu0 %v3628
      %v3630 = vpop.xlane.xlu0 %3629
      %v3631 = vcvt.f32.s32 %v3630
      %v3632 = vcvt.f32.s32 %v3626
      %v3633 = vshll.u32 %v3632, 16
      %v3634 = vadd.s32 %v3633, %v3631
      %v3635 = vand.u32 %v2298, 65535
      %v3636 = vshra.s32 %v2298, 16
      %v3637 = vcvt.s32.f32 %v3635
      %v3638 = vcvt.s32.f32 %v3636
      %3639 = vmin.xlane.f32.xlu0 %v3638
      %v3640 = vpop.xlane.xlu0 %3639
      %vm3641 = vcmp.eq.f32.partialorder %v3638, %v3640
      %v3642 = vsel %vm3641, %v3637, inf
      %3643 = vmin.xlane.f32.xlu0 %v3642
      %v3644 = vpop.xlane.xlu0 %3643
      %v3645 = vcvt.f32.s32 %v3644
      %v3646 = vcvt.f32.s32 %v3640
      %v3647 = vshll.u32 %v3646, 16
      %v3648 = vadd.s32 %v3647, %v3645
      %v3649 = vand.u32 %v2299, 65535
      %v3650 = vshra.s32 %v2299, 16
      %v3651 = vcvt.s32.f32 %v3649
      %v3652 = vcvt.s32.f32 %v3650
      %3653 = vmin.xlane.f32.xlu0 %v3652
      %v3654 = vpop.xlane.xlu0 %3653
      %vm3655 = vcmp.eq.f32.partialorder %v3652, %v3654
      %v3656 = vsel %vm3655, %v3651, inf
      %3657 = vmin.xlane.f32.xlu0 %v3656
      %v3658 = vpop.xlane.xlu0 %3657
      %v3659 = vcvt.f32.s32 %v3658
      %v3660 = vcvt.f32.s32 %v3654
      %v3661 = vshll.u32 %v3660, 16
      %v3662 = vadd.s32 %v3661, %v3659
      %v3663 = vand.u32 %v2300, 65535
      %v3664 = vshra.s32 %v2300, 16
      %v3665 = vcvt.s32.f32 %v3663
      %v3666 = vcvt.s32.f32 %v3664
      %3667 = vmin.xlane.f32.xlu0 %v3666
      %v3668 = vpop.xlane.xlu0 %3667
      %vm3669 = vcmp.eq.f32.partialorder %v3666, %v3668
      %v3670 = vsel %vm3669, %v3665, inf
      %3671 = vmin.xlane.f32.xlu0 %v3670
      %v3672 = vpop.xlane.xlu0 %3671
      %v3673 = vcvt.f32.s32 %v3672
      %v3674 = vcvt.f32.s32 %v3668
      %v3675 = vshll.u32 %v3674, 16
      %v3676 = vadd.s32 %v3675, %v3673
      %v3677 = vand.u32 %v2301, 65535
      %v3678 = vshra.s32 %v2301, 16
      %v3679 = vcvt.s32.f32 %v3677
      %v3680 = vcvt.s32.f32 %v3678
      %3681 = vmin.xlane.f32.xlu0 %v3680
      %v3682 = vpop.xlane.xlu0 %3681
      %vm3683 = vcmp.eq.f32.partialorder %v3680, %v3682
      %v3684 = vsel %vm3683, %v3679, inf
      %3685 = vmin.xlane.f32.xlu0 %v3684
      %v3686 = vpop.xlane.xlu0 %3685
      %v3687 = vcvt.f32.s32 %v3686
      %v3688 = vcvt.f32.s32 %v3682
      %v3689 = vshll.u32 %v3688, 16
      %v3690 = vadd.s32 %v3689, %v3687
      %v3691 = vand.u32 %v2302, 65535
      %v3692 = vshra.s32 %v2302, 16
      %v3693 = vcvt.s32.f32 %v3691
      %v3694 = vcvt.s32.f32 %v3692
      %3695 = vmin.xlane.f32.xlu0 %v3694
      %v3696 = vpop.xlane.xlu0 %3695
      %vm3697 = vcmp.eq.f32.partialorder %v3694, %v3696
      %v3698 = vsel %vm3697, %v3693, inf
      %3699 = vmin.xlane.f32.xlu0 %v3698
      %v3700 = vpop.xlane.xlu0 %3699
      %v3701 = vcvt.f32.s32 %v3700
      %v3702 = vcvt.f32.s32 %v3696
      %v3703 = vshll.u32 %v3702, 16
      %v3704 = vadd.s32 %v3703, %v3701
      %v3705 = vand.u32 %v2303, 65535
      %v3706 = vshra.s32 %v2303, 16
      %v3707 = vcvt.s32.f32 %v3705
      %v3708 = vcvt.s32.f32 %v3706
      %3709 = vmin.xlane.f32.xlu0 %v3708
      %v3710 = vpop.xlane.xlu0 %3709
      %vm3711 = vcmp.eq.f32.partialorder %v3708, %v3710
      %v3712 = vsel %vm3711, %v3707, inf
      %3713 = vmin.xlane.f32.xlu0 %v3712
      %v3714 = vpop.xlane.xlu0 %3713
      %v3715 = vcvt.f32.s32 %v3714
      %v3716 = vcvt.f32.s32 %v3710
      %v3717 = vshll.u32 %v3716, 16
      %v3718 = vadd.s32 %v3717, %v3715
      %v3719 = vand.u32 %v2304, 65535
      %v3720 = vshra.s32 %v2304, 16
      %v3721 = vcvt.s32.f32 %v3719
      %v3722 = vcvt.s32.f32 %v3720
      %3723 = vmin.xlane.f32.xlu0 %v3722
      %v3724 = vpop.xlane.xlu0 %3723
      %vm3725 = vcmp.eq.f32.partialorder %v3722, %v3724
      %v3726 = vsel %vm3725, %v3721, inf
      %3727 = vmin.xlane.f32.xlu0 %v3726
      %v3728 = vpop.xlane.xlu0 %3727
      %v3729 = vcvt.f32.s32 %v3728
      %v3730 = vcvt.f32.s32 %v3724
      %v3731 = vshll.u32 %v3730, 16
      %v3732 = vadd.s32 %v3731, %v3729
      %v3733 = vand.u32 %v2305, 65535
      %v3734 = vshra.s32 %v2305, 16
      %v3735 = vcvt.s32.f32 %v3733
      %v3736 = vcvt.s32.f32 %v3734
      %3737 = vmin.xlane.f32.xlu0 %v3736
      %v3738 = vpop.xlane.xlu0 %3737
      %vm3739 = vcmp.eq.f32.partialorder %v3736, %v3738
      %v3740 = vsel %vm3739, %v3735, inf
      %3741 = vmin.xlane.f32.xlu0 %v3740
      %v3742 = vpop.xlane.xlu0 %3741
      %v3743 = vcvt.f32.s32 %v3742
      %v3744 = vcvt.f32.s32 %v3738
      %v3745 = vshll.u32 %v3744, 16
      %v3746 = vadd.s32 %v3745, %v3743
      %v3747 = vand.u32 %v2306, 65535
      %v3748 = vshra.s32 %v2306, 16
      %v3749 = vcvt.s32.f32 %v3747
      %v3750 = vcvt.s32.f32 %v3748
      %3751 = vmin.xlane.f32.xlu0 %v3750
      %v3752 = vpop.xlane.xlu0 %3751
      %vm3753 = vcmp.eq.f32.partialorder %v3750, %v3752
      %v3754 = vsel %vm3753, %v3749, inf
      %3755 = vmin.xlane.f32.xlu0 %v3754
      %v3756 = vpop.xlane.xlu0 %3755
      %v3757 = vcvt.f32.s32 %v3756
      %v3758 = vcvt.f32.s32 %v3752
      %v3759 = vshll.u32 %v3758, 16
      %v3760 = vadd.s32 %v3759, %v3757
      %v3761 = vand.u32 %v2307, 65535
      %v3762 = vshra.s32 %v2307, 16
      %v3763 = vcvt.s32.f32 %v3761
      %v3764 = vcvt.s32.f32 %v3762
      %3765 = vmin.xlane.f32.xlu0 %v3764
      %v3766 = vpop.xlane.xlu0 %3765
      %vm3767 = vcmp.eq.f32.partialorder %v3764, %v3766
      %v3768 = vsel %vm3767, %v3763, inf
      %3769 = vmin.xlane.f32.xlu0 %v3768
      %v3770 = vpop.xlane.xlu0 %3769
      %v3771 = vcvt.f32.s32 %v3770
      %v3772 = vcvt.f32.s32 %v3766
      %v3773 = vshll.u32 %v3772, 16
      %v3774 = vadd.s32 %v3773, %v3771
      %v3775 = vand.u32 %v2308, 65535
      %v3776 = vshra.s32 %v2308, 16
      %v3777 = vcvt.s32.f32 %v3775
      %v3778 = vcvt.s32.f32 %v3776
      %3779 = vmin.xlane.f32.xlu0 %v3778
      %v3780 = vpop.xlane.xlu0 %3779
      %vm3781 = vcmp.eq.f32.partialorder %v3778, %v3780
      %v3782 = vsel %vm3781, %v3777, inf
      %3783 = vmin.xlane.f32.xlu0 %v3782
      %v3784 = vpop.xlane.xlu0 %3783
      %v3785 = vcvt.f32.s32 %v3784
      %v3786 = vcvt.f32.s32 %v3780
      %v3787 = vshll.u32 %v3786, 16
      %v3788 = vadd.s32 %v3787, %v3785
      %v3789 = vand.u32 %v2309, 65535
      %v3790 = vshra.s32 %v2309, 16
      %v3791 = vcvt.s32.f32 %v3789
      %v3792 = vcvt.s32.f32 %v3790
      %3793 = vmin.xlane.f32.xlu0 %v3792
      %v3794 = vpop.xlane.xlu0 %3793
      %vm3795 = vcmp.eq.f32.partialorder %v3792, %v3794
      %v3796 = vsel %vm3795, %v3791, inf
      %3797 = vmin.xlane.f32.xlu0 %v3796
      %v3798 = vpop.xlane.xlu0 %3797
      %v3799 = vcvt.f32.s32 %v3798
      %v3800 = vcvt.f32.s32 %v3794
      %v3801 = vshll.u32 %v3800, 16
      %v3802 = vadd.s32 %v3801, %v3799
      %v3803 = vand.u32 %v2310, 65535
      %v3804 = vshra.s32 %v2310, 16
      %v3805 = vcvt.s32.f32 %v3803
      %v3806 = vcvt.s32.f32 %v3804
      %3807 = vmin.xlane.f32.xlu0 %v3806
      %v3808 = vpop.xlane.xlu0 %3807
      %vm3809 = vcmp.eq.f32.partialorder %v3806, %v3808
      %v3810 = vsel %vm3809, %v3805, inf
      %3811 = vmin.xlane.f32.xlu0 %v3810
      %v3812 = vpop.xlane.xlu0 %3811
      %v3813 = vcvt.f32.s32 %v3812
      %v3814 = vcvt.f32.s32 %v3808
      %v3815 = vshll.u32 %v3814, 16
      %v3816 = vadd.s32 %v3815, %v3813
      %v3817 = vand.u32 %v2311, 65535
      %v3818 = vshra.s32 %v2311, 16
      %v3819 = vcvt.s32.f32 %v3817
      %v3820 = vcvt.s32.f32 %v3818
      %3821 = vmin.xlane.f32.xlu0 %v3820
      %v3822 = vpop.xlane.xlu0 %3821
      %vm3823 = vcmp.eq.f32.partialorder %v3820, %v3822
      %v3824 = vsel %vm3823, %v3819, inf
      %3825 = vmin.xlane.f32.xlu0 %v3824
      %v3826 = vpop.xlane.xlu0 %3825
      %v3827 = vcvt.f32.s32 %v3826
      %v3828 = vcvt.f32.s32 %v3822
      %v3829 = vshll.u32 %v3828, 16
      %v3830 = vadd.s32 %v3829, %v3827
      %v3831 = vand.u32 %v2312, 65535
      %v3832 = vshra.s32 %v2312, 16
      %v3833 = vcvt.s32.f32 %v3831
      %v3834 = vcvt.s32.f32 %v3832
      %3835 = vmin.xlane.f32.xlu0 %v3834
      %v3836 = vpop.xlane.xlu0 %3835
      %vm3837 = vcmp.eq.f32.partialorder %v3834, %v3836
      %v3838 = vsel %vm3837, %v3833, inf
      %3839 = vmin.xlane.f32.xlu0 %v3838
      %v3840 = vpop.xlane.xlu0 %3839
      %v3841 = vcvt.f32.s32 %v3840
      %v3842 = vcvt.f32.s32 %v3836
      %v3843 = vshll.u32 %v3842, 16
      %v3844 = vadd.s32 %v3843, %v3841
      %v3845 = vand.u32 %v2313, 65535
      %v3846 = vshra.s32 %v2313, 16
      %v3847 = vcvt.s32.f32 %v3845
      %v3848 = vcvt.s32.f32 %v3846
      %3849 = vmin.xlane.f32.xlu0 %v3848
      %v3850 = vpop.xlane.xlu0 %3849
      %vm3851 = vcmp.eq.f32.partialorder %v3848, %v3850
      %v3852 = vsel %vm3851, %v3847, inf
      %3853 = vmin.xlane.f32.xlu0 %v3852
      %v3854 = vpop.xlane.xlu0 %3853
      %v3855 = vcvt.f32.s32 %v3854
      %v3856 = vcvt.f32.s32 %v3850
      %v3857 = vshll.u32 %v3856, 16
      %v3858 = vadd.s32 %v3857, %v3855
      %v3859 = vand.u32 %v2314, 65535
      %v3860 = vshra.s32 %v2314, 16
      %v3861 = vcvt.s32.f32 %v3859
      %v3862 = vcvt.s32.f32 %v3860
      %3863 = vmin.xlane.f32.xlu0 %v3862
      %v3864 = vpop.xlane.xlu0 %3863
      %vm3865 = vcmp.eq.f32.partialorder %v3862, %v3864
      %v3866 = vsel %vm3865, %v3861, inf
      %3867 = vmin.xlane.f32.xlu0 %v3866
      %v3868 = vpop.xlane.xlu0 %3867
      %v3869 = vcvt.f32.s32 %v3868
      %v3870 = vcvt.f32.s32 %v3864
      %v3871 = vshll.u32 %v3870, 16
      %v3872 = vadd.s32 %v3871, %v3869
      %v3873 = vand.u32 %v2315, 65535
      %v3874 = vshra.s32 %v2315, 16
      %v3875 = vcvt.s32.f32 %v3873
      %v3876 = vcvt.s32.f32 %v3874
      %3877 = vmin.xlane.f32.xlu0 %v3876
      %v3878 = vpop.xlane.xlu0 %3877
      %vm3879 = vcmp.eq.f32.partialorder %v3876, %v3878
      %v3880 = vsel %vm3879, %v3875, inf
      %3881 = vmin.xlane.f32.xlu0 %v3880
      %v3882 = vpop.xlane.xlu0 %3881
      %v3883 = vcvt.f32.s32 %v3882
      %v3884 = vcvt.f32.s32 %v3878
      %v3885 = vshll.u32 %v3884, 16
      %v3886 = vadd.s32 %v3885, %v3883
      %v3887 = vand.u32 %v2316, 65535
      %v3888 = vshra.s32 %v2316, 16
      %v3889 = vcvt.s32.f32 %v3887
      %v3890 = vcvt.s32.f32 %v3888
      %3891 = vmin.xlane.f32.xlu0 %v3890
      %v3892 = vpop.xlane.xlu0 %3891
      %vm3893 = vcmp.eq.f32.partialorder %v3890, %v3892
      %v3894 = vsel %vm3893, %v3889, inf
      %3895 = vmin.xlane.f32.xlu0 %v3894
      %v3896 = vpop.xlane.xlu0 %3895
      %v3897 = vcvt.f32.s32 %v3896
      %v3898 = vcvt.f32.s32 %v3892
      %v3899 = vshll.u32 %v3898, 16
      %v3900 = vadd.s32 %v3899, %v3897
      %v3901 = vand.u32 %v2317, 65535
      %v3902 = vshra.s32 %v2317, 16
      %v3903 = vcvt.s32.f32 %v3901
      %v3904 = vcvt.s32.f32 %v3902
      %3905 = vmin.xlane.f32.xlu0 %v3904
      %v3906 = vpop.xlane.xlu0 %3905
      %vm3907 = vcmp.eq.f32.partialorder %v3904, %v3906
      %v3908 = vsel %vm3907, %v3903, inf
      %3909 = vmin.xlane.f32.xlu0 %v3908
      %v3910 = vpop.xlane.xlu0 %3909
      %v3911 = vcvt.f32.s32 %v3910
      %v3912 = vcvt.f32.s32 %v3906
      %v3913 = vshll.u32 %v3912, 16
      %v3914 = vadd.s32 %v3913, %v3911
      %v3915 = vand.u32 %v2318, 65535
      %v3916 = vshra.s32 %v2318, 16
      %v3917 = vcvt.s32.f32 %v3915
      %v3918 = vcvt.s32.f32 %v3916
      %3919 = vmin.xlane.f32.xlu0 %v3918
      %v3920 = vpop.xlane.xlu0 %3919
      %vm3921 = vcmp.eq.f32.partialorder %v3918, %v3920
      %v3922 = vsel %vm3921, %v3917, inf
      %3923 = vmin.xlane.f32.xlu0 %v3922
      %v3924 = vpop.xlane.xlu0 %3923
      %v3925 = vcvt.f32.s32 %v3924
      %v3926 = vcvt.f32.s32 %v3920
      %v3927 = vshll.u32 %v3926, 16
      %v3928 = vadd.s32 %v3927, %v3925
      %v3929 = vand.u32 %v2319, 65535
      %v3930 = vshra.s32 %v2319, 16
      %v3931 = vcvt.s32.f32 %v3929
      %v3932 = vcvt.s32.f32 %v3930
      %3933 = vmin.xlane.f32.xlu0 %v3932
      %v3934 = vpop.xlane.xlu0 %3933
      %vm3935 = vcmp.eq.f32.partialorder %v3932, %v3934
      %v3936 = vsel %vm3935, %v3931, inf
      %3937 = vmin.xlane.f32.xlu0 %v3936
      %v3938 = vpop.xlane.xlu0 %3937
      %v3939 = vcvt.f32.s32 %v3938
      %v3940 = vcvt.f32.s32 %v3934
      %v3941 = vshll.u32 %v3940, 16
      %v3942 = vadd.s32 %v3941, %v3939
      %v3943 = vand.u32 %v2320, 65535
      %v3944 = vshra.s32 %v2320, 16
      %v3945 = vcvt.s32.f32 %v3943
      %v3946 = vcvt.s32.f32 %v3944
      %3947 = vmin.xlane.f32.xlu0 %v3946
      %v3948 = vpop.xlane.xlu0 %3947
      %vm3949 = vcmp.eq.f32.partialorder %v3946, %v3948
      %v3950 = vsel %vm3949, %v3945, inf
      %3951 = vmin.xlane.f32.xlu0 %v3950
      %v3952 = vpop.xlane.xlu0 %3951
      %v3953 = vcvt.f32.s32 %v3952
      %v3954 = vcvt.f32.s32 %v3948
      %v3955 = vshll.u32 %v3954, 16
      %v3956 = vadd.s32 %v3955, %v3953
      %v3957 = vand.u32 %v2321, 65535
      %v3958 = vshra.s32 %v2321, 16
      %v3959 = vcvt.s32.f32 %v3957
      %v3960 = vcvt.s32.f32 %v3958
      %3961 = vmin.xlane.f32.xlu0 %v3960
      %v3962 = vpop.xlane.xlu0 %3961
      %vm3963 = vcmp.eq.f32.partialorder %v3960, %v3962
      %v3964 = vsel %vm3963, %v3959, inf
      %3965 = vmin.xlane.f32.xlu0 %v3964
      %v3966 = vpop.xlane.xlu0 %3965
      %v3967 = vcvt.f32.s32 %v3966
      %v3968 = vcvt.f32.s32 %v3962
      %v3969 = vshll.u32 %v3968, 16
      %v3970 = vadd.s32 %v3969, %v3967
      %v3971 = vand.u32 %v2322, 65535
      %v3972 = vshra.s32 %v2322, 16
      %v3973 = vcvt.s32.f32 %v3971
      %v3974 = vcvt.s32.f32 %v3972
      %3975 = vmin.xlane.f32.xlu0 %v3974
      %v3976 = vpop.xlane.xlu0 %3975
      %vm3977 = vcmp.eq.f32.partialorder %v3974, %v3976
      %v3978 = vsel %vm3977, %v3973, inf
      %3979 = vmin.xlane.f32.xlu0 %v3978
      %v3980 = vpop.xlane.xlu0 %3979
      %v3981 = vcvt.f32.s32 %v3980
      %v3982 = vcvt.f32.s32 %v3976
      %v3983 = vshll.u32 %v3982, 16
      %v3984 = vadd.s32 %v3983, %v3981
      %v3985 = vand.u32 %v2323, 65535
      %v3986 = vshra.s32 %v2323, 16
      %v3987 = vcvt.s32.f32 %v3985
      %v3988 = vcvt.s32.f32 %v3986
      %3989 = vmin.xlane.f32.xlu0 %v3988
      %v3990 = vpop.xlane.xlu0 %3989
      %vm3991 = vcmp.eq.f32.partialorder %v3988, %v3990
      %v3992 = vsel %vm3991, %v3987, inf
      %3993 = vmin.xlane.f32.xlu0 %v3992
      %v3994 = vpop.xlane.xlu0 %3993
      %v3995 = vcvt.f32.s32 %v3994
      %v3996 = vcvt.f32.s32 %v3990
      %v3997 = vshll.u32 %v3996, 16
      %v3998 = vadd.s32 %v3997, %v3995
      %v3999 = vand.u32 %v2324, 65535
      %v4000 = vshra.s32 %v2324, 16
      %v4001 = vcvt.s32.f32 %v3999
      %v4002 = vcvt.s32.f32 %v4000
      %4003 = vmin.xlane.f32.xlu0 %v4002
      %v4004 = vpop.xlane.xlu0 %4003
      %vm4005 = vcmp.eq.f32.partialorder %v4002, %v4004
      %v4006 = vsel %vm4005, %v4001, inf
      %4007 = vmin.xlane.f32.xlu0 %v4006
      %v4008 = vpop.xlane.xlu0 %4007
      %v4009 = vcvt.f32.s32 %v4008
      %v4010 = vcvt.f32.s32 %v4004
      %v4011 = vshll.u32 %v4010, 16
      %v4012 = vadd.s32 %v4011, %v4009
      %v4013 = vand.u32 %v2325, 65535
      %v4014 = vshra.s32 %v2325, 16
      %v4015 = vcvt.s32.f32 %v4013
      %v4016 = vcvt.s32.f32 %v4014
      %4017 = vmin.xlane.f32.xlu0 %v4016
      %v4018 = vpop.xlane.xlu0 %4017
      %vm4019 = vcmp.eq.f32.partialorder %v4016, %v4018
      %v4020 = vsel %vm4019, %v4015, inf
      %4021 = vmin.xlane.f32.xlu0 %v4020
      %v4022 = vpop.xlane.xlu0 %4021
      %v4023 = vcvt.f32.s32 %v4022
      %v4024 = vcvt.f32.s32 %v4018
      %v4025 = vshll.u32 %v4024, 16
      %v4026 = vadd.s32 %v4025, %v4023
      %v4027 = vand.u32 %v2326, 65535
      %v4028 = vshra.s32 %v2326, 16
      %v4029 = vcvt.s32.f32 %v4027
      %v4030 = vcvt.s32.f32 %v4028
      %4031 = vmin.xlane.f32.xlu0 %v4030
      %v4032 = vpop.xlane.xlu0 %4031
      %vm4033 = vcmp.eq.f32.partialorder %v4030, %v4032
      %v4034 = vsel %vm4033, %v4029, inf
      %4035 = vmin.xlane.f32.xlu0 %v4034
      %v4036 = vpop.xlane.xlu0 %4035
      %v4037 = vcvt.f32.s32 %v4036
      %v4038 = vcvt.f32.s32 %v4032
      %v4039 = vshll.u32 %v4038, 16
      %v4040 = vadd.s32 %v4039, %v4037
      %v4041 = vand.u32 %v2327, 65535
      %v4042 = vshra.s32 %v2327, 16
      %v4043 = vcvt.s32.f32 %v4041
      %v4044 = vcvt.s32.f32 %v4042
      %4045 = vmin.xlane.f32.xlu0 %v4044
      %v4046 = vpop.xlane.xlu0 %4045
      %vm4047 = vcmp.eq.f32.partialorder %v4044, %v4046
      %v4048 = vsel %vm4047, %v4043, inf
      %4049 = vmin.xlane.f32.xlu0 %v4048
      %v4050 = vpop.xlane.xlu0 %4049
      %v4051 = vcvt.f32.s32 %v4050
      %v4052 = vcvt.f32.s32 %v4046
      %v4053 = vshll.u32 %v4052, 16
      %v4054 = vadd.s32 %v4053, %v4051
      %v4055 = vand.u32 %v2328, 65535
      %v4056 = vshra.s32 %v2328, 16
      %v4057 = vcvt.s32.f32 %v4055
      %v4058 = vcvt.s32.f32 %v4056
      %4059 = vmin.xlane.f32.xlu0 %v4058
      %v4060 = vpop.xlane.xlu0 %4059
      %vm4061 = vcmp.eq.f32.partialorder %v4058, %v4060
      %v4062 = vsel %vm4061, %v4057, inf
      %4063 = vmin.xlane.f32.xlu0 %v4062
      %v4064 = vpop.xlane.xlu0 %4063
      %v4065 = vcvt.f32.s32 %v4064
      %v4066 = vcvt.f32.s32 %v4060
      %v4067 = vshll.u32 %v4066, 16
      %v4068 = vadd.s32 %v4067, %v4065
      %v4069 = vand.u32 %v2329, 65535
      %v4070 = vshra.s32 %v2329, 16
      %v4071 = vcvt.s32.f32 %v4069
      %v4072 = vcvt.s32.f32 %v4070
      %4073 = vmin.xlane.f32.xlu0 %v4072
      %v4074 = vpop.xlane.xlu0 %4073
      %vm4075 = vcmp.eq.f32.partialorder %v4072, %v4074
      %v4076 = vsel %vm4075, %v4071, inf
      %4077 = vmin.xlane.f32.xlu0 %v4076
      %v4078 = vpop.xlane.xlu0 %4077
      %v4079 = vcvt.f32.s32 %v4078
      %v4080 = vcvt.f32.s32 %v4074
      %v4081 = vshll.u32 %v4080, 16
      %v4082 = vadd.s32 %v4081, %v4079
      %v4083 = vand.u32 %v2330, 65535
      %v4084 = vshra.s32 %v2330, 16
      %v4085 = vcvt.s32.f32 %v4083
      %v4086 = vcvt.s32.f32 %v4084
      %4087 = vmin.xlane.f32.xlu0 %v4086
      %v4088 = vpop.xlane.xlu0 %4087
      %vm4089 = vcmp.eq.f32.partialorder %v4086, %v4088
      %v4090 = vsel %vm4089, %v4085, inf
      %4091 = vmin.xlane.f32.xlu0 %v4090
      %v4092 = vpop.xlane.xlu0 %4091
      %v4093 = vcvt.f32.s32 %v4092
      %v4094 = vcvt.f32.s32 %v4088
      %v4095 = vshll.u32 %v4094, 16
      %v4096 = vadd.s32 %v4095, %v4093
      %v4097 = vand.u32 %v2331, 65535
      %v4098 = vshra.s32 %v2331, 16
      %v4099 = vcvt.s32.f32 %v4097
      %v4100 = vcvt.s32.f32 %v4098
      %4101 = vmin.xlane.f32.xlu0 %v4100
      %v4102 = vpop.xlane.xlu0 %4101
      %vm4103 = vcmp.eq.f32.partialorder %v4100, %v4102
      %v4104 = vsel %vm4103, %v4099, inf
      %4105 = vmin.xlane.f32.xlu0 %v4104
      %v4106 = vpop.xlane.xlu0 %4105
      %v4107 = vcvt.f32.s32 %v4106
      %v4108 = vcvt.f32.s32 %v4102
      %v4109 = vshll.u32 %v4108, 16
      %v4110 = vadd.s32 %v4109, %v4107
      %v4111 = vand.u32 %v2332, 65535
      %v4112 = vshra.s32 %v2332, 16
      %v4113 = vcvt.s32.f32 %v4111
      %v4114 = vcvt.s32.f32 %v4112
      %4115 = vmin.xlane.f32.xlu0 %v4114
      %v4116 = vpop.xlane.xlu0 %4115
      %vm4117 = vcmp.eq.f32.partialorder %v4114, %v4116
      %v4118 = vsel %vm4117, %v4113, inf
      %4119 = vmin.xlane.f32.xlu0 %v4118
      %v4120 = vpop.xlane.xlu0 %4119
      %v4121 = vcvt.f32.s32 %v4120
      %v4122 = vcvt.f32.s32 %v4116
      %v4123 = vshll.u32 %v4122, 16
      %v4124 = vadd.s32 %v4123, %v4121
      %vm4125 = vcmp.eq.s32.totalorder %v1820, %v2346
      %vm4126 = vcmp.eq.s32.totalorder %v1820, %v2360
      %vm4127 = vcmp.eq.s32.totalorder %v1820, %v2374
      %vm4128 = vcmp.eq.s32.totalorder %v1820, %v2388
      %vm4129 = vcmp.eq.s32.totalorder %v1820, %v2402
      %vm4130 = vcmp.eq.s32.totalorder %v1820, %v2416
      %vm4131 = vcmp.eq.s32.totalorder %v1820, %v2430
      %vm4132 = vcmp.eq.s32.totalorder %v1820, %v2444
      %vm4133 = vcmp.eq.s32.totalorder %v1820, %v2458
      %vm4134 = vcmp.eq.s32.totalorder %v1820, %v2472
      %vm4135 = vcmp.eq.s32.totalorder %v1820, %v2486
      %vm4136 = vcmp.eq.s32.totalorder %v1820, %v2500
      %vm4137 = vcmp.eq.s32.totalorder %v1820, %v2514
      %vm4138 = vcmp.eq.s32.totalorder %v1820, %v2528
      %vm4139 = vcmp.eq.s32.totalorder %v1820, %v2542
      %vm4140 = vcmp.eq.s32.totalorder %v1820, %v2556
      %vm4141 = vcmp.eq.s32.totalorder %v1820, %v2570
      %vm4142 = vcmp.eq.s32.totalorder %v1820, %v2584
      %vm4143 = vcmp.eq.s32.totalorder %v1820, %v2598
      %vm4144 = vcmp.eq.s32.totalorder %v1820, %v2612
      %vm4145 = vcmp.eq.s32.totalorder %v1820, %v2626
      %vm4146 = vcmp.eq.s32.totalorder %v1820, %v2640
      %vm4147 = vcmp.eq.s32.totalorder %v1820, %v2654
      %vm4148 = vcmp.eq.s32.totalorder %v1820, %v2668
      %vm4149 = vcmp.eq.s32.totalorder %v1820, %v2682
      %vm4150 = vcmp.eq.s32.totalorder %v1820, %v2696
      %vm4151 = vcmp.eq.s32.totalorder %v1820, %v2710
      %vm4152 = vcmp.eq.s32.totalorder %v1820, %v2724
      %vm4153 = vcmp.eq.s32.totalorder %v1820, %v2738
      %vm4154 = vcmp.eq.s32.totalorder %v1820, %v2752
      %vm4155 = vcmp.eq.s32.totalorder %v1820, %v2766
      %vm4156 = vcmp.eq.s32.totalorder %v1820, %v2780
      %vm4157 = vcmp.eq.s32.totalorder %v1820, %v2794
      %vm4158 = vcmp.eq.s32.totalorder %v1820, %v2808
      %vm4159 = vcmp.eq.s32.totalorder %v1820, %v2822
      %vm4160 = vcmp.eq.s32.totalorder %v1820, %v2836
      %vm4161 = vcmp.eq.s32.totalorder %v1820, %v2850
      %vm4162 = vcmp.eq.s32.totalorder %v1820, %v2864
      %vm4163 = vcmp.eq.s32.totalorder %v1820, %v2878
      %vm4164 = vcmp.eq.s32.totalorder %v1820, %v2892
      %vm4165 = vcmp.eq.s32.totalorder %v1820, %v2906
      %vm4166 = vcmp.eq.s32.totalorder %v1820, %v2920
      %vm4167 = vcmp.eq.s32.totalorder %v1820, %v2934
      %vm4168 = vcmp.eq.s32.totalorder %v1820, %v2948
      %vm4169 = vcmp.eq.s32.totalorder %v1820, %v2962
      %vm4170 = vcmp.eq.s32.totalorder %v1820, %v2976
      %vm4171 = vcmp.eq.s32.totalorder %v1820, %v2990
      %vm4172 = vcmp.eq.s32.totalorder %v1820, %v3004
      %vm4173 = vcmp.eq.s32.totalorder %v1820, %v3018
      %vm4174 = vcmp.eq.s32.totalorder %v1820, %v3032
      %vm4175 = vcmp.eq.s32.totalorder %v1820, %v3046
      %vm4176 = vcmp.eq.s32.totalorder %v1820, %v3060
      %vm4177 = vcmp.eq.s32.totalorder %v1820, %v3074
      %vm4178 = vcmp.eq.s32.totalorder %v1820, %v3088
      %vm4179 = vcmp.eq.s32.totalorder %v1820, %v3102
      %vm4180 = vcmp.eq.s32.totalorder %v1820, %v3116
      %vm4181 = vcmp.eq.s32.totalorder %v1820, %v3130
      %vm4182 = vcmp.eq.s32.totalorder %v1820, %v3144
      %vm4183 = vcmp.eq.s32.totalorder %v1820, %v3158
      %vm4184 = vcmp.eq.s32.totalorder %v1820, %v3172
      %vm4185 = vcmp.eq.s32.totalorder %v1820, %v3186
      %vm4186 = vcmp.eq.s32.totalorder %v1820, %v3200
      %vm4187 = vcmp.eq.s32.totalorder %v1820, %v3214
      %vm4188 = vcmp.eq.s32.totalorder %v1820, %v3228
      %vm4189 = vcmp.eq.s32.totalorder %v1820, %v3242
      %vm4190 = vcmp.eq.s32.totalorder %v1820, %v3256
      %vm4191 = vcmp.eq.s32.totalorder %v1820, %v3270
      %vm4192 = vcmp.eq.s32.totalorder %v1820, %v3284
      %vm4193 = vcmp.eq.s32.totalorder %v1820, %v3298
      %vm4194 = vcmp.eq.s32.totalorder %v1820, %v3312
      %vm4195 = vcmp.eq.s32.totalorder %v1820, %v3326
      %vm4196 = vcmp.eq.s32.totalorder %v1820, %v3340
      %vm4197 = vcmp.eq.s32.totalorder %v1820, %v3354
      %vm4198 = vcmp.eq.s32.totalorder %v1820, %v3368
      %vm4199 = vcmp.eq.s32.totalorder %v1820, %v3382
      %vm4200 = vcmp.eq.s32.totalorder %v1820, %v3396
      %vm4201 = vcmp.eq.s32.totalorder %v1820, %v3410
      %vm4202 = vcmp.eq.s32.totalorder %v1820, %v3424
      %vm4203 = vcmp.eq.s32.totalorder %v1820, %v3438
      %vm4204 = vcmp.eq.s32.totalorder %v1820, %v3452
      %vm4205 = vcmp.eq.s32.totalorder %v1820, %v3466
      %vm4206 = vcmp.eq.s32.totalorder %v1820, %v3480
      %vm4207 = vcmp.eq.s32.totalorder %v1820, %v3494
      %vm4208 = vcmp.eq.s32.totalorder %v1820, %v3508
      %vm4209 = vcmp.eq.s32.totalorder %v1820, %v3522
      %vm4210 = vcmp.eq.s32.totalorder %v1820, %v3536
      %vm4211 = vcmp.eq.s32.totalorder %v1820, %v3550
      %vm4212 = vcmp.eq.s32.totalorder %v1820, %v3564
      %vm4213 = vcmp.eq.s32.totalorder %v1820, %v3578
      %vm4214 = vcmp.eq.s32.totalorder %v1820, %v3592
      %vm4215 = vcmp.eq.s32.totalorder %v1820, %v3606
      %vm4216 = vcmp.eq.s32.totalorder %v1820, %v3620
      %vm4217 = vcmp.eq.s32.totalorder %v1820, %v3634
      %vm4218 = vcmp.eq.s32.totalorder %v1820, %v3648
      %vm4219 = vcmp.eq.s32.totalorder %v1820, %v3662
      %vm4220 = vcmp.eq.s32.totalorder %v1820, %v3676
      %vm4221 = vcmp.eq.s32.totalorder %v1820, %v3690
      %vm4222 = vcmp.eq.s32.totalorder %v1820, %v3704
      %vm4223 = vcmp.eq.s32.totalorder %v1820, %v3718
      %vm4224 = vcmp.eq.s32.totalorder %v1820, %v3732
      %vm4225 = vcmp.eq.s32.totalorder %v1820, %v3746
      %vm4226 = vcmp.eq.s32.totalorder %v1820, %v3760
      %vm4227 = vcmp.eq.s32.totalorder %v1820, %v3774
      %vm4228 = vcmp.eq.s32.totalorder %v1820, %v3788
      %vm4229 = vcmp.eq.s32.totalorder %v1820, %v3802
      %vm4230 = vcmp.eq.s32.totalorder %v1820, %v3816
      %vm4231 = vcmp.eq.s32.totalorder %v1820, %v3830
      %vm4232 = vcmp.eq.s32.totalorder %v1820, %v3844
      %vm4233 = vcmp.eq.s32.totalorder %v1820, %v3858
      %vm4234 = vcmp.eq.s32.totalorder %v1820, %v3872
      %vm4235 = vcmp.eq.s32.totalorder %v1820, %v3886
      %vm4236 = vcmp.eq.s32.totalorder %v1820, %v3900
      %vm4237 = vcmp.eq.s32.totalorder %v1820, %v3914
      %vm4238 = vcmp.eq.s32.totalorder %v1820, %v3928
      %vm4239 = vcmp.eq.s32.totalorder %v1820, %v3942
      %vm4240 = vcmp.eq.s32.totalorder %v1820, %v3956
      %vm4241 = vcmp.eq.s32.totalorder %v1820, %v3970
      %vm4242 = vcmp.eq.s32.totalorder %v1820, %v3984
      %vm4243 = vcmp.eq.s32.totalorder %v1820, %v3998
      %vm4244 = vcmp.eq.s32.totalorder %v1820, %v4012
      %vm4245 = vcmp.eq.s32.totalorder %v1820, %v4026
      %vm4246 = vcmp.eq.s32.totalorder %v1820, %v4040
      %vm4247 = vcmp.eq.s32.totalorder %v1820, %v4054
      %vm4248 = vcmp.eq.s32.totalorder %v1820, %v4068
      %vm4249 = vcmp.eq.s32.totalorder %v1820, %v4082
      %vm4250 = vcmp.eq.s32.totalorder %v1820, %v4096
      %vm4251 = vcmp.eq.s32.totalorder %v1820, %v4110
      %vm4252 = vcmp.eq.s32.totalorder %v1820, %v4124
      %v4253 = vsel %vm4125, 1, 0
      %v4254 = vsel %vm4126, 1, 0
      %v4255 = vsel %vm4127, 1, 0
      %v4256 = vsel %vm4128, 1, 0
      %v4257 = vsel %vm4129, 1, 0
      %v4258 = vsel %vm4130, 1, 0
      %v4259 = vsel %vm4131, 1, 0
      %v4260 = vsel %vm4132, 1, 0
      %v4261 = vsel %vm4133, 1, 0
      %v4262 = vsel %vm4134, 1, 0
      %v4263 = vsel %vm4135, 1, 0
      %v4264 = vsel %vm4136, 1, 0
      %v4265 = vsel %vm4137, 1, 0
      %v4266 = vsel %vm4138, 1, 0
      %v4267 = vsel %vm4139, 1, 0
      %v4268 = vsel %vm4140, 1, 0
      %v4269 = vsel %vm4141, 1, 0
      %v4270 = vsel %vm4142, 1, 0
      %v4271 = vsel %vm4143, 1, 0
      %v4272 = vsel %vm4144, 1, 0
      %v4273 = vsel %vm4145, 1, 0
      %v4274 = vsel %vm4146, 1, 0
      %v4275 = vsel %vm4147, 1, 0
      %v4276 = vsel %vm4148, 1, 0
      %v4277 = vsel %vm4149, 1, 0
      %v4278 = vsel %vm4150, 1, 0
      %v4279 = vsel %vm4151, 1, 0
      %v4280 = vsel %vm4152, 1, 0
      %v4281 = vsel %vm4153, 1, 0
      %v4282 = vsel %vm4154, 1, 0
      %v4283 = vsel %vm4155, 1, 0
      %v4284 = vsel %vm4156, 1, 0
      %v4285 = vsel %vm4157, 1, 0
      %v4286 = vsel %vm4158, 1, 0
      %v4287 = vsel %vm4159, 1, 0
      %v4288 = vsel %vm4160, 1, 0
      %v4289 = vsel %vm4161, 1, 0
      %v4290 = vsel %vm4162, 1, 0
      %v4291 = vsel %vm4163, 1, 0
      %v4292 = vsel %vm4164, 1, 0
      %v4293 = vsel %vm4165, 1, 0
      %v4294 = vsel %vm4166, 1, 0
      %v4295 = vsel %vm4167, 1, 0
      %v4296 = vsel %vm4168, 1, 0
      %v4297 = vsel %vm4169, 1, 0
      %v4298 = vsel %vm4170, 1, 0
      %v4299 = vsel %vm4171, 1, 0
      %v4300 = vsel %vm4172, 1, 0
      %v4301 = vsel %vm4173, 1, 0
      %v4302 = vsel %vm4174, 1, 0
      %v4303 = vsel %vm4175, 1, 0
      %v4304 = vsel %vm4176, 1, 0
      %v4305 = vsel %vm4177, 1, 0
      %v4306 = vsel %vm4178, 1, 0
      %v4307 = vsel %vm4179, 1, 0
      %v4308 = vsel %vm4180, 1, 0
      %v4309 = vsel %vm4181, 1, 0
      %v4310 = vsel %vm4182, 1, 0
      %v4311 = vsel %vm4183, 1, 0
      %v4312 = vsel %vm4184, 1, 0
      %v4313 = vsel %vm4185, 1, 0
      %v4314 = vsel %vm4186, 1, 0
      %v4315 = vsel %vm4187, 1, 0
      %v4316 = vsel %vm4188, 1, 0
      %v4317 = vsel %vm4189, 1, 0
      %v4318 = vsel %vm4190, 1, 0
      %v4319 = vsel %vm4191, 1, 0
      %v4320 = vsel %vm4192, 1, 0
      %v4321 = vsel %vm4193, 1, 0
      %v4322 = vsel %vm4194, 1, 0
      %v4323 = vsel %vm4195, 1, 0
      %v4324 = vsel %vm4196, 1, 0
      %v4325 = vsel %vm4197, 1, 0
      %v4326 = vsel %vm4198, 1, 0
      %v4327 = vsel %vm4199, 1, 0
      %v4328 = vsel %vm4200, 1, 0
      %v4329 = vsel %vm4201, 1, 0
      %v4330 = vsel %vm4202, 1, 0
      %v4331 = vsel %vm4203, 1, 0
      %v4332 = vsel %vm4204, 1, 0
      %v4333 = vsel %vm4205, 1, 0
      %v4334 = vsel %vm4206, 1, 0
      %v4335 = vsel %vm4207, 1, 0
      %v4336 = vsel %vm4208, 1, 0
      %v4337 = vsel %vm4209, 1, 0
      %v4338 = vsel %vm4210, 1, 0
      %v4339 = vsel %vm4211, 1, 0
      %v4340 = vsel %vm4212, 1, 0
      %v4341 = vsel %vm4213, 1, 0
      %v4342 = vsel %vm4214, 1, 0
      %v4343 = vsel %vm4215, 1, 0
      %v4344 = vsel %vm4216, 1, 0
      %v4345 = vsel %vm4217, 1, 0
      %v4346 = vsel %vm4218, 1, 0
      %v4347 = vsel %vm4219, 1, 0
      %v4348 = vsel %vm4220, 1, 0
      %v4349 = vsel %vm4221, 1, 0
      %v4350 = vsel %vm4222, 1, 0
      %v4351 = vsel %vm4223, 1, 0
      %v4352 = vsel %vm4224, 1, 0
      %v4353 = vsel %vm4225, 1, 0
      %v4354 = vsel %vm4226, 1, 0
      %v4355 = vsel %vm4227, 1, 0
      %v4356 = vsel %vm4228, 1, 0
      %v4357 = vsel %vm4229, 1, 0
      %v4358 = vsel %vm4230, 1, 0
      %v4359 = vsel %vm4231, 1, 0
      %v4360 = vsel %vm4232, 1, 0
      %v4361 = vsel %vm4233, 1, 0
      %v4362 = vsel %vm4234, 1, 0
      %v4363 = vsel %vm4235, 1, 0
      %v4364 = vsel %vm4236, 1, 0
      %v4365 = vsel %vm4237, 1, 0
      %v4366 = vsel %vm4238, 1, 0
      %v4367 = vsel %vm4239, 1, 0
      %v4368 = vsel %vm4240, 1, 0
      %v4369 = vsel %vm4241, 1, 0
      %v4370 = vsel %vm4242, 1, 0
      %v4371 = vsel %vm4243, 1, 0
      %v4372 = vsel %vm4244, 1, 0
      %v4373 = vsel %vm4245, 1, 0
      %v4374 = vsel %vm4246, 1, 0
      %v4375 = vsel %vm4247, 1, 0
      %v4376 = vsel %vm4248, 1, 0
      %v4377 = vsel %vm4249, 1, 0
      %v4378 = vsel %vm4250, 1, 0
      %v4379 = vsel %vm4251, 1, 0
      %v4380 = vsel %vm4252, 1, 0
      %v4381 = vcvt.s32.f32 %v4253
      %v4382 = vcvt.s32.f32 %v4254
      %v4383 = vcvt.s32.f32 %v4255
      %v4384 = vcvt.s32.f32 %v4256
      %v4385 = vcvt.s32.f32 %v4257
      %v4386 = vcvt.s32.f32 %v4258
      %v4387 = vcvt.s32.f32 %v4259
      %v4388 = vcvt.s32.f32 %v4260
      %v4389 = vcvt.s32.f32 %v4261
      %v4390 = vcvt.s32.f32 %v4262
      %v4391 = vcvt.s32.f32 %v4263
      %v4392 = vcvt.s32.f32 %v4264
      %v4393 = vcvt.s32.f32 %v4265
      %v4394 = vcvt.s32.f32 %v4266
      %v4395 = vcvt.s32.f32 %v4267
      %v4396 = vcvt.s32.f32 %v4268
      %v4397 = vcvt.s32.f32 %v4269
      %v4398 = vcvt.s32.f32 %v4270
      %v4399 = vcvt.s32.f32 %v4271
      %v4400 = vcvt.s32.f32 %v4272
      %v4401 = vcvt.s32.f32 %v4273
      %v4402 = vcvt.s32.f32 %v4274
      %v4403 = vcvt.s32.f32 %v4275
      %v4404 = vcvt.s32.f32 %v4276
      %v4405 = vcvt.s32.f32 %v4277
      %v4406 = vcvt.s32.f32 %v4278
      %v4407 = vcvt.s32.f32 %v4279
      %v4408 = vcvt.s32.f32 %v4280
      %v4409 = vcvt.s32.f32 %v4281
      %v4410 = vcvt.s32.f32 %v4282
      %v4411 = vcvt.s32.f32 %v4283
      %v4412 = vcvt.s32.f32 %v4284
      %v4413 = vcvt.s32.f32 %v4285
      %v4414 = vcvt.s32.f32 %v4286
      %v4415 = vcvt.s32.f32 %v4287
      %v4416 = vcvt.s32.f32 %v4288
      %v4417 = vcvt.s32.f32 %v4289
      %v4418 = vcvt.s32.f32 %v4290
      %v4419 = vcvt.s32.f32 %v4291
      %v4420 = vcvt.s32.f32 %v4292
      %v4421 = vcvt.s32.f32 %v4293
      %v4422 = vcvt.s32.f32 %v4294
      %v4423 = vcvt.s32.f32 %v4295
      %v4424 = vcvt.s32.f32 %v4296
      %v4425 = vcvt.s32.f32 %v4297
      %v4426 = vcvt.s32.f32 %v4298
      %v4427 = vcvt.s32.f32 %v4299
      %v4428 = vcvt.s32.f32 %v4300
      %v4429 = vcvt.s32.f32 %v4301
      %v4430 = vcvt.s32.f32 %v4302
      %v4431 = vcvt.s32.f32 %v4303
      %v4432 = vcvt.s32.f32 %v4304
      %v4433 = vcvt.s32.f32 %v4305
      %v4434 = vcvt.s32.f32 %v4306
      %v4435 = vcvt.s32.f32 %v4307
      %v4436 = vcvt.s32.f32 %v4308
      %v4437 = vcvt.s32.f32 %v4309
      %v4438 = vcvt.s32.f32 %v4310
      %v4439 = vcvt.s32.f32 %v4311
      %v4440 = vcvt.s32.f32 %v4312
      %v4441 = vcvt.s32.f32 %v4313
      %v4442 = vcvt.s32.f32 %v4314
      %v4443 = vcvt.s32.f32 %v4315
      %v4444 = vcvt.s32.f32 %v4316
      %v4445 = vcvt.s32.f32 %v4317
      %v4446 = vcvt.s32.f32 %v4318
      %v4447 = vcvt.s32.f32 %v4319
      %v4448 = vcvt.s32.f32 %v4320
      %v4449 = vcvt.s32.f32 %v4321
      %v4450 = vcvt.s32.f32 %v4322
      %v4451 = vcvt.s32.f32 %v4323
      %v4452 = vcvt.s32.f32 %v4324
      %v4453 = vcvt.s32.f32 %v4325
      %v4454 = vcvt.s32.f32 %v4326
      %v4455 = vcvt.s32.f32 %v4327
      %v4456 = vcvt.s32.f32 %v4328
      %v4457 = vcvt.s32.f32 %v4329
      %v4458 = vcvt.s32.f32 %v4330
      %v4459 = vcvt.s32.f32 %v4331
      %v4460 = vcvt.s32.f32 %v4332
      %v4461 = vcvt.s32.f32 %v4333
      %v4462 = vcvt.s32.f32 %v4334
      %v4463 = vcvt.s32.f32 %v4335
      %v4464 = vcvt.s32.f32 %v4336
      %v4465 = vcvt.s32.f32 %v4337
      %v4466 = vcvt.s32.f32 %v4338
      %v4467 = vcvt.s32.f32 %v4339
      %v4468 = vcvt.s32.f32 %v4340
      %v4469 = vcvt.s32.f32 %v4341
      %v4470 = vcvt.s32.f32 %v4342
      %v4471 = vcvt.s32.f32 %v4343
      %v4472 = vcvt.s32.f32 %v4344
      %v4473 = vcvt.s32.f32 %v4345
      %v4474 = vcvt.s32.f32 %v4346
      %v4475 = vcvt.s32.f32 %v4347
      %v4476 = vcvt.s32.f32 %v4348
      %v4477 = vcvt.s32.f32 %v4349
      %v4478 = vcvt.s32.f32 %v4350
      %v4479 = vcvt.s32.f32 %v4351
      %v4480 = vcvt.s32.f32 %v4352
      %v4481 = vcvt.s32.f32 %v4353
      %v4482 = vcvt.s32.f32 %v4354
      %v4483 = vcvt.s32.f32 %v4355
      %v4484 = vcvt.s32.f32 %v4356
      %v4485 = vcvt.s32.f32 %v4357
      %v4486 = vcvt.s32.f32 %v4358
      %v4487 = vcvt.s32.f32 %v4359
      %v4488 = vcvt.s32.f32 %v4360
      %v4489 = vcvt.s32.f32 %v4361
      %v4490 = vcvt.s32.f32 %v4362
      %v4491 = vcvt.s32.f32 %v4363
      %v4492 = vcvt.s32.f32 %v4364
      %v4493 = vcvt.s32.f32 %v4365
      %v4494 = vcvt.s32.f32 %v4366
      %v4495 = vcvt.s32.f32 %v4367
      %v4496 = vcvt.s32.f32 %v4368
      %v4497 = vcvt.s32.f32 %v4369
      %v4498 = vcvt.s32.f32 %v4370
      %v4499 = vcvt.s32.f32 %v4371
      %v4500 = vcvt.s32.f32 %v4372
      %v4501 = vcvt.s32.f32 %v4373
      %v4502 = vcvt.s32.f32 %v4374
      %v4503 = vcvt.s32.f32 %v4375
      %v4504 = vcvt.s32.f32 %v4376
      %v4505 = vcvt.s32.f32 %v4377
      %v4506 = vcvt.s32.f32 %v4378
      %v4507 = vcvt.s32.f32 %v4379
      %v4508 = vcvt.s32.f32 %v4380
      %4509 = vmatprep.subr.mxu0 0.0
      %4510 = vmatpush1.msra.mxu0 %v274
      %4511 = vmatprep.subr.mxu0 0.0
      %4512 = vmatpush1.msra.mxu0 %v275
      %4513 = vmatprep.subr.mxu0 0.0
      %4514 = vmatpush1.msra.mxu0 %v276
      %4515 = vmatprep.subr.mxu0 0.0
      %4516 = vmatpush1.msra.mxu0 %v277
      %4517 = vmatprep.subr.mxu0 0.0
      %4518 = vmatpush1.msra.mxu0 %v278
      %4519 = vmatprep.subr.mxu0 0.0
      %4520 = vmatpush1.msra.mxu0 %v279
      %4521 = vmatprep.subr.mxu0 0.0
      %4522 = vmatpush1.msra.mxu0 %v280
      %4523 = vmatprep.subr.mxu0 0.0
      %4524 = vmatpush1.msra.mxu0 %v281
      %4525 = vmatprep.subr.mxu0 0.0
      %4526 = vmatpush1.msra.mxu0 %v282
      %4527 = vmatprep.subr.mxu0 0.0
      %4528 = vmatpush1.msra.mxu0 %v283
      %4529 = vmatprep.subr.mxu0 0.0
      %4530 = vmatpush1.msra.mxu0 %v284
      %4531 = vmatprep.subr.mxu0 0.0
      %4532 = vmatpush1.msra.mxu0 %v285
      %4533 = vmatprep.subr.mxu0 0.0
      %4534 = vmatpush1.msra.mxu0 %v286
      %4535 = vmatprep.subr.mxu0 0.0
      %4536 = vmatpush1.msra.mxu0 %v287
      %4537 = vmatprep.subr.mxu0 0.0
      %4538 = vmatpush1.msra.mxu0 %v288
      %4539 = vmatprep.subr.mxu0 0.0
      %4540 = vmatpush1.msra.mxu0 %v289
      %4541 = vmatprep.subr.mxu0 0.0
      %4542 = vmatpush1.msra.mxu0 0.0
      %4543 = vmatprep.subr.mxu0 0.0
      %4544 = vmatpush1.msra.mxu0 0.0
      %4545 = vmatprep.subr.mxu0 0.0
      %4546 = vmatpush1.msra.mxu0 0.0
      %4547 = vmatprep.subr.mxu0 0.0
      %4548 = vmatpush1.msra.mxu0 0.0
      %4549 = vmatprep.subr.mxu0 0.0
      %4550 = vmatpush1.msra.mxu0 0.0
      %4551 = vmatprep.subr.mxu0 0.0
      %4552 = vmatpush1.msra.mxu0 0.0
      %4553 = vmatprep.subr.mxu0 0.0
      %4554 = vmatpush1.msra.mxu0 0.0
      %4555 = vmatprep.subr.mxu0 0.0
      %4556 = vmatpush1.msra.mxu0 0.0
      %4557 = vmatprep.subr.mxu0 0.0
      %4558 = vmatpush1.msra.mxu0 0.0
      %4559 = vmatprep.subr.mxu0 0.0
      %4560 = vmatpush1.msra.mxu0 0.0
      %4561 = vmatprep.subr.mxu0 0.0
      %4562 = vmatpush1.msra.mxu0 0.0
      %4563 = vmatprep.subr.mxu0 0.0
      %4564 = vmatpush1.msra.mxu0 0.0
      %4565 = vmatprep.subr.mxu0 0.0
      %4566 = vmatpush1.msra.mxu0 0.0
      %4567 = vmatprep.subr.mxu0 0.0
      %4568 = vmatpush1.msra.mxu0 0.0
      %4569 = vmatprep.subr.mxu0 0.0
      %4570 = vmatpush1.msra.mxu0 0.0
      %4571 = vmatprep.subr.mxu0 0.0
      %4572 = vmatpush1.msra.mxu0 0.0
      %4573 = vmatprep.mubr.f32.mxu0 0.0
      %4574 = vmatmul.mubr.f32.gmra.mrb[0].mxu0 %v4381
      %v4575 = vpop.f32.mrb[0].mxu0
      %v4576 = vadd.f32 0.0, %v4575
      %v4577 = vpop.f32.mrb[0].mxu0
      %4578 = vmatprep.mubr.f32.mxu0 0.0
      %4579 = vmatmul.mubr.f32.gmra.mrb[0].mxu0 %v4382
      %v4580 = vpop.f32.mrb[0].mxu0
      %v4581 = vadd.f32 0.0, %v4580
      %v4582 = vpop.f32.mrb[0].mxu0
      %4583 = vmatprep.mubr.f32.mxu0 0.0
      %4584 = vmatmul.mubr.f32.gmra.mrb[0].mxu0 %v4383
      %v4585 = vpop.f32.mrb[0].mxu0
      %v4586 = vadd.f32 0.0, %v4585
      %v4587 = vpop.f32.mrb[0].mxu0
      %4588 = vmatprep.mubr.f32.mxu0 0.0
      %4589 = vmatmul.mubr.f32.gmra.mrb[0].mxu0 %v4384
      %v4590 = vpop.f32.mrb[0].mxu0
      %v4591 = vadd.f32 0.0, %v4590
      %v4592 = vpop.f32.mrb[0].mxu0
      %4593 = vmatprep.mubr.f32.mxu0 0.0
      %4594 = vmatmul.mubr.f32.gmra.mrb[0].mxu0 %v4385
      %v4595 = vpop.f32.mrb[0].mxu0
      %v4596 = vadd.f32 0.0, %v4595
      %v4597 = vpop.f32.mrb[0].mxu0
      %4598 = vmatprep.mubr.f32.mxu0 0.0
      %4599 = vmatmul.mubr.f32.gmra.mrb[0].mxu0 %v4386
      %v4600 = vpop.f32.mrb[0].mxu0
      %v4601 = vadd.f32 0.0, %v4600
      %v4602 = vpop.f32.mrb[0].mxu0
      %4603 = vmatprep.mubr.f32.mxu0 0.0
      %4604 = vmatmul.mubr.f32.gmra.mrb[0].mxu0 %v4387
      %v4605 = vpop.f32.mrb[0].mxu0
      %v4606 = vadd.f32 0.0, %v4605
      %v4607 = vpop.f32.mrb[0].mxu0
      %4608 = vmatprep.mubr.f32.mxu0 0.0
      %4609 = vmatmul.mubr.f32.gmra.mrb[0].mxu0 %v4388
      %v4610 = vpop.f32.mrb[0].mxu0
      %v4611 = vadd.f32 0.0, %v4610
      %v4612 = vpop.f32.mrb[0].mxu0
      %4613 = vmatprep.mubr.f32.mxu0 0.0
      %4614 = vmatmul.mubr.f32.gmra.mrb[0].mxu0 %v4389
      %v4615 = vpop.f32.mrb[0].mxu0
      %v4616 = vadd.f32 0.0, %v4615
      %v4617 = vpop.f32.mrb[0].mxu0
      %4618 = vmatprep.mubr.f32.mxu0 0.0
      %4619 = vmatmul.mubr.f32.gmra.mrb[0].mxu0 %v4390
      %v4620 = vpop.f32.mrb[0].mxu0
      %v4621 = vadd.f32 0.0, %v4620
      %v4622 = vpop.f32.mrb[0].mxu0
      %4623 = vmatprep.mubr.f32.mxu0 0.0
      %4624 = vmatmul.mubr.f32.gmra.mrb[0].mxu0 %v4391
      %v4625 = vpop.f32.mrb[0].mxu0
      %v4626 = vadd.f32 0.0, %v4625
      %v4627 = vpop.f32.mrb[0].mxu0
      %4628 = vmatprep.mubr.f32.mxu0 0.0
      %4629 = vmatmul.mubr.f32.gmra.mrb[0].mxu0 %v4392
      %v4630 = vpop.f32.mrb[0].mxu0
      %v4631 = vadd.f32 0.0, %v4630
      %v4632 = vpop.f32.mrb[0].mxu0
      %4633 = vmatprep.mubr.f32.mxu0 0.0
      %4634 = vmatmul.mubr.f32.gmra.mrb[0].mxu0 %v4393
      %v4635 = vpop.f32.mrb[0].mxu0
      %v4636 = vadd.f32 0.0, %v4635
      %v4637 = vpop.f32.mrb[0].mxu0
      %4638 = vmatprep.mubr.f32.mxu0 0.0
      %4639 = vmatmul.mubr.f32.gmra.mrb[0].mxu0 %v4394
      %v4640 = vpop.f32.mrb[0].mxu0
      %v4641 = vadd.f32 0.0, %v4640
      %v4642 = vpop.f32.mrb[0].mxu0
      %4643 = vmatprep.mubr.f32.mxu0 0.0
      %4644 = vmatmul.mubr.f32.gmra.mrb[0].mxu0 %v4395
      %v4645 = vpop.f32.mrb[0].mxu0
      %v4646 = vadd.f32 0.0, %v4645
      %v4647 = vpop.f32.mrb[0].mxu0
      %4648 = vmatprep.mubr.f32.mxu0 0.0
      %4649 = vmatmul.mubr.f32.gmra.mrb[0].mxu0 %v4396
      %v4650 = vpop.f32.mrb[0].mxu0
      %v4651 = vadd.f32 0.0, %v4650
      %v4652 = vpop.f32.mrb[0].mxu0
      %4653 = vmatprep.mubr.f32.mxu0 0.0
      %4654 = vmatmul.mubr.f32.gmra.mrb[0].mxu0 %v4397
      %v4655 = vpop.f32.mrb[0].mxu0
      %v4656 = vadd.f32 0.0, %v4655
      %v4657 = vpop.f32.mrb[0].mxu0
      %4658 = vmatprep.mubr.f32.mxu0 0.0
      %4659 = vmatmul.mubr.f32.gmra.mrb[0].mxu0 %v4398
      %v4660 = vpop.f32.mrb[0].mxu0
      %v4661 = vadd.f32 0.0, %v4660
      %v4662 = vpop.f32.mrb[0].mxu0
      %4663 = vmatprep.mubr.f32.mxu0 0.0
      %4664 = vmatmul.mubr.f32.gmra.mrb[0].mxu0 %v4399
      %v4665 = vpop.f32.mrb[0].mxu0
      %v4666 = vadd.f32 0.0, %v4665
      %v4667 = vpop.f32.mrb[0].mxu0
      %4668 = vmatprep.mubr.f32.mxu0 0.0
      %4669 = vmatmul.mubr.f32.gmra.mrb[0].mxu0 %v4400
      %v4670 = vpop.f32.mrb[0].mxu0
      %v4671 = vadd.f32 0.0, %v4670
      %v4672 = vpop.f32.mrb[0].mxu0
      %4673 = vmatprep.mubr.f32.mxu0 0.0
      %4674 = vmatmul.mubr.f32.gmra.mrb[0].mxu0 %v4401
      %v4675 = vpop.f32.mrb[0].mxu0
      %v4676 = vadd.f32 0.0, %v4675
      %v4677 = vpop.f32.mrb[0].mxu0
      %4678 = vmatprep.mubr.f32.mxu0 0.0
      %4679 = vmatmul.mubr.f32.gmra.mrb[0].mxu0 %v4402
      %v4680 = vpop.f32.mrb[0].mxu0
      %v4681 = vadd.f32 0.0, %v4680
      %v4682 = vpop.f32.mrb[0].mxu0
      %4683 = vmatprep.mubr.f32.mxu0 0.0
      %4684 = vmatmul.mubr.f32.gmra.mrb[0].mxu0 %v4403
      %v4685 = vpop.f32.mrb[0].mxu0
      %v4686 = vadd.f32 0.0, %v4685
      %v4687 = vpop.f32.mrb[0].mxu0
      %4688 = vmatprep.mubr.f32.mxu0 0.0
      %4689 = vmatmul.mubr.f32.gmra.mrb[0].mxu0 %v4404
      %v4690 = vpop.f32.mrb[0].mxu0
      %v4691 = vadd.f32 0.0, %v4690
      %v4692 = vpop.f32.mrb[0].mxu0
      %4693 = vmatprep.mubr.f32.mxu0 0.0
      %4694 = vmatmul.mubr.f32.gmra.mrb[0].mxu0 %v4405
      %v4695 = vpop.f32.mrb[0].mxu0
      %v4696 = vadd.f32 0.0, %v4695
      %v4697 = vpop.f32.mrb[0].mxu0
      %4698 = vmatprep.mubr.f32.mxu0 0.0
      %4699 = vmatmul.mubr.f32.gmra.mrb[0].mxu0 %v4406
      %v4700 = vpop.f32.mrb[0].mxu0
      %v4701 = vadd.f32 0.0, %v4700
      %v4702 = vpop.f32.mrb[0].mxu0
      %4703 = vmatprep.mubr.f32.mxu0 0.0
      %4704 = vmatmul.mubr.f32.gmra.mrb[0].mxu0 %v4407
      %v4705 = vpop.f32.mrb[0].mxu0
      %v4706 = vadd.f32 0.0, %v4705
      %v4707 = vpop.f32.mrb[0].mxu0
      %4708 = vmatprep.mubr.f32.mxu0 0.0
      %4709 = vmatmul.mubr.f32.gmra.mrb[0].mxu0 %v4408
      %v4710 = vpop.f32.mrb[0].mxu0
      %v4711 = vadd.f32 0.0, %v4710
      %v4712 = vpop.f32.mrb[0].mxu0
      %4713 = vmatprep.mubr.f32.mxu0 0.0
      %4714 = vmatmul.mubr.f32.gmra.mrb[0].mxu0 %v4409
      %v4715 = vpop.f32.mrb[0].mxu0
      %v4716 = vadd.f32 0.0, %v4715
      %v4717 = vpop.f32.mrb[0].mxu0
      %4718 = vmatprep.mubr.f32.mxu0 0.0
      %4719 = vmatmul.mubr.f32.gmra.mrb[0].mxu0 %v4410
      %v4720 = vpop.f32.mrb[0].mxu0
      %v4721 = vadd.f32 0.0, %v4720
      %v4722 = vpop.f32.mrb[0].mxu0
      %4723 = vmatprep.mubr.f32.mxu0 0.0
      %4724 = vmatmul.mubr.f32.gmra.mrb[0].mxu0 %v4411
      %v4725 = vpop.f32.mrb[0].mxu0
      %v4726 = vadd.f32 0.0, %v4725
      %v4727 = vpop.f32.mrb[0].mxu0
      %4728 = vmatprep.mubr.f32.mxu0 0.0
      %4729 = vmatmul.mubr.f32.gmra.mrb[0].mxu0 %v4412
      %v4730 = vpop.f32.mrb[0].mxu0
      %v4731 = vadd.f32 0.0, %v4730
      %v4732 = vpop.f32.mrb[0].mxu0
      %4733 = vmatprep.mubr.f32.mxu0 0.0
      %4734 = vmatmul.mubr.f32.gmra.mrb[0].mxu0 %v4413
      %v4735 = vpop.f32.mrb[0].mxu0
      %v4736 = vadd.f32 0.0, %v4735
      %v4737 = vpop.f32.mrb[0].mxu0
      %4738 = vmatprep.mubr.f32.mxu0 0.0
      %4739 = vmatmul.mubr.f32.gmra.mrb[0].mxu0 %v4414
      %v4740 = vpop.f32.mrb[0].mxu0
      %v4741 = vadd.f32 0.0, %v4740
      %v4742 = vpop.f32.mrb[0].mxu0
      %4743 = vmatprep.mubr.f32.mxu0 0.0
      %4744 = vmatmul.mubr.f32.gmra.mrb[0].mxu0 %v4415
      %v4745 = vpop.f32.mrb[0].mxu0
      %v4746 = vadd.f32 0.0, %v4745
      %v4747 = vpop.f32.mrb[0].mxu0
      %4748 = vmatprep.mubr.f32.mxu0 0.0
      %4749 = vmatmul.mubr.f32.gmra.mrb[0].mxu0 %v4416
      %v4750 = vpop.f32.mrb[0].mxu0
      %v4751 = vadd.f32 0.0, %v4750
      %v4752 = vpop.f32.mrb[0].mxu0
      %4753 = vmatprep.mubr.f32.mxu0 0.0
      %4754 = vmatmul.mubr.f32.gmra.mrb[0].mxu0 %v4417
      %v4755 = vpop.f32.mrb[0].mxu0
      %v4756 = vadd.f32 0.0, %v4755
      %v4757 = vpop.f32.mrb[0].mxu0
      %4758 = vmatprep.mubr.f32.mxu0 0.0
      %4759 = vmatmul.mubr.f32.gmra.mrb[0].mxu0 %v4418
      %v4760 = vpop.f32.mrb[0].mxu0
      %v4761 = vadd.f32 0.0, %v4760
      %v4762 = vpop.f32.mrb[0].mxu0
      %4763 = vmatprep.mubr.f32.mxu0 0.0
      %4764 = vmatmul.mubr.f32.gmra.mrb[0].mxu0 %v4419
      %v4765 = vpop.f32.mrb[0].mxu0
      %v4766 = vadd.f32 0.0, %v4765
      %v4767 = vpop.f32.mrb[0].mxu0
      %4768 = vmatprep.mubr.f32.mxu0 0.0
      %4769 = vmatmul.mubr.f32.gmra.mrb[0].mxu0 %v4420
      %v4770 = vpop.f32.mrb[0].mxu0
      %v4771 = vadd.f32 0.0, %v4770
      %v4772 = vpop.f32.mrb[0].mxu0
      %4773 = vmatprep.mubr.f32.mxu0 0.0
      %4774 = vmatmul.mubr.f32.gmra.mrb[0].mxu0 %v4421
      %v4775 = vpop.f32.mrb[0].mxu0
      %v4776 = vadd.f32 0.0, %v4775
      %v4777 = vpop.f32.mrb[0].mxu0
      %4778 = vmatprep.mubr.f32.mxu0 0.0
      %4779 = vmatmul.mubr.f32.gmra.mrb[0].mxu0 %v4422
      %v4780 = vpop.f32.mrb[0].mxu0
      %v4781 = vadd.f32 0.0, %v4780
      %v4782 = vpop.f32.mrb[0].mxu0
      %4783 = vmatprep.mubr.f32.mxu0 0.0
      %4784 = vmatmul.mubr.f32.gmra.mrb[0].mxu0 %v4423
      %v4785 = vpop.f32.mrb[0].mxu0
      %v4786 = vadd.f32 0.0, %v4785
      %v4787 = vpop.f32.mrb[0].mxu0
      %4788 = vmatprep.mubr.f32.mxu0 0.0
      %4789 = vmatmul.mubr.f32.gmra.mrb[0].mxu0 %v4424
      %v4790 = vpop.f32.mrb[0].mxu0
      %v4791 = vadd.f32 0.0, %v4790
      %v4792 = vpop.f32.mrb[0].mxu0
      %4793 = vmatprep.mubr.f32.mxu0 0.0
      %4794 = vmatmul.mubr.f32.gmra.mrb[0].mxu0 %v4425
      %v4795 = vpop.f32.mrb[0].mxu0
      %v4796 = vadd.f32 0.0, %v4795
      %v4797 = vpop.f32.mrb[0].mxu0
      %4798 = vmatprep.mubr.f32.mxu0 0.0
      %4799 = vmatmul.mubr.f32.gmra.mrb[0].mxu0 %v4426
      %v4800 = vpop.f32.mrb[0].mxu0
      %v4801 = vadd.f32 0.0, %v4800
      %v4802 = vpop.f32.mrb[0].mxu0
      %4803 = vmatprep.mubr.f32.mxu0 0.0
      %4804 = vmatmul.mubr.f32.gmra.mrb[0].mxu0 %v4427
      %v4805 = vpop.f32.mrb[0].mxu0
      %v4806 = vadd.f32 0.0, %v4805
      %v4807 = vpop.f32.mrb[0].mxu0
      %4808 = vmatprep.mubr.f32.mxu0 0.0
      %4809 = vmatmul.mubr.f32.gmra.mrb[0].mxu0 %v4428
      %v4810 = vpop.f32.mrb[0].mxu0
      %v4811 = vadd.f32 0.0, %v4810
      %v4812 = vpop.f32.mrb[0].mxu0
      %4813 = vmatprep.mubr.f32.mxu0 0.0
      %4814 = vmatmul.mubr.f32.gmra.mrb[0].mxu0 %v4429
      %v4815 = vpop.f32.mrb[0].mxu0
      %v4816 = vadd.f32 0.0, %v4815
      %v4817 = vpop.f32.mrb[0].mxu0
      %4818 = vmatprep.mubr.f32.mxu0 0.0
      %4819 = vmatmul.mubr.f32.gmra.mrb[0].mxu0 %v4430
      %v4820 = vpop.f32.mrb[0].mxu0
      %v4821 = vadd.f32 0.0, %v4820
      %v4822 = vpop.f32.mrb[0].mxu0
      %4823 = vmatprep.mubr.f32.mxu0 0.0
      %4824 = vmatmul.mubr.f32.gmra.mrb[0].mxu0 %v4431
      %v4825 = vpop.f32.mrb[0].mxu0
      %v4826 = vadd.f32 0.0, %v4825
      %v4827 = vpop.f32.mrb[0].mxu0
      %4828 = vmatprep.mubr.f32.mxu0 0.0
      %4829 = vmatmul.mubr.f32.gmra.mrb[0].mxu0 %v4432
      %v4830 = vpop.f32.mrb[0].mxu0
      %v4831 = vadd.f32 0.0, %v4830
      %v4832 = vpop.f32.mrb[0].mxu0
      %4833 = vmatprep.mubr.f32.mxu0 0.0
      %4834 = vmatmul.mubr.f32.gmra.mrb[0].mxu0 %v4433
      %v4835 = vpop.f32.mrb[0].mxu0
      %v4836 = vadd.f32 0.0, %v4835
      %v4837 = vpop.f32.mrb[0].mxu0
      %4838 = vmatprep.mubr.f32.mxu0 0.0
      %4839 = vmatmul.mubr.f32.gmra.mrb[0].mxu0 %v4434
      %v4840 = vpop.f32.mrb[0].mxu0
      %v4841 = vadd.f32 0.0, %v4840
      %v4842 = vpop.f32.mrb[0].mxu0
      %4843 = vmatprep.mubr.f32.mxu0 0.0
      %4844 = vmatmul.mubr.f32.gmra.mrb[0].mxu0 %v4435
      %v4845 = vpop.f32.mrb[0].mxu0
      %v4846 = vadd.f32 0.0, %v4845
      %v4847 = vpop.f32.mrb[0].mxu0
      %4848 = vmatprep.mubr.f32.mxu0 0.0
      %4849 = vmatmul.mubr.f32.gmra.mrb[0].mxu0 %v4436
      %v4850 = vpop.f32.mrb[0].mxu0
      %v4851 = vadd.f32 0.0, %v4850
      %v4852 = vpop.f32.mrb[0].mxu0
      %4853 = vmatprep.mubr.f32.mxu0 0.0
      %4854 = vmatmul.mubr.f32.gmra.mrb[0].mxu0 %v4437
      %v4855 = vpop.f32.mrb[0].mxu0
      %v4856 = vadd.f32 0.0, %v4855
      %v4857 = vpop.f32.mrb[0].mxu0
      %4858 = vmatprep.mubr.f32.mxu0 0.0
      %4859 = vmatmul.mubr.f32.gmra.mrb[0].mxu0 %v4438
      %v4860 = vpop.f32.mrb[0].mxu0
      %v4861 = vadd.f32 0.0, %v4860
      %v4862 = vpop.f32.mrb[0].mxu0
      %4863 = vmatprep.mubr.f32.mxu0 0.0
      %4864 = vmatmul.mubr.f32.gmra.mrb[0].mxu0 %v4439
      %v4865 = vpop.f32.mrb[0].mxu0
      %v4866 = vadd.f32 0.0, %v4865
      %v4867 = vpop.f32.mrb[0].mxu0
      %4868 = vmatprep.mubr.f32.mxu0 0.0
      %4869 = vmatmul.mubr.f32.gmra.mrb[0].mxu0 %v4440
      %v4870 = vpop.f32.mrb[0].mxu0
      %v4871 = vadd.f32 0.0, %v4870
      %v4872 = vpop.f32.mrb[0].mxu0
      %4873 = vmatprep.mubr.f32.mxu0 0.0
      %4874 = vmatmul.mubr.f32.gmra.mrb[0].mxu0 %v4441
      %v4875 = vpop.f32.mrb[0].mxu0
      %v4876 = vadd.f32 0.0, %v4875
      %v4877 = vpop.f32.mrb[0].mxu0
      %4878 = vmatprep.mubr.f32.mxu0 0.0
      %4879 = vmatmul.mubr.f32.gmra.mrb[0].mxu0 %v4442
      %v4880 = vpop.f32.mrb[0].mxu0
      %v4881 = vadd.f32 0.0, %v4880
      %v4882 = vpop.f32.mrb[0].mxu0
      %4883 = vmatprep.mubr.f32.mxu0 0.0
      %4884 = vmatmul.mubr.f32.gmra.mrb[0].mxu0 %v4443
      %v4885 = vpop.f32.mrb[0].mxu0
      %v4886 = vadd.f32 0.0, %v4885
      %v4887 = vpop.f32.mrb[0].mxu0
      %4888 = vmatprep.mubr.f32.mxu0 0.0
      %4889 = vmatmul.mubr.f32.gmra.mrb[0].mxu0 %v4444
      %v4890 = vpop.f32.mrb[0].mxu0
      %v4891 = vadd.f32 0.0, %v4890
      %v4892 = vpop.f32.mrb[0].mxu0
      %4893 = vmatprep.mubr.f32.mxu0 0.0
      %4894 = vmatmul.mubr.f32.gmra.mrb[0].mxu0 %v4445
      %v4895 = vpop.f32.mrb[0].mxu0
      %v4896 = vadd.f32 0.0, %v4895
      %v4897 = vpop.f32.mrb[0].mxu0
      %4898 = vmatprep.mubr.f32.mxu0 0.0
      %4899 = vmatmul.mubr.f32.gmra.mrb[0].mxu0 %v4446
      %v4900 = vpop.f32.mrb[0].mxu0
      %v4901 = vadd.f32 0.0, %v4900
      %v4902 = vpop.f32.mrb[0].mxu0
      %4903 = vmatprep.mubr.f32.mxu0 0.0
      %4904 = vmatmul.mubr.f32.gmra.mrb[0].mxu0 %v4447
      %v4905 = vpop.f32.mrb[0].mxu0
      %v4906 = vadd.f32 0.0, %v4905
      %v4907 = vpop.f32.mrb[0].mxu0
      %4908 = vmatprep.mubr.f32.mxu0 0.0
      %4909 = vmatmul.mubr.f32.gmra.mrb[0].mxu0 %v4448
      %v4910 = vpop.f32.mrb[0].mxu0
      %v4911 = vadd.f32 0.0, %v4910
      %v4912 = vpop.f32.mrb[0].mxu0
      %4913 = vmatprep.mubr.f32.mxu0 0.0
      %4914 = vmatmul.mubr.f32.gmra.mrb[0].mxu0 %v4449
      %v4915 = vpop.f32.mrb[0].mxu0
      %v4916 = vadd.f32 0.0, %v4915
      %v4917 = vpop.f32.mrb[0].mxu0
      %4918 = vmatprep.mubr.f32.mxu0 0.0
      %4919 = vmatmul.mubr.f32.gmra.mrb[0].mxu0 %v4450
      %v4920 = vpop.f32.mrb[0].mxu0
      %v4921 = vadd.f32 0.0, %v4920
      %v4922 = vpop.f32.mrb[0].mxu0
      %4923 = vmatprep.mubr.f32.mxu0 0.0
      %4924 = vmatmul.mubr.f32.gmra.mrb[0].mxu0 %v4451
      %v4925 = vpop.f32.mrb[0].mxu0
      %v4926 = vadd.f32 0.0, %v4925
      %v4927 = vpop.f32.mrb[0].mxu0
      %4928 = vmatprep.mubr.f32.mxu0 0.0
      %4929 = vmatmul.mubr.f32.gmra.mrb[0].mxu0 %v4452
      %v4930 = vpop.f32.mrb[0].mxu0
      %v4931 = vadd.f32 0.0, %v4930
      %v4932 = vpop.f32.mrb[0].mxu0
      %4933 = vmatprep.mubr.f32.mxu0 0.0
      %4934 = vmatmul.mubr.f32.gmra.mrb[0].mxu0 %v4453
      %v4935 = vpop.f32.mrb[0].mxu0
      %v4936 = vadd.f32 0.0, %v4935
      %v4937 = vpop.f32.mrb[0].mxu0
      %4938 = vmatprep.mubr.f32.mxu0 0.0
      %4939 = vmatmul.mubr.f32.gmra.mrb[0].mxu0 %v4454
      %v4940 = vpop.f32.mrb[0].mxu0
      %v4941 = vadd.f32 0.0, %v4940
      %v4942 = vpop.f32.mrb[0].mxu0
      %4943 = vmatprep.mubr.f32.mxu0 0.0
      %4944 = vmatmul.mubr.f32.gmra.mrb[0].mxu0 %v4455
      %v4945 = vpop.f32.mrb[0].mxu0
      %v4946 = vadd.f32 0.0, %v4945
      %v4947 = vpop.f32.mrb[0].mxu0
      %4948 = vmatprep.mubr.f32.mxu0 0.0
      %4949 = vmatmul.mubr.f32.gmra.mrb[0].mxu0 %v4456
      %v4950 = vpop.f32.mrb[0].mxu0
      %v4951 = vadd.f32 0.0, %v4950
      %v4952 = vpop.f32.mrb[0].mxu0
      %4953 = vmatprep.mubr.f32.mxu0 0.0
      %4954 = vmatmul.mubr.f32.gmra.mrb[0].mxu0 %v4457
      %v4955 = vpop.f32.mrb[0].mxu0
      %v4956 = vadd.f32 0.0, %v4955
      %v4957 = vpop.f32.mrb[0].mxu0
      %4958 = vmatprep.mubr.f32.mxu0 0.0
      %4959 = vmatmul.mubr.f32.gmra.mrb[0].mxu0 %v4458
      %v4960 = vpop.f32.mrb[0].mxu0
      %v4961 = vadd.f32 0.0, %v4960
      %v4962 = vpop.f32.mrb[0].mxu0
      %4963 = vmatprep.mubr.f32.mxu0 0.0
      %4964 = vmatmul.mubr.f32.gmra.mrb[0].mxu0 %v4459
      %v4965 = vpop.f32.mrb[0].mxu0
      %v4966 = vadd.f32 0.0, %v4965
      %v4967 = vpop.f32.mrb[0].mxu0
      %4968 = vmatprep.mubr.f32.mxu0 0.0
      %4969 = vmatmul.mubr.f32.gmra.mrb[0].mxu0 %v4460
      %v4970 = vpop.f32.mrb[0].mxu0
      %v4971 = vadd.f32 0.0, %v4970
      %v4972 = vpop.f32.mrb[0].mxu0
      %4973 = vmatprep.mubr.f32.mxu0 0.0
      %4974 = vmatmul.mubr.f32.gmra.mrb[0].mxu0 %v4461
      %v4975 = vpop.f32.mrb[0].mxu0
      %v4976 = vadd.f32 0.0, %v4975
      %v4977 = vpop.f32.mrb[0].mxu0
      %4978 = vmatprep.mubr.f32.mxu0 0.0
      %4979 = vmatmul.mubr.f32.gmra.mrb[0].mxu0 %v4462
      %v4980 = vpop.f32.mrb[0].mxu0
      %v4981 = vadd.f32 0.0, %v4980
      %v4982 = vpop.f32.mrb[0].mxu0
      %4983 = vmatprep.mubr.f32.mxu0 0.0
      %4984 = vmatmul.mubr.f32.gmra.mrb[0].mxu0 %v4463
      %v4985 = vpop.f32.mrb[0].mxu0
      %v4986 = vadd.f32 0.0, %v4985
      %v4987 = vpop.f32.mrb[0].mxu0
      %4988 = vmatprep.mubr.f32.mxu0 0.0
      %4989 = vmatmul.mubr.f32.gmra.mrb[0].mxu0 %v4464
      %v4990 = vpop.f32.mrb[0].mxu0
      %v4991 = vadd.f32 0.0, %v4990
      %v4992 = vpop.f32.mrb[0].mxu0
      %4993 = vmatprep.mubr.f32.mxu0 0.0
      %4994 = vmatmul.mubr.f32.gmra.mrb[0].mxu0 %v4465
      %v4995 = vpop.f32.mrb[0].mxu0
      %v4996 = vadd.f32 0.0, %v4995
      %v4997 = vpop.f32.mrb[0].mxu0
      %4998 = vmatprep.mubr.f32.mxu0 0.0
      %4999 = vmatmul.mubr.f32.gmra.mrb[0].mxu0 %v4466
      %v5000 = vpop.f32.mrb[0].mxu0
      %v5001 = vadd.f32 0.0, %v5000
      %v5002 = vpop.f32.mrb[0].mxu0
      %5003 = vmatprep.mubr.f32.mxu0 0.0
      %5004 = vmatmul.mubr.f32.gmra.mrb[0].mxu0 %v4467
      %v5005 = vpop.f32.mrb[0].mxu0
      %v5006 = vadd.f32 0.0, %v5005
      %v5007 = vpop.f32.mrb[0].mxu0
      %5008 = vmatprep.mubr.f32.mxu0 0.0
      %5009 = vmatmul.mubr.f32.gmra.mrb[0].mxu0 %v4468
      %v5010 = vpop.f32.mrb[0].mxu0
      %v5011 = vadd.f32 0.0, %v5010
      %v5012 = vpop.f32.mrb[0].mxu0
      %5013 = vmatprep.mubr.f32.mxu0 0.0
      %5014 = vmatmul.mubr.f32.gmra.mrb[0].mxu0 %v4469
      %v5015 = vpop.f32.mrb[0].mxu0
      %v5016 = vadd.f32 0.0, %v5015
      %v5017 = vpop.f32.mrb[0].mxu0
      %5018 = vmatprep.mubr.f32.mxu0 0.0
      %5019 = vmatmul.mubr.f32.gmra.mrb[0].mxu0 %v4470
      %v5020 = vpop.f32.mrb[0].mxu0
      %v5021 = vadd.f32 0.0, %v5020
      %v5022 = vpop.f32.mrb[0].mxu0
      %5023 = vmatprep.mubr.f32.mxu0 0.0
      %5024 = vmatmul.mubr.f32.gmra.mrb[0].mxu0 %v4471
      %v5025 = vpop.f32.mrb[0].mxu0
      %v5026 = vadd.f32 0.0, %v5025
      %v5027 = vpop.f32.mrb[0].mxu0
      %5028 = vmatprep.mubr.f32.mxu0 0.0
      %5029 = vmatmul.mubr.f32.gmra.mrb[0].mxu0 %v4472
      %v5030 = vpop.f32.mrb[0].mxu0
      %v5031 = vadd.f32 0.0, %v5030
      %v5032 = vpop.f32.mrb[0].mxu0
      %5033 = vmatprep.mubr.f32.mxu0 0.0
      %5034 = vmatmul.mubr.f32.gmra.mrb[0].mxu0 %v4473
      %v5035 = vpop.f32.mrb[0].mxu0
      %v5036 = vadd.f32 0.0, %v5035
      %v5037 = vpop.f32.mrb[0].mxu0
      %5038 = vmatprep.mubr.f32.mxu0 0.0
      %5039 = vmatmul.mubr.f32.gmra.mrb[0].mxu0 %v4474
      %v5040 = vpop.f32.mrb[0].mxu0
      %v5041 = vadd.f32 0.0, %v5040
      %v5042 = vpop.f32.mrb[0].mxu0
      %5043 = vmatprep.mubr.f32.mxu0 0.0
      %5044 = vmatmul.mubr.f32.gmra.mrb[0].mxu0 %v4475
      %v5045 = vpop.f32.mrb[0].mxu0
      %v5046 = vadd.f32 0.0, %v5045
      %v5047 = vpop.f32.mrb[0].mxu0
      %5048 = vmatprep.mubr.f32.mxu0 0.0
      %5049 = vmatmul.mubr.f32.gmra.mrb[0].mxu0 %v4476
      %v5050 = vpop.f32.mrb[0].mxu0
      %v5051 = vadd.f32 0.0, %v5050
      %v5052 = vpop.f32.mrb[0].mxu0
      %5053 = vmatprep.mubr.f32.mxu0 0.0
      %5054 = vmatmul.mubr.f32.gmra.mrb[0].mxu0 %v4477
      %v5055 = vpop.f32.mrb[0].mxu0
      %v5056 = vadd.f32 0.0, %v5055
      %v5057 = vpop.f32.mrb[0].mxu0
      %5058 = vmatprep.mubr.f32.mxu0 0.0
      %5059 = vmatmul.mubr.f32.gmra.mrb[0].mxu0 %v4478
      %v5060 = vpop.f32.mrb[0].mxu0
      %v5061 = vadd.f32 0.0, %v5060
      %v5062 = vpop.f32.mrb[0].mxu0
      %5063 = vmatprep.mubr.f32.mxu0 0.0
      %5064 = vmatmul.mubr.f32.gmra.mrb[0].mxu0 %v4479
      %v5065 = vpop.f32.mrb[0].mxu0
      %v5066 = vadd.f32 0.0, %v5065
      %v5067 = vpop.f32.mrb[0].mxu0
      %5068 = vmatprep.mubr.f32.mxu0 0.0
      %5069 = vmatmul.mubr.f32.gmra.mrb[0].mxu0 %v4480
      %v5070 = vpop.f32.mrb[0].mxu0
      %v5071 = vadd.f32 0.0, %v5070
      %v5072 = vpop.f32.mrb[0].mxu0
      %5073 = vmatprep.mubr.f32.mxu0 0.0
      %5074 = vmatmul.mubr.f32.gmra.mrb[0].mxu0 %v4481
      %v5075 = vpop.f32.mrb[0].mxu0
      %v5076 = vadd.f32 0.0, %v5075
      %v5077 = vpop.f32.mrb[0].mxu0
      %5078 = vmatprep.mubr.f32.mxu0 0.0
      %5079 = vmatmul.mubr.f32.gmra.mrb[0].mxu0 %v4482
      %v5080 = vpop.f32.mrb[0].mxu0
      %v5081 = vadd.f32 0.0, %v5080
      %v5082 = vpop.f32.mrb[0].mxu0
      %5083 = vmatprep.mubr.f32.mxu0 0.0
      %5084 = vmatmul.mubr.f32.gmra.mrb[0].mxu0 %v4483
      %v5085 = vpop.f32.mrb[0].mxu0
      %v5086 = vadd.f32 0.0, %v5085
      %v5087 = vpop.f32.mrb[0].mxu0
      %5088 = vmatprep.mubr.f32.mxu0 0.0
      %5089 = vmatmul.mubr.f32.gmra.mrb[0].mxu0 %v4484
      %v5090 = vpop.f32.mrb[0].mxu0
      %v5091 = vadd.f32 0.0, %v5090
      %v5092 = vpop.f32.mrb[0].mxu0
      %5093 = vmatprep.mubr.f32.mxu0 0.0
      %5094 = vmatmul.mubr.f32.gmra.mrb[0].mxu0 %v4485
      %v5095 = vpop.f32.mrb[0].mxu0
      %v5096 = vadd.f32 0.0, %v5095
      %v5097 = vpop.f32.mrb[0].mxu0
      %5098 = vmatprep.mubr.f32.mxu0 0.0
      %5099 = vmatmul.mubr.f32.gmra.mrb[0].mxu0 %v4486
      %v5100 = vpop.f32.mrb[0].mxu0
      %v5101 = vadd.f32 0.0, %v5100
      %v5102 = vpop.f32.mrb[0].mxu0
      %5103 = vmatprep.mubr.f32.mxu0 0.0
      %5104 = vmatmul.mubr.f32.gmra.mrb[0].mxu0 %v4487
      %v5105 = vpop.f32.mrb[0].mxu0
      %v5106 = vadd.f32 0.0, %v5105
      %v5107 = vpop.f32.mrb[0].mxu0
      %5108 = vmatprep.mubr.f32.mxu0 0.0
      %5109 = vmatmul.mubr.f32.gmra.mrb[0].mxu0 %v4488
      %v5110 = vpop.f32.mrb[0].mxu0
      %v5111 = vadd.f32 0.0, %v5110
      %v5112 = vpop.f32.mrb[0].mxu0
      %5113 = vmatprep.mubr.f32.mxu0 0.0
      %5114 = vmatmul.mubr.f32.gmra.mrb[0].mxu0 %v4489
      %v5115 = vpop.f32.mrb[0].mxu0
      %v5116 = vadd.f32 0.0, %v5115
      %v5117 = vpop.f32.mrb[0].mxu0
      %5118 = vmatprep.mubr.f32.mxu0 0.0
      %5119 = vmatmul.mubr.f32.gmra.mrb[0].mxu0 %v4490
      %v5120 = vpop.f32.mrb[0].mxu0
      %v5121 = vadd.f32 0.0, %v5120
      %v5122 = vpop.f32.mrb[0].mxu0
      %5123 = vmatprep.mubr.f32.mxu0 0.0
      %5124 = vmatmul.mubr.f32.gmra.mrb[0].mxu0 %v4491
      %v5125 = vpop.f32.mrb[0].mxu0
      %v5126 = vadd.f32 0.0, %v5125
      %v5127 = vpop.f32.mrb[0].mxu0
      %5128 = vmatprep.mubr.f32.mxu0 0.0
      %5129 = vmatmul.mubr.f32.gmra.mrb[0].mxu0 %v4492
      %v5130 = vpop.f32.mrb[0].mxu0
      %v5131 = vadd.f32 0.0, %v5130
      %v5132 = vpop.f32.mrb[0].mxu0
      %5133 = vmatprep.mubr.f32.mxu0 0.0
      %5134 = vmatmul.mubr.f32.gmra.mrb[0].mxu0 %v4493
      %v5135 = vpop.f32.mrb[0].mxu0
      %v5136 = vadd.f32 0.0, %v5135
      %v5137 = vpop.f32.mrb[0].mxu0
      %5138 = vmatprep.mubr.f32.mxu0 0.0
      %5139 = vmatmul.mubr.f32.gmra.mrb[0].mxu0 %v4494
      %v5140 = vpop.f32.mrb[0].mxu0
      %v5141 = vadd.f32 0.0, %v5140
      %v5142 = vpop.f32.mrb[0].mxu0
      %5143 = vmatprep.mubr.f32.mxu0 0.0
      %5144 = vmatmul.mubr.f32.gmra.mrb[0].mxu0 %v4495
      %v5145 = vpop.f32.mrb[0].mxu0
      %v5146 = vadd.f32 0.0, %v5145
      %v5147 = vpop.f32.mrb[0].mxu0
      %5148 = vmatprep.mubr.f32.mxu0 0.0
      %5149 = vmatmul.mubr.f32.gmra.mrb[0].mxu0 %v4496
      %v5150 = vpop.f32.mrb[0].mxu0
      %v5151 = vadd.f32 0.0, %v5150
      %v5152 = vpop.f32.mrb[0].mxu0
      %5153 = vmatprep.mubr.f32.mxu0 0.0
      %5154 = vmatmul.mubr.f32.gmra.mrb[0].mxu0 %v4497
      %v5155 = vpop.f32.mrb[0].mxu0
      %v5156 = vadd.f32 0.0, %v5155
      %v5157 = vpop.f32.mrb[0].mxu0
      %5158 = vmatprep.mubr.f32.mxu0 0.0
      %5159 = vmatmul.mubr.f32.gmra.mrb[0].mxu0 %v4498
      %v5160 = vpop.f32.mrb[0].mxu0
      %v5161 = vadd.f32 0.0, %v5160
      %v5162 = vpop.f32.mrb[0].mxu0
      %5163 = vmatprep.mubr.f32.mxu0 0.0
      %5164 = vmatmul.mubr.f32.gmra.mrb[0].mxu0 %v4499
      %v5165 = vpop.f32.mrb[0].mxu0
      %v5166 = vadd.f32 0.0, %v5165
      %v5167 = vpop.f32.mrb[0].mxu0
      %5168 = vmatprep.mubr.f32.mxu0 0.0
      %5169 = vmatmul.mubr.f32.gmra.mrb[0].mxu0 %v4500
      %v5170 = vpop.f32.mrb[0].mxu0
      %v5171 = vadd.f32 0.0, %v5170
      %v5172 = vpop.f32.mrb[0].mxu0
      %5173 = vmatprep.mubr.f32.mxu0 0.0
      %5174 = vmatmul.mubr.f32.gmra.mrb[0].mxu0 %v4501
      %v5175 = vpop.f32.mrb[0].mxu0
      %v5176 = vadd.f32 0.0, %v5175
      %v5177 = vpop.f32.mrb[0].mxu0
      %5178 = vmatprep.mubr.f32.mxu0 0.0
      %5179 = vmatmul.mubr.f32.gmra.mrb[0].mxu0 %v4502
      %v5180 = vpop.f32.mrb[0].mxu0
      %v5181 = vadd.f32 0.0, %v5180
      %v5182 = vpop.f32.mrb[0].mxu0
      %5183 = vmatprep.mubr.f32.mxu0 0.0
      %5184 = vmatmul.mubr.f32.gmra.mrb[0].mxu0 %v4503
      %v5185 = vpop.f32.mrb[0].mxu0
      %v5186 = vadd.f32 0.0, %v5185
      %v5187 = vpop.f32.mrb[0].mxu0
      %5188 = vmatprep.mubr.f32.mxu0 0.0
      %5189 = vmatmul.mubr.f32.gmra.mrb[0].mxu0 %v4504
      %v5190 = vpop.f32.mrb[0].mxu0
      %v5191 = vadd.f32 0.0, %v5190
      %v5192 = vpop.f32.mrb[0].mxu0
      %5193 = vmatprep.mubr.f32.mxu0 0.0
      %5194 = vmatmul.mubr.f32.gmra.mrb[0].mxu0 %v4505
      %v5195 = vpop.f32.mrb[0].mxu0
      %v5196 = vadd.f32 0.0, %v5195
      %v5197 = vpop.f32.mrb[0].mxu0
      %5198 = vmatprep.mubr.f32.mxu0 0.0
      %5199 = vmatmul.mubr.f32.gmra.mrb[0].mxu0 %v4506
      %v5200 = vpop.f32.mrb[0].mxu0
      %v5201 = vadd.f32 0.0, %v5200
      %v5202 = vpop.f32.mrb[0].mxu0
      %5203 = vmatprep.mubr.f32.mxu0 0.0
      %5204 = vmatmul.mubr.f32.gmra.mrb[0].mxu0 %v4507
      %v5205 = vpop.f32.mrb[0].mxu0
      %v5206 = vadd.f32 0.0, %v5205
      %v5207 = vpop.f32.mrb[0].mxu0
      %5208 = vmatprep.mubr.f32.mxu0 0.0
      %5209 = vmatmul.mubr.f32.gmra.mrb[0].mxu0 %v4508
      %v5210 = vpop.f32.mrb[0].mxu0
      %v5211 = vadd.f32 0.0, %v5210
      %v5212 = vpop.f32.mrb[0].mxu0
      %5213 = vdwg.mxu0
      %v5214 = vsub.f32 %v210, %v4576
      %v5215 = vsub.f32 %v211, %v4581
      %v5216 = vsub.f32 %v212, %v4586
      %v5217 = vsub.f32 %v213, %v4591
      %v5218 = vsub.f32 %v214, %v4596
      %v5219 = vsub.f32 %v215, %v4601
      %v5220 = vsub.f32 %v216, %v4606
      %v5221 = vsub.f32 %v217, %v4611
      %v5222 = vsub.f32 %v218, %v4616
      %v5223 = vsub.f32 %v219, %v4621
      %v5224 = vsub.f32 %v220, %v4626
      %v5225 = vsub.f32 %v221, %v4631
      %v5226 = vsub.f32 %v222, %v4636
      %v5227 = vsub.f32 %v223, %v4641
      %v5228 = vsub.f32 %v224, %v4646
      %v5229 = vsub.f32 %v225, %v4651
      %v5230 = vsub.f32 %v226, %v4656
      %v5231 = vsub.f32 %v227, %v4661
      %v5232 = vsub.f32 %v228, %v4666
      %v5233 = vsub.f32 %v229, %v4671
      %v5234 = vsub.f32 %v230, %v4676
      %v5235 = vsub.f32 %v231, %v4681
      %v5236 = vsub.f32 %v232, %v4686
      %v5237 = vsub.f32 %v233, %v4691
      %v5238 = vsub.f32 %v234, %v4696
      %v5239 = vsub.f32 %v235, %v4701
      %v5240 = vsub.f32 %v236, %v4706
      %v5241 = vsub.f32 %v237, %v4711
      %v5242 = vsub.f32 %v238, %v4716
      %v5243 = vsub.f32 %v239, %v4721
      %v5244 = vsub.f32 %v240, %v4726
      %v5245 = vsub.f32 %v241, %v4731
      %v5246 = vsub.f32 %v242, %v4736
      %v5247 = vsub.f32 %v243, %v4741
      %v5248 = vsub.f32 %v244, %v4746
      %v5249 = vsub.f32 %v245, %v4751
      %v5250 = vsub.f32 %v246, %v4756
      %v5251 = vsub.f32 %v247, %v4761
      %v5252 = vsub.f32 %v248, %v4766
      %v5253 = vsub.f32 %v249, %v4771
      %v5254 = vsub.f32 %v250, %v4776
      %v5255 = vsub.f32 %v251, %v4781
      %v5256 = vsub.f32 %v252, %v4786
      %v5257 = vsub.f32 %v253, %v4791
      %v5258 = vsub.f32 %v254, %v4796
      %v5259 = vsub.f32 %v255, %v4801
      %v5260 = vsub.f32 %v256, %v4806
      %v5261 = vsub.f32 %v257, %v4811
      %v5262 = vsub.f32 %v258, %v4816
      %v5263 = vsub.f32 %v259, %v4821
      %v5264 = vsub.f32 %v260, %v4826
      %v5265 = vsub.f32 %v261, %v4831
      %v5266 = vsub.f32 %v262, %v4836
      %v5267 = vsub.f32 %v263, %v4841
      %v5268 = vsub.f32 %v264, %v4846
      %v5269 = vsub.f32 %v265, %v4851
      %v5270 = vsub.f32 %v266, %v4856
      %v5271 = vsub.f32 %v267, %v4861
      %v5272 = vsub.f32 %v268, %v4866
      %v5273 = vsub.f32 %v269, %v4871
      %v5274 = vsub.f32 %v270, %v4876
      %v5275 = vsub.f32 %v271, %v4881
      %v5276 = vsub.f32 %v272, %v4886
      %v5277 = vsub.f32 %v273, %v4891
      %v5278 = vsub.f32 %v356, %v4896
      %v5279 = vsub.f32 %v358, %v4901
      %v5280 = vsub.f32 %v360, %v4906
      %v5281 = vsub.f32 %v362, %v4911
      %v5282 = vsub.f32 %v364, %v4916
      %v5283 = vsub.f32 %v366, %v4921
      %v5284 = vsub.f32 %v368, %v4926
      %v5285 = vsub.f32 %v370, %v4931
      %v5286 = vsub.f32 %v372, %v4936
      %v5287 = vsub.f32 %v374, %v4941
      %v5288 = vsub.f32 %v376, %v4946
      %v5289 = vsub.f32 %v378, %v4951
      %v5290 = vsub.f32 %v380, %v4956
      %v5291 = vsub.f32 %v382, %v4961
      %v5292 = vsub.f32 %v384, %v4966
      %v5293 = vsub.f32 %v386, %v4971
      %v5294 = vsub.f32 %v388, %v4976
      %v5295 = vsub.f32 %v390, %v4981
      %v5296 = vsub.f32 %v392, %v4986
      %v5297 = vsub.f32 %v394, %v4991
      %v5298 = vsub.f32 %v396, %v4996
      %v5299 = vsub.f32 %v398, %v5001
      %v5300 = vsub.f32 %v400, %v5006
      %v5301 = vsub.f32 %v402, %v5011
      %v5302 = vsub.f32 %v404, %v5016
      %v5303 = vsub.f32 %v406, %v5021
      %v5304 = vsub.f32 %v408, %v5026
      %v5305 = vsub.f32 %v410, %v5031
      %v5306 = vsub.f32 %v412, %v5036
      %v5307 = vsub.f32 %v414, %v5041
      %v5308 = vsub.f32 %v416, %v5046
      %v5309 = vsub.f32 %v418, %v5051
      %v5310 = vsub.f32 %v420, %v5056
      %v5311 = vsub.f32 %v422, %v5061
      %v5312 = vsub.f32 %v424, %v5066
      %v5313 = vsub.f32 %v426, %v5071
      %v5314 = vsub.f32 %v428, %v5076
      %v5315 = vsub.f32 %v430, %v5081
      %v5316 = vsub.f32 %v432, %v5086
      %v5317 = vsub.f32 %v434, %v5091
      %v5318 = vsub.f32 %v436, %v5096
      %v5319 = vsub.f32 %v438, %v5101
      %v5320 = vsub.f32 %v440, %v5106
      %v5321 = vsub.f32 %v442, %v5111
      %v5322 = vsub.f32 %v444, %v5116
      %v5323 = vsub.f32 %v446, %v5121
      %v5324 = vsub.f32 %v448, %v5126
      %v5325 = vsub.f32 %v450, %v5131
      %v5326 = vsub.f32 %v452, %v5136
      %v5327 = vsub.f32 %v454, %v5141
      %v5328 = vsub.f32 %v456, %v5146
      %v5329 = vsub.f32 %v458, %v5151
      %v5330 = vsub.f32 %v460, %v5156
      %v5331 = vsub.f32 %v462, %v5161
      %v5332 = vsub.f32 %v464, %v5166
      %v5333 = vsub.f32 %v466, %v5171
      %v5334 = vsub.f32 %v468, %v5176
      %v5335 = vsub.f32 %v470, %v5181
      %v5336 = vsub.f32 %v472, %v5186
      %v5337 = vsub.f32 %v474, %v5191
      %v5338 = vsub.f32 %v476, %v5196
      %v5339 = vsub.f32 %v478, %v5201
      %v5340 = vsub.f32 %v480, %v5206
      %v5341 = vsub.f32 %v482, %v5211
      %v5342 = vmul.f32 %v5214, %v5214
      %v5343 = vmul.f32 %v5215, %v5215
      %v5344 = vmul.f32 %v5216, %v5216
      %v5345 = vmul.f32 %v5217, %v5217
      %v5346 = vmul.f32 %v5218, %v5218
      %v5347 = vmul.f32 %v5219, %v5219
      %v5348 = vmul.f32 %v5220, %v5220
      %v5349 = vmul.f32 %v5221, %v5221
      %v5350 = vmul.f32 %v5222, %v5222
      %v5351 = vmul.f32 %v5223, %v5223
      %v5352 = vmul.f32 %v5224, %v5224
      %v5353 = vmul.f32 %v5225, %v5225
      %v5354 = vmul.f32 %v5226, %v5226
      %v5355 = vmul.f32 %v5227, %v5227
      %v5356 = vmul.f32 %v5228, %v5228
      %v5357 = vmul.f32 %v5229, %v5229
      %v5358 = vmul.f32 %v5230, %v5230
      %v5359 = vmul.f32 %v5231, %v5231
      %v5360 = vmul.f32 %v5232, %v5232
      %v5361 = vmul.f32 %v5233, %v5233
      %v5362 = vmul.f32 %v5234, %v5234
      %v5363 = vmul.f32 %v5235, %v5235
      %v5364 = vmul.f32 %v5236, %v5236
      %v5365 = vmul.f32 %v5237, %v5237
      %v5366 = vmul.f32 %v5238, %v5238
      %v5367 = vmul.f32 %v5239, %v5239
      %v5368 = vmul.f32 %v5240, %v5240
      %v5369 = vmul.f32 %v5241, %v5241
      %v5370 = vmul.f32 %v5242, %v5242
      %v5371 = vmul.f32 %v5243, %v5243
      %v5372 = vmul.f32 %v5244, %v5244
      %v5373 = vmul.f32 %v5245, %v5245
      %v5374 = vmul.f32 %v5246, %v5246
      %v5375 = vmul.f32 %v5247, %v5247
      %v5376 = vmul.f32 %v5248, %v5248
      %v5377 = vmul.f32 %v5249, %v5249
      %v5378 = vmul.f32 %v5250, %v5250
      %v5379 = vmul.f32 %v5251, %v5251
      %v5380 = vmul.f32 %v5252, %v5252
      %v5381 = vmul.f32 %v5253, %v5253
      %v5382 = vmul.f32 %v5254, %v5254
      %v5383 = vmul.f32 %v5255, %v5255
      %v5384 = vmul.f32 %v5256, %v5256
      %v5385 = vmul.f32 %v5257, %v5257
      %v5386 = vmul.f32 %v5258, %v5258
      %v5387 = vmul.f32 %v5259, %v5259
      %v5388 = vmul.f32 %v5260, %v5260
      %v5389 = vmul.f32 %v5261, %v5261
      %v5390 = vmul.f32 %v5262, %v5262
      %v5391 = vmul.f32 %v5263, %v5263
      %v5392 = vmul.f32 %v5264, %v5264
      %v5393 = vmul.f32 %v5265, %v5265
      %v5394 = vmul.f32 %v5266, %v5266
      %v5395 = vmul.f32 %v5267, %v5267
      %v5396 = vmul.f32 %v5268, %v5268
      %v5397 = vmul.f32 %v5269, %v5269
      %v5398 = vmul.f32 %v5270, %v5270
      %v5399 = vmul.f32 %v5271, %v5271
      %v5400 = vmul.f32 %v5272, %v5272
      %v5401 = vmul.f32 %v5273, %v5273
      %v5402 = vmul.f32 %v5274, %v5274
      %v5403 = vmul.f32 %v5275, %v5275
      %v5404 = vmul.f32 %v5276, %v5276
      %v5405 = vmul.f32 %v5277, %v5277
      %v5406 = vmul.f32 %v5278, %v5278
      %v5407 = vmul.f32 %v5279, %v5279
      %v5408 = vmul.f32 %v5280, %v5280
      %v5409 = vmul.f32 %v5281, %v5281
      %v5410 = vmul.f32 %v5282, %v5282
      %v5411 = vmul.f32 %v5283, %v5283
      %v5412 = vmul.f32 %v5284, %v5284
      %v5413 = vmul.f32 %v5285, %v5285
      %v5414 = vmul.f32 %v5286, %v5286
      %v5415 = vmul.f32 %v5287, %v5287
      %v5416 = vmul.f32 %v5288, %v5288
      %v5417 = vmul.f32 %v5289, %v5289
      %v5418 = vmul.f32 %v5290, %v5290
      %v5419 = vmul.f32 %v5291, %v5291
      %v5420 = vmul.f32 %v5292, %v5292
      %v5421 = vmul.f32 %v5293, %v5293
      %v5422 = vmul.f32 %v5294, %v5294
      %v5423 = vmul.f32 %v5295, %v5295
      %v5424 = vmul.f32 %v5296, %v5296
      %v5425 = vmul.f32 %v5297, %v5297
      %v5426 = vmul.f32 %v5298, %v5298
      %v5427 = vmul.f32 %v5299, %v5299
      %v5428 = vmul.f32 %v5300, %v5300
      %v5429 = vmul.f32 %v5301, %v5301
      %v5430 = vmul.f32 %v5302, %v5302
      %v5431 = vmul.f32 %v5303, %v5303
      %v5432 = vmul.f32 %v5304, %v5304
      %v5433 = vmul.f32 %v5305, %v5305
      %v5434 = vmul.f32 %v5306, %v5306
      %v5435 = vmul.f32 %v5307, %v5307
      %v5436 = vmul.f32 %v5308, %v5308
      %v5437 = vmul.f32 %v5309, %v5309
      %v5438 = vmul.f32 %v5310, %v5310
      %v5439 = vmul.f32 %v5311, %v5311
      %v5440 = vmul.f32 %v5312, %v5312
      %v5441 = vmul.f32 %v5313, %v5313
      %v5442 = vmul.f32 %v5314, %v5314
      %v5443 = vmul.f32 %v5315, %v5315
      %v5444 = vmul.f32 %v5316, %v5316
      %v5445 = vmul.f32 %v5317, %v5317
      %v5446 = vmul.f32 %v5318, %v5318
      %v5447 = vmul.f32 %v5319, %v5319
      %v5448 = vmul.f32 %v5320, %v5320
      %v5449 = vmul.f32 %v5321, %v5321
      %v5450 = vmul.f32 %v5322, %v5322
      %v5451 = vmul.f32 %v5323, %v5323
      %v5452 = vmul.f32 %v5324, %v5324
      %v5453 = vmul.f32 %v5325, %v5325
      %v5454 = vmul.f32 %v5326, %v5326
      %v5455 = vmul.f32 %v5327, %v5327
      %v5456 = vmul.f32 %v5328, %v5328
      %v5457 = vmul.f32 %v5329, %v5329
      %v5458 = vmul.f32 %v5330, %v5330
      %v5459 = vmul.f32 %v5331, %v5331
      %v5460 = vmul.f32 %v5332, %v5332
      %v5461 = vmul.f32 %v5333, %v5333
      %v5462 = vmul.f32 %v5334, %v5334
      %v5463 = vmul.f32 %v5335, %v5335
      %v5464 = vmul.f32 %v5336, %v5336
      %v5465 = vmul.f32 %v5337, %v5337
      %v5466 = vmul.f32 %v5338, %v5338
      %v5467 = vmul.f32 %v5339, %v5339
      %v5468 = vmul.f32 %v5340, %v5340
      %v5469 = vmul.f32 %v5341, %v5341
      %v5470 = vsel %vm547, %v5342, 0.0
      %v5471 = vsel %vm547, %v5343, 0.0
      %v5472 = vadd.f32 %v5470, %v5471
      %v5473 = vsel %vm547, %v5344, 0.0
      %v5474 = vadd.f32 %v5472, %v5473
      %v5475 = vsel %vm547, %v5345, 0.0
      %v5476 = vadd.f32 %v5474, %v5475
      %v5477 = vsel %vm547, %v5346, 0.0
      %v5478 = vadd.f32 %v5476, %v5477
      %v5479 = vsel %vm547, %v5347, 0.0
      %v5480 = vadd.f32 %v5478, %v5479
      %v5481 = vsel %vm547, %v5348, 0.0
      %v5482 = vadd.f32 %v5480, %v5481
      %v5483 = vsel %vm547, %v5349, 0.0
      %v5484 = vadd.f32 %v5482, %v5483
      %v5485 = vsel %vm547, %v5350, 0.0
      %v5486 = vadd.f32 %v5484, %v5485
      %v5487 = vsel %vm547, %v5351, 0.0
      %v5488 = vadd.f32 %v5486, %v5487
      %v5489 = vsel %vm547, %v5352, 0.0
      %v5490 = vadd.f32 %v5488, %v5489
      %v5491 = vsel %vm547, %v5353, 0.0
      %v5492 = vadd.f32 %v5490, %v5491
      %v5493 = vsel %vm547, %v5354, 0.0
      %v5494 = vadd.f32 %v5492, %v5493
      %v5495 = vsel %vm547, %v5355, 0.0
      %v5496 = vadd.f32 %v5494, %v5495
      %v5497 = vsel %vm547, %v5356, 0.0
      %v5498 = vadd.f32 %v5496, %v5497
      %v5499 = vsel %vm547, %v5357, 0.0
      %v5500 = vadd.f32 %v5498, %v5499
      %v5501 = vsel %vm547, %v5358, 0.0
      %v5502 = vadd.f32 %v5500, %v5501
      %v5503 = vsel %vm547, %v5359, 0.0
      %v5504 = vadd.f32 %v5502, %v5503
      %v5505 = vsel %vm547, %v5360, 0.0
      %v5506 = vadd.f32 %v5504, %v5505
      %v5507 = vsel %vm547, %v5361, 0.0
      %v5508 = vadd.f32 %v5506, %v5507
      %v5509 = vsel %vm547, %v5362, 0.0
      %v5510 = vadd.f32 %v5508, %v5509
      %v5511 = vsel %vm547, %v5363, 0.0
      %v5512 = vadd.f32 %v5510, %v5511
      %v5513 = vsel %vm547, %v5364, 0.0
      %v5514 = vadd.f32 %v5512, %v5513
      %v5515 = vsel %vm547, %v5365, 0.0
      %v5516 = vadd.f32 %v5514, %v5515
      %v5517 = vsel %vm547, %v5366, 0.0
      %v5518 = vadd.f32 %v5516, %v5517
      %v5519 = vsel %vm547, %v5367, 0.0
      %v5520 = vadd.f32 %v5518, %v5519
      %v5521 = vsel %vm547, %v5368, 0.0
      %v5522 = vadd.f32 %v5520, %v5521
      %v5523 = vsel %vm547, %v5369, 0.0
      %v5524 = vadd.f32 %v5522, %v5523
      %v5525 = vsel %vm547, %v5370, 0.0
      %v5526 = vadd.f32 %v5524, %v5525
      %v5527 = vsel %vm547, %v5371, 0.0
      %v5528 = vadd.f32 %v5526, %v5527
      %v5529 = vsel %vm547, %v5372, 0.0
      %v5530 = vadd.f32 %v5528, %v5529
      %v5531 = vsel %vm547, %v5373, 0.0
      %v5532 = vadd.f32 %v5530, %v5531
      %v5533 = vsel %vm547, %v5374, 0.0
      %v5534 = vadd.f32 %v5532, %v5533
      %v5535 = vsel %vm547, %v5375, 0.0
      %v5536 = vadd.f32 %v5534, %v5535
      %v5537 = vsel %vm547, %v5376, 0.0
      %v5538 = vadd.f32 %v5536, %v5537
      %v5539 = vsel %vm547, %v5377, 0.0
      %v5540 = vadd.f32 %v5538, %v5539
      %v5541 = vsel %vm547, %v5378, 0.0
      %v5542 = vadd.f32 %v5540, %v5541
      %v5543 = vsel %vm547, %v5379, 0.0
      %v5544 = vadd.f32 %v5542, %v5543
      %v5545 = vsel %vm547, %v5380, 0.0
      %v5546 = vadd.f32 %v5544, %v5545
      %v5547 = vsel %vm547, %v5381, 0.0
      %v5548 = vadd.f32 %v5546, %v5547
      %v5549 = vsel %vm547, %v5382, 0.0
      %v5550 = vadd.f32 %v5548, %v5549
      %v5551 = vsel %vm547, %v5383, 0.0
      %v5552 = vadd.f32 %v5550, %v5551
      %v5553 = vsel %vm547, %v5384, 0.0
      %v5554 = vadd.f32 %v5552, %v5553
      %v5555 = vsel %vm547, %v5385, 0.0
      %v5556 = vadd.f32 %v5554, %v5555
      %v5557 = vsel %vm547, %v5386, 0.0
      %v5558 = vadd.f32 %v5556, %v5557
      %v5559 = vsel %vm547, %v5387, 0.0
      %v5560 = vadd.f32 %v5558, %v5559
      %v5561 = vsel %vm547, %v5388, 0.0
      %v5562 = vadd.f32 %v5560, %v5561
      %v5563 = vsel %vm547, %v5389, 0.0
      %v5564 = vadd.f32 %v5562, %v5563
      %v5565 = vsel %vm547, %v5390, 0.0
      %v5566 = vadd.f32 %v5564, %v5565
      %v5567 = vsel %vm547, %v5391, 0.0
      %v5568 = vadd.f32 %v5566, %v5567
      %v5569 = vsel %vm547, %v5392, 0.0
      %v5570 = vadd.f32 %v5568, %v5569
      %v5571 = vsel %vm547, %v5393, 0.0
      %v5572 = vadd.f32 %v5570, %v5571
      %v5573 = vsel %vm547, %v5394, 0.0
      %v5574 = vadd.f32 %v5572, %v5573
      %v5575 = vsel %vm547, %v5395, 0.0
      %v5576 = vadd.f32 %v5574, %v5575
      %v5577 = vsel %vm547, %v5396, 0.0
      %v5578 = vadd.f32 %v5576, %v5577
      %v5579 = vsel %vm547, %v5397, 0.0
      %v5580 = vadd.f32 %v5578, %v5579
      %v5581 = vsel %vm547, %v5398, 0.0
      %v5582 = vadd.f32 %v5580, %v5581
      %v5583 = vsel %vm547, %v5399, 0.0
      %v5584 = vadd.f32 %v5582, %v5583
      %v5585 = vsel %vm547, %v5400, 0.0
      %v5586 = vadd.f32 %v5584, %v5585
      %v5587 = vsel %vm547, %v5401, 0.0
      %v5588 = vadd.f32 %v5586, %v5587
      %v5589 = vsel %vm547, %v5402, 0.0
      %v5590 = vadd.f32 %v5588, %v5589
      %v5591 = vsel %vm547, %v5403, 0.0
      %v5592 = vadd.f32 %v5590, %v5591
      %v5593 = vsel %vm547, %v5404, 0.0
      %v5594 = vadd.f32 %v5592, %v5593
      %v5595 = vsel %vm547, %v5405, 0.0
      %v5596 = vadd.f32 %v5594, %v5595
      %v5597 = vsel %vm547, %v5406, 0.0
      %v5598 = vadd.f32 %v5596, %v5597
      %v5599 = vsel %vm547, %v5407, 0.0
      %v5600 = vadd.f32 %v5598, %v5599
      %v5601 = vsel %vm547, %v5408, 0.0
      %v5602 = vadd.f32 %v5600, %v5601
      %v5603 = vsel %vm547, %v5409, 0.0
      %v5604 = vadd.f32 %v5602, %v5603
      %v5605 = vsel %vm547, %v5410, 0.0
      %v5606 = vadd.f32 %v5604, %v5605
      %v5607 = vsel %vm547, %v5411, 0.0
      %v5608 = vadd.f32 %v5606, %v5607
      %v5609 = vsel %vm547, %v5412, 0.0
      %v5610 = vadd.f32 %v5608, %v5609
      %v5611 = vsel %vm547, %v5413, 0.0
      %v5612 = vadd.f32 %v5610, %v5611
      %v5613 = vsel %vm547, %v5414, 0.0
      %v5614 = vadd.f32 %v5612, %v5613
      %v5615 = vsel %vm547, %v5415, 0.0
      %v5616 = vadd.f32 %v5614, %v5615
      %v5617 = vsel %vm547, %v5416, 0.0
      %v5618 = vadd.f32 %v5616, %v5617
      %v5619 = vsel %vm547, %v5417, 0.0
      %v5620 = vadd.f32 %v5618, %v5619
      %v5621 = vsel %vm547, %v5418, 0.0
      %v5622 = vadd.f32 %v5620, %v5621
      %v5623 = vsel %vm547, %v5419, 0.0
      %v5624 = vadd.f32 %v5622, %v5623
      %v5625 = vsel %vm547, %v5420, 0.0
      %v5626 = vadd.f32 %v5624, %v5625
      %v5627 = vsel %vm547, %v5421, 0.0
      %v5628 = vadd.f32 %v5626, %v5627
      %v5629 = vsel %vm547, %v5422, 0.0
      %v5630 = vadd.f32 %v5628, %v5629
      %v5631 = vsel %vm547, %v5423, 0.0
      %v5632 = vadd.f32 %v5630, %v5631
      %v5633 = vsel %vm547, %v5424, 0.0
      %v5634 = vadd.f32 %v5632, %v5633
      %v5635 = vsel %vm547, %v5425, 0.0
      %v5636 = vadd.f32 %v5634, %v5635
      %v5637 = vsel %vm547, %v5426, 0.0
      %v5638 = vadd.f32 %v5636, %v5637
      %v5639 = vsel %vm547, %v5427, 0.0
      %v5640 = vadd.f32 %v5638, %v5639
      %v5641 = vsel %vm547, %v5428, 0.0
      %v5642 = vadd.f32 %v5640, %v5641
      %v5643 = vsel %vm547, %v5429, 0.0
      %v5644 = vadd.f32 %v5642, %v5643
      %v5645 = vsel %vm547, %v5430, 0.0
      %v5646 = vadd.f32 %v5644, %v5645
      %v5647 = vsel %vm547, %v5431, 0.0
      %v5648 = vadd.f32 %v5646, %v5647
      %v5649 = vsel %vm547, %v5432, 0.0
      %v5650 = vadd.f32 %v5648, %v5649
      %v5651 = vsel %vm547, %v5433, 0.0
      %v5652 = vadd.f32 %v5650, %v5651
      %v5653 = vsel %vm547, %v5434, 0.0
      %v5654 = vadd.f32 %v5652, %v5653
      %v5655 = vsel %vm547, %v5435, 0.0
      %v5656 = vadd.f32 %v5654, %v5655
      %v5657 = vsel %vm547, %v5436, 0.0
      %v5658 = vadd.f32 %v5656, %v5657
      %v5659 = vsel %vm547, %v5437, 0.0
      %v5660 = vadd.f32 %v5658, %v5659
      %v5661 = vsel %vm547, %v5438, 0.0
      %v5662 = vadd.f32 %v5660, %v5661
      %v5663 = vsel %vm547, %v5439, 0.0
      %v5664 = vadd.f32 %v5662, %v5663
      %v5665 = vsel %vm547, %v5440, 0.0
      %v5666 = vadd.f32 %v5664, %v5665
      %v5667 = vsel %vm547, %v5441, 0.0
      %v5668 = vadd.f32 %v5666, %v5667
      %v5669 = vsel %vm547, %v5442, 0.0
      %v5670 = vadd.f32 %v5668, %v5669
      %v5671 = vsel %vm547, %v5443, 0.0
      %v5672 = vadd.f32 %v5670, %v5671
      %v5673 = vsel %vm547, %v5444, 0.0
      %v5674 = vadd.f32 %v5672, %v5673
      %v5675 = vsel %vm547, %v5445, 0.0
      %v5676 = vadd.f32 %v5674, %v5675
      %v5677 = vsel %vm547, %v5446, 0.0
      %v5678 = vadd.f32 %v5676, %v5677
      %v5679 = vsel %vm547, %v5447, 0.0
      %v5680 = vadd.f32 %v5678, %v5679
      %v5681 = vsel %vm547, %v5448, 0.0
      %v5682 = vadd.f32 %v5680, %v5681
      %v5683 = vsel %vm547, %v5449, 0.0
      %v5684 = vadd.f32 %v5682, %v5683
      %v5685 = vsel %vm547, %v5450, 0.0
      %v5686 = vadd.f32 %v5684, %v5685
      %v5687 = vsel %vm547, %v5451, 0.0
      %v5688 = vadd.f32 %v5686, %v5687
      %v5689 = vsel %vm547, %v5452, 0.0
      %v5690 = vadd.f32 %v5688, %v5689
      %v5691 = vsel %vm547, %v5453, 0.0
      %v5692 = vadd.f32 %v5690, %v5691
      %v5693 = vsel %vm547, %v5454, 0.0
      %v5694 = vadd.f32 %v5692, %v5693
      %v5695 = vsel %vm547, %v5455, 0.0
      %v5696 = vadd.f32 %v5694, %v5695
      %v5697 = vsel %vm547, %v5456, 0.0
      %v5698 = vadd.f32 %v5696, %v5697
      %v5699 = vsel %vm547, %v5457, 0.0
      %v5700 = vadd.f32 %v5698, %v5699
      %v5701 = vsel %vm547, %v5458, 0.0
      %v5702 = vadd.f32 %v5700, %v5701
      %v5703 = vsel %vm547, %v5459, 0.0
      %v5704 = vadd.f32 %v5702, %v5703
      %v5705 = vsel %vm547, %v5460, 0.0
      %v5706 = vadd.f32 %v5704, %v5705
      %v5707 = vsel %vm547, %v5461, 0.0
      %v5708 = vadd.f32 %v5706, %v5707
      %v5709 = vsel %vm547, %v5462, 0.0
      %v5710 = vadd.f32 %v5708, %v5709
      %v5711 = vsel %vm547, %v5463, 0.0
      %v5712 = vadd.f32 %v5710, %v5711
      %v5713 = vsel %vm547, %v5464, 0.0
      %v5714 = vadd.f32 %v5712, %v5713
      %v5715 = vsel %vm547, %v5465, 0.0
      %v5716 = vadd.f32 %v5714, %v5715
      %v5717 = vsel %vm547, %v5466, 0.0
      %v5718 = vadd.f32 %v5716, %v5717
      %v5719 = vsel %vm547, %v5467, 0.0
      %v5720 = vadd.f32 %v5718, %v5719
      %v5721 = vsel %vm547, %v5468, 0.0
      %v5722 = vadd.f32 %v5720, %v5721
      %v5723 = vsel %vm547, %v5469, 0.0
      %v5724 = vadd.f32 %v5722, %v5723
      %5725 = vadd.xlane.f32.xlu0 %v5724
      %v5726 = vpop.xlane.xlu0 %5725
      %v5727 = vrot.slane %v5726, 4
      %v5728 = vadd.f32 %v5726, %v5727
      %v5729 = vrot.slane %v5728, 2
      %v5730 = vadd.f32 %v5728, %v5729
      %v5731 = vrot.slane %v5730, 1
      %v5732 = vadd.f32 %v5730, %v5731
      %s5733 = vtos %v5732
      %v5734 = vstv %s5733
      %5735 = vst [vmem:[%s209] sm:$0x1] %v5734
      %5800 = vrot.lane.b32.xlu0 %v4896, 64
      %v5801 = vpop.permute.xlu0 %5800
      %5802 = vrot.lane.b32.xlu0 %v4901, 64
      %v5803 = vpop.permute.xlu0 %5802
      %5804 = vrot.lane.b32.xlu0 %v4906, 64
      %v5805 = vpop.permute.xlu0 %5804
      %5806 = vrot.lane.b32.xlu0 %v4911, 64
      %v5807 = vpop.permute.xlu0 %5806
      %5808 = vrot.lane.b32.xlu0 %v4916, 64
      %v5809 = vpop.permute.xlu0 %5808
      %5810 = vrot.lane.b32.xlu0 %v4921, 64
      %v5811 = vpop.permute.xlu0 %5810
      %5812 = vrot.lane.b32.xlu0 %v4926, 64
      %v5813 = vpop.permute.xlu0 %5812
      %5814 = vrot.lane.b32.xlu0 %v4931, 64
      %v5815 = vpop.permute.xlu0 %5814
      %5816 = vrot.lane.b32.xlu0 %v4936, 64
      %v5817 = vpop.permute.xlu0 %5816
      %5818 = vrot.lane.b32.xlu0 %v4941, 64
      %v5819 = vpop.permute.xlu0 %5818
      %5820 = vrot.lane.b32.xlu0 %v4946, 64
      %v5821 = vpop.permute.xlu0 %5820
      %5822 = vrot.lane.b32.xlu0 %v4951, 64
      %v5823 = vpop.permute.xlu0 %5822
      %5824 = vrot.lane.b32.xlu0 %v4956, 64
      %v5825 = vpop.permute.xlu0 %5824
      %5826 = vrot.lane.b32.xlu0 %v4961, 64
      %v5827 = vpop.permute.xlu0 %5826
      %5828 = vrot.lane.b32.xlu0 %v4966, 64
      %v5829 = vpop.permute.xlu0 %5828
      %5830 = vrot.lane.b32.xlu0 %v4971, 64
      %v5831 = vpop.permute.xlu0 %5830
      %5832 = vrot.lane.b32.xlu0 %v4976, 64
      %v5833 = vpop.permute.xlu0 %5832
      %5834 = vrot.lane.b32.xlu0 %v4981, 64
      %v5835 = vpop.permute.xlu0 %5834
      %5836 = vrot.lane.b32.xlu0 %v4986, 64
      %v5837 = vpop.permute.xlu0 %5836
      %5838 = vrot.lane.b32.xlu0 %v4991, 64
      %v5839 = vpop.permute.xlu0 %5838
      %5840 = vrot.lane.b32.xlu0 %v4996, 64
      %v5841 = vpop.permute.xlu0 %5840
      %5842 = vrot.lane.b32.xlu0 %v5001, 64
      %v5843 = vpop.permute.xlu0 %5842
      %5844 = vrot.lane.b32.xlu0 %v5006, 64
      %v5845 = vpop.permute.xlu0 %5844
      %5846 = vrot.lane.b32.xlu0 %v5011, 64
      %v5847 = vpop.permute.xlu0 %5846
      %5848 = vrot.lane.b32.xlu0 %v5016, 64
      %v5849 = vpop.permute.xlu0 %5848
      %5850 = vrot.lane.b32.xlu0 %v5021, 64
      %v5851 = vpop.permute.xlu0 %5850
      %5852 = vrot.lane.b32.xlu0 %v5026, 64
      %v5853 = vpop.permute.xlu0 %5852
      %5854 = vrot.lane.b32.xlu0 %v5031, 64
      %v5855 = vpop.permute.xlu0 %5854
      %5856 = vrot.lane.b32.xlu0 %v5036, 64
      %v5857 = vpop.permute.xlu0 %5856
      %5858 = vrot.lane.b32.xlu0 %v5041, 64
      %v5859 = vpop.permute.xlu0 %5858
      %5860 = vrot.lane.b32.xlu0 %v5046, 64
      %v5861 = vpop.permute.xlu0 %5860
      %5862 = vrot.lane.b32.xlu0 %v5051, 64
      %v5863 = vpop.permute.xlu0 %5862
      %5864 = vrot.lane.b32.xlu0 %v5056, 64
      %v5865 = vpop.permute.xlu0 %5864
      %5866 = vrot.lane.b32.xlu0 %v5061, 64
      %v5867 = vpop.permute.xlu0 %5866
      %5868 = vrot.lane.b32.xlu0 %v5066, 64
      %v5869 = vpop.permute.xlu0 %5868
      %5870 = vrot.lane.b32.xlu0 %v5071, 64
      %v5871 = vpop.permute.xlu0 %5870
      %5872 = vrot.lane.b32.xlu0 %v5076, 64
      %v5873 = vpop.permute.xlu0 %5872
      %5874 = vrot.lane.b32.xlu0 %v5081, 64
      %v5875 = vpop.permute.xlu0 %5874
      %5876 = vrot.lane.b32.xlu0 %v5086, 64
      %v5877 = vpop.permute.xlu0 %5876
      %5878 = vrot.lane.b32.xlu0 %v5091, 64
      %v5879 = vpop.permute.xlu0 %5878
      %5880 = vrot.lane.b32.xlu0 %v5096, 64
      %v5881 = vpop.permute.xlu0 %5880
      %5882 = vrot.lane.b32.xlu0 %v5101, 64
      %v5883 = vpop.permute.xlu0 %5882
      %5884 = vrot.lane.b32.xlu0 %v5106, 64
      %v5885 = vpop.permute.xlu0 %5884
      %5886 = vrot.lane.b32.xlu0 %v5111, 64
      %v5887 = vpop.permute.xlu0 %5886
      %5888 = vrot.lane.b32.xlu0 %v5116, 64
      %v5889 = vpop.permute.xlu0 %5888
      %5890 = vrot.lane.b32.xlu0 %v5121, 64
      %v5891 = vpop.permute.xlu0 %5890
      %5892 = vrot.lane.b32.xlu0 %v5126, 64
      %v5893 = vpop.permute.xlu0 %5892
      %5894 = vrot.lane.b32.xlu0 %v5131, 64
      %v5895 = vpop.permute.xlu0 %5894
      %5896 = vrot.lane.b32.xlu0 %v5136, 64
      %v5897 = vpop.permute.xlu0 %5896
      %5898 = vrot.lane.b32.xlu0 %v5141, 64
      %v5899 = vpop.permute.xlu0 %5898
      %5900 = vrot.lane.b32.xlu0 %v5146, 64
      %v5901 = vpop.permute.xlu0 %5900
      %5902 = vrot.lane.b32.xlu0 %v5151, 64
      %v5903 = vpop.permute.xlu0 %5902
      %5904 = vrot.lane.b32.xlu0 %v5156, 64
      %v5905 = vpop.permute.xlu0 %5904
      %5906 = vrot.lane.b32.xlu0 %v5161, 64
      %v5907 = vpop.permute.xlu0 %5906
      %5908 = vrot.lane.b32.xlu0 %v5166, 64
      %v5909 = vpop.permute.xlu0 %5908
      %5910 = vrot.lane.b32.xlu0 %v5171, 64
      %v5911 = vpop.permute.xlu0 %5910
      %5912 = vrot.lane.b32.xlu0 %v5176, 64
      %v5913 = vpop.permute.xlu0 %5912
      %5914 = vrot.lane.b32.xlu0 %v5181, 64
      %v5915 = vpop.permute.xlu0 %5914
      %5916 = vrot.lane.b32.xlu0 %v5186, 64
      %v5917 = vpop.permute.xlu0 %5916
      %5918 = vrot.lane.b32.xlu0 %v5191, 64
      %v5919 = vpop.permute.xlu0 %5918
      %5920 = vrot.lane.b32.xlu0 %v5196, 64
      %v5921 = vpop.permute.xlu0 %5920
      %5922 = vrot.lane.b32.xlu0 %v5201, 64
      %v5923 = vpop.permute.xlu0 %5922
      %5924 = vrot.lane.b32.xlu0 %v5206, 64
      %v5925 = vpop.permute.xlu0 %5924
      %5926 = vrot.lane.b32.xlu0 %v5211, 64
      %v5927 = vpop.permute.xlu0 %5926
      %v5992 = vsel %vm547, %v4576, %v5801
      %v5993 = vsel %vm547, %v4581, %v5803
      %v5994 = vsel %vm547, %v4586, %v5805
      %v5995 = vsel %vm547, %v4591, %v5807
      %v5996 = vsel %vm547, %v4596, %v5809
      %v5997 = vsel %vm547, %v4601, %v5811
      %v5998 = vsel %vm547, %v4606, %v5813
      %v5999 = vsel %vm547, %v4611, %v5815
      %v6000 = vsel %vm547, %v4616, %v5817
      %v6001 = vsel %vm547, %v4621, %v5819
      %v6002 = vsel %vm547, %v4626, %v5821
      %v6003 = vsel %vm547, %v4631, %v5823
      %v6004 = vsel %vm547, %v4636, %v5825
      %v6005 = vsel %vm547, %v4641, %v5827
      %v6006 = vsel %vm547, %v4646, %v5829
      %v6007 = vsel %vm547, %v4651, %v5831
      %v6008 = vsel %vm547, %v4656, %v5833
      %v6009 = vsel %vm547, %v4661, %v5835
      %v6010 = vsel %vm547, %v4666, %v5837
      %v6011 = vsel %vm547, %v4671, %v5839
      %v6012 = vsel %vm547, %v4676, %v5841
      %v6013 = vsel %vm547, %v4681, %v5843
      %v6014 = vsel %vm547, %v4686, %v5845
      %v6015 = vsel %vm547, %v4691, %v5847
      %v6016 = vsel %vm547, %v4696, %v5849
      %v6017 = vsel %vm547, %v4701, %v5851
      %v6018 = vsel %vm547, %v4706, %v5853
      %v6019 = vsel %vm547, %v4711, %v5855
      %v6020 = vsel %vm547, %v4716, %v5857
      %v6021 = vsel %vm547, %v4721, %v5859
      %v6022 = vsel %vm547, %v4726, %v5861
      %v6023 = vsel %vm547, %v4731, %v5863
      %v6024 = vsel %vm547, %v4736, %v5865
      %v6025 = vsel %vm547, %v4741, %v5867
      %v6026 = vsel %vm547, %v4746, %v5869
      %v6027 = vsel %vm547, %v4751, %v5871
      %v6028 = vsel %vm547, %v4756, %v5873
      %v6029 = vsel %vm547, %v4761, %v5875
      %v6030 = vsel %vm547, %v4766, %v5877
      %v6031 = vsel %vm547, %v4771, %v5879
      %v6032 = vsel %vm547, %v4776, %v5881
      %v6033 = vsel %vm547, %v4781, %v5883
      %v6034 = vsel %vm547, %v4786, %v5885
      %v6035 = vsel %vm547, %v4791, %v5887
      %v6036 = vsel %vm547, %v4796, %v5889
      %v6037 = vsel %vm547, %v4801, %v5891
      %v6038 = vsel %vm547, %v4806, %v5893
      %v6039 = vsel %vm547, %v4811, %v5895
      %v6040 = vsel %vm547, %v4816, %v5897
      %v6041 = vsel %vm547, %v4821, %v5899
      %v6042 = vsel %vm547, %v4826, %v5901
      %v6043 = vsel %vm547, %v4831, %v5903
      %v6044 = vsel %vm547, %v4836, %v5905
      %v6045 = vsel %vm547, %v4841, %v5907
      %v6046 = vsel %vm547, %v4846, %v5909
      %v6047 = vsel %vm547, %v4851, %v5911
      %v6048 = vsel %vm547, %v4856, %v5913
      %v6049 = vsel %vm547, %v4861, %v5915
      %v6050 = vsel %vm547, %v4866, %v5917
      %v6051 = vsel %vm547, %v4871, %v5919
      %v6052 = vsel %vm547, %v4876, %v5921
      %v6053 = vsel %vm547, %v4881, %v5923
      %v6054 = vsel %vm547, %v4886, %v5925
      %v6055 = vsel %vm547, %v4891, %v5927
      %6056 = vst [vmem:[%s205] sm:$0xff] %v5992
      %6057 = vst [vmem:[%s205 + $0x8] sm:$0xff] %v5993
      %6058 = vst [vmem:[%s205 + $0x10] sm:$0xff] %v5994
      %6059 = vst [vmem:[%s205 + $0x18] sm:$0xff] %v5995
      %6060 = vst [vmem:[%s205 + $0x20] sm:$0xff] %v5996
      %6061 = vst [vmem:[%s205 + $0x28] sm:$0xff] %v5997
      %6062 = vst [vmem:[%s205 + $0x30] sm:$0xff] %v5998
      %6063 = vst [vmem:[%s205 + $0x38] sm:$0xff] %v5999
      %6064 = vst [vmem:[%s205 + $0x40] sm:$0xff] %v6000
      %6065 = vst [vmem:[%s205 + $0x48] sm:$0xff] %v6001
      %6066 = vst [vmem:[%s205 + $0x50] sm:$0xff] %v6002
      %6067 = vst [vmem:[%s205 + $0x58] sm:$0xff] %v6003
      %6068 = vst [vmem:[%s205 + $0x60] sm:$0xff] %v6004
      %6069 = vst [vmem:[%s205 + $0x68] sm:$0xff] %v6005
      %6070 = vst [vmem:[%s205 + $0x70] sm:$0xff] %v6006
      %6071 = vst [vmem:[%s205 + $0x78] sm:$0xff] %v6007
      %6072 = vst [vmem:[%s205 + $0x80] sm:$0xff] %v6008
      %6073 = vst [vmem:[%s205 + $0x88] sm:$0xff] %v6009
      %6074 = vst [vmem:[%s205 + $0x90] sm:$0xff] %v6010
      %6075 = vst [vmem:[%s205 + $0x98] sm:$0xff] %v6011
      %6076 = vst [vmem:[%s205 + $0xa0] sm:$0xff] %v6012
      %6077 = vst [vmem:[%s205 + $0xa8] sm:$0xff] %v6013
      %6078 = vst [vmem:[%s205 + $0xb0] sm:$0xff] %v6014
      %6079 = vst [vmem:[%s205 + $0xb8] sm:$0xff] %v6015
      %6080 = vst [vmem:[%s205 + $0xc0] sm:$0xff] %v6016
      %6081 = vst [vmem:[%s205 + $0xc8] sm:$0xff] %v6017
      %6082 = vst [vmem:[%s205 + $0xd0] sm:$0xff] %v6018
      %6083 = vst [vmem:[%s205 + $0xd8] sm:$0xff] %v6019
      %6084 = vst [vmem:[%s205 + $0xe0] sm:$0xff] %v6020
      %6085 = vst [vmem:[%s205 + $0xe8] sm:$0xff] %v6021
      %6086 = vst [vmem:[%s205 + $0xf0] sm:$0xff] %v6022
      %6087 = vst [vmem:[%s205 + $0xf8] sm:$0xff] %v6023
      %6088 = vst [vmem:[%s205 + $0x100] sm:$0xff] %v6024
      %6089 = vst [vmem:[%s205 + $0x108] sm:$0xff] %v6025
      %6090 = vst [vmem:[%s205 + $0x110] sm:$0xff] %v6026
      %6091 = vst [vmem:[%s205 + $0x118] sm:$0xff] %v6027
      %6092 = vst [vmem:[%s205 + $0x120] sm:$0xff] %v6028
      %6093 = vst [vmem:[%s205 + $0x128] sm:$0xff] %v6029
      %6094 = vst [vmem:[%s205 + $0x130] sm:$0xff] %v6030
      %6095 = vst [vmem:[%s205 + $0x138] sm:$0xff] %v6031
      %6096 = vst [vmem:[%s205 + $0x140] sm:$0xff] %v6032
      %6097 = vst [vmem:[%s205 + $0x148] sm:$0xff] %v6033
      %6098 = vst [vmem:[%s205 + $0x150] sm:$0xff] %v6034
      %6099 = vst [vmem:[%s205 + $0x158] sm:$0xff] %v6035
      %6100 = vst [vmem:[%s205 + $0x160] sm:$0xff] %v6036
      %6101 = vst [vmem:[%s205 + $0x168] sm:$0xff] %v6037
      %6102 = vst [vmem:[%s205 + $0x170] sm:$0xff] %v6038
      %6103 = vst [vmem:[%s205 + $0x178] sm:$0xff] %v6039
      %6104 = vst [vmem:[%s205 + $0x180] sm:$0xff] %v6040
      %6105 = vst [vmem:[%s205 + $0x188] sm:$0xff] %v6041
      %6106 = vst [vmem:[%s205 + $0x190] sm:$0xff] %v6042
      %6107 = vst [vmem:[%s205 + $0x198] sm:$0xff] %v6043
      %6108 = vst [vmem:[%s205 + $0x1a0] sm:$0xff] %v6044
      %6109 = vst [vmem:[%s205 + $0x1a8] sm:$0xff] %v6045
      %6110 = vst [vmem:[%s205 + $0x1b0] sm:$0xff] %v6046
      %6111 = vst [vmem:[%s205 + $0x1b8] sm:$0xff] %v6047
      %6112 = vst [vmem:[%s205 + $0x1c0] sm:$0xff] %v6048
      %6113 = vst [vmem:[%s205 + $0x1c8] sm:$0xff] %v6049
      %6114 = vst [vmem:[%s205 + $0x1d0] sm:$0xff] %v6050
      %6115 = vst [vmem:[%s205 + $0x1d8] sm:$0xff] %v6051
      %6116 = vst [vmem:[%s205 + $0x1e0] sm:$0xff] %v6052
      %6117 = vst [vmem:[%s205 + $0x1e8] sm:$0xff] %v6053
      %6118 = vst [vmem:[%s205 + $0x1f0] sm:$0xff] %v6054
      %6119 = vst [vmem:[%s205 + $0x1f8] sm:$0xff] %v6055
      %s6120 = smul.u32 64, %s16
      %p6121 = scmp.lt.s32.totalorder %s6120, 127
      %s6122 = scalar_select %p6121, %s6120, 127
      %s6123 = smul.addr %s6122, 8
      %s6124 = scalar_lea.vmem %s3, %s6123
      %p6125 = scmp.lt.s32.totalorder %s16, 1
      %s6126 = scalar_select %p6125, %s16, 1
      %s6127 = scalar_lea.vmem %s4, %s6126
      // Predicated region
      $region33: #{vq_embedding_ema_forward.1} parent=31 // pred_check
        %p6128 = pneg %p102
      $region34: #{vq_embedding_ema_forward.1} parent=31 // pred_check_branch
        %6130 = sbr.rel (%p6128) target = $region36
      $region35: #{vq_embedding_ema_forward.1} parent=31 // pred_region
        %s6131 = smul.u32 64, %s16
      $region36: #{vq_embedding_ema_forward.1} parent=31 // pred_fallthru
        _
      // Predicated region
      $region37: #{vq_embedding_ema_forward.1} parent=31 // pred_check
        %p6132 = pneg %p128
      $region38: #{vq_embedding_ema_forward.1} parent=31 // pred_check_branch
        %6134 = sbr.rel (%p6132) target = $region40
      $region39: #{vq_embedding_ema_forward.1} parent=31 // pred_region
        _
      $region40: #{vq_embedding_ema_forward.1} parent=31 // pred_fallthru
        _
    $region32: #{vq_embedding_ema_forward.1} parent=5 // pred_fallthru
      _
    %p6135 = scmp.le.s32.totalorder 2, %s11
    // Predicated region
    $region41: #{vq_embedding_ema_forward.1} parent=5 // pred_check
      %p6136 = pneg %p6135
    $region42: #{vq_embedding_ema_forward.1} parent=5 // pred_check_branch
      %6138 = sbr.rel (%p6136) target = $region44
    $region43: #{vq_embedding_ema_forward.1} parent=5 // pred_region
      %s6139 = ssub.s32 %s11, 2
      // Predicated region
      $region45: #{vq_embedding_ema_forward.1} parent=43 // pred_check
        %p6140 = pneg %p108
      $region46: #{vq_embedding_ema_forward.1} parent=43 // pred_check_branch
        %6142 = sbr.rel (%p6140) target = $region48
      $region47: #{vq_embedding_ema_forward.1} parent=43 // pred_region
        %s6143 = smul.u32 64, %s17
        %p6144 = scmp.lt.s32.totalorder %s6143, 127
        %s6145 = scalar_select %p6144, %s6143, 127
        %s6146 = smul.addr %s6145, 8
        %s6147 = scalar_lea.vmem %s3, %s6146
      $region48: #{vq_embedding_ema_forward.1} parent=43 // pred_fallthru
        _
      // Predicated region
      $region49: #{vq_embedding_ema_forward.1} parent=43 // pred_check
        %p6148 = pneg %p134
      $region50: #{vq_embedding_ema_forward.1} parent=43 // pred_check_branch
        %6150 = sbr.rel (%p6148) target = $region52
      $region51: #{vq_embedding_ema_forward.1} parent=43 // pred_region
        %p6151 = scmp.lt.s32.totalorder %s17, 1
        %s6152 = scalar_select %p6151, %s17, 1
        %s6153 = scalar_lea.vmem %s4, %s6152
      $region52: #{vq_embedding_ema_forward.1} parent=43 // pred_fallthru
        _
    $region44: #{vq_embedding_ema_forward.1} parent=5 // pred_fallthru
      _
  $region6: #{vq_embedding_ema_forward.1} parent=0 // loop_footer
    %s15 = sadd.s32 1, %s11
  $region7: #{vq_embedding_ema_forward.1} parent=0 // loop_footer_branch
    %10 = sbr.rel target = $region3
  $region8: #{vq_embedding_ema_forward.1} parent=0 // loop_exit
    _

</llo_original>
